<compile_context>
chip_gen: v7x
topology: tpu7x:2x2x1
jax: 0.10.0
libtpu: 0.0.40
codegen_flags: <defaults>
</compile_context>

<pallas_src>
import functools

import jax
import jax.numpy as jnp
import numpy as np
from jax.experimental import pallas as pl
from jax.experimental.pallas import tpu as pltpu

LN_EPS = 1e-5


# ---------------------------------------------------------------------------
# Helpers
# ---------------------------------------------------------------------------
def _ln(z, g, b):
    mu = jnp.mean(z, axis=-1, keepdims=True)
    var = jnp.mean((z - mu) ** 2, axis=-1, keepdims=True)
    return (z - mu) * jax.lax.rsqrt(var + LN_EPS) * g + b


def _pick_tile(s, preferred=256):
    """Largest sequence tile <= preferred that divides s (full s for tiny s)."""
    if s <= preferred:
        return s
    for t in (preferred, 128, 64, 32, 16, 8):
        if s % t == 0:
            return t
    return s   # fall back to untiled (still correct)


def _cparams(sems, block_bytes):
    """Compiler params with an explicit VMEM budget (double-buffer + margin)."""
    limit = int(min(max(2 * block_bytes + (8 << 20), 32 << 20), 100 << 20))
    return pltpu.CompilerParams(dimension_semantics=sems,
                                vmem_limit_bytes=limit)


def _half_rotary_tables(seq_len, emb_size):
    inv_freq = 1.0 / (10000.0 ** (jnp.arange(0, emb_size, 2, dtype=jnp.float32)
                                  / emb_size))
    pos = jnp.arange(seq_len, dtype=jnp.float32)
    sinu = jnp.outer(pos, inv_freq)            # (S, E//2)
    return jnp.sin(sinu), jnp.cos(sinu)


# ---------------------------------------------------------------------------
# Kernel A: RoPE + packed QKV projection (grid: B x S-tiles)
# ---------------------------------------------------------------------------
def qkv_rope_kernel(x_ref, sin_ref, cos_ref, wq_ref, wk_ref, wv_ref, b_ref,
                    q_ref, k_ref, v_ref, *, use_roll):
    x = x_ref[0]                               # (TS, E)
    half = x.shape[-1] // 2
    # rotate-half: [x2, x1].  XLU roll when lane-aligned, concat fallback.
    if use_roll:
        x_sw = pltpu.roll(x, shift=half, axis=-1)
    else:
        x_sw = jnp.concatenate([x[:, half:], x[:, :half]], axis=-1)
    # sin_ref holds [sin, -sin], cos_ref holds [cos, cos] (built in wrapper):
    #   first half:  x1*cos + x2*sin
    #   second half: x2*cos - x1*sin
    xr = x * cos_ref[...] + x_sw * sin_ref[...]

    b = b_ref[...]                             # (3, E): [bq*scale, bk, bv]
    q_ref[0] = (jnp.dot(xr, wq_ref[...], preferred_element_type=jnp.float32)
                + b[0:1]).astype(q_ref.dtype)
    k_ref[0] = (jnp.dot(xr, wk_ref[...], preferred_element_type=jnp.float32)
                + b[1:2]).astype(k_ref.dtype)
    v_ref[0] = (jnp.dot(x, wv_ref[...], preferred_element_type=jnp.float32)
                + b[2:3]).astype(v_ref.dtype)


def run_qkv_rope(x, sin_s, cos_f, wq_t, wk_t, wv_t, qkv_b):
    B, S, E = x.shape
    TS = _pick_tile(S)
    grid = (B, S // TS)
    sds = jax.ShapeDtypeStruct((B, S, E), x.dtype)
    block_bytes = 4 * (6 * TS * E + 3 * E * E + 3 * E)
    kernel = functools.partial(qkv_rope_kernel, use_roll=(E % 256 == 0))
    return pl.pallas_call(
        kernel,
        out_shape=(sds, sds, sds),
        grid_spec=pltpu.PrefetchScalarGridSpec(
            num_scalar_prefetch=0,
            grid=grid,
            in_specs=[
                pl.BlockSpec((1, TS, E), lambda b, s: (b, s, 0)),   # x tile
                pl.BlockSpec((TS, E), lambda b, s: (s, 0)),         # [sin,-sin]
                pl.BlockSpec((TS, E), lambda b, s: (s, 0)),         # [cos, cos]
                pl.BlockSpec((E, E), lambda b, s: (0, 0)),          # wq (scaled)
                pl.BlockSpec((E, E), lambda b, s: (0, 0)),          # wk
                pl.BlockSpec((E, E), lambda b, s: (0, 0)),          # wv
                pl.BlockSpec((3, E), lambda b, s: (0, 0)),          # packed bias
            ],
            out_specs=[
                pl.BlockSpec((1, TS, E), lambda b, s: (b, s, 0)),
                pl.BlockSpec((1, TS, E), lambda b, s: (b, s, 0)),
                pl.BlockSpec((1, TS, E), lambda b, s: (b, s, 0)),
            ],
        ),
        compiler_params=_cparams(("parallel", "parallel"), block_bytes),
    )(x, sin_s, cos_f, wq_t, wk_t, wv_t, qkv_b)


# ---------------------------------------------------------------------------
# Kernel B: flash attention over head-major tensors (grid: B*H x q-tile x kv-tile)
# ---------------------------------------------------------------------------
def flash_attention_kernel(q_ref, k_ref, v_ref, o_ref, m_sc, l_sc, acc_sc):
    ki = pl.program_id(2)

    @pl.when(ki == 0)
    def _():
        m_sc[...] = jnp.full(m_sc.shape, -jnp.inf, jnp.float32)
        l_sc[...] = jnp.zeros(l_sc.shape, jnp.float32)
        acc_sc[...] = jnp.zeros(acc_sc.shape, jnp.float32)

    q = q_ref[0]                               # (TQ, hd)  (already scaled)
    k = k_ref[0]                               # (TK, hd)
    v = v_ref[0]                               # (TK, hd)

    s = jax.lax.dot_general(q, k, (((1,), (1,)), ((), ())),
                            preferred_element_type=jnp.float32)   # (TQ, TK)

    m_prev = m_sc[...]
    m_new = jnp.maximum(m_prev, jnp.max(s, axis=-1, keepdims=True))
    alpha = jnp.exp(m_prev - m_new)
    p = jnp.exp(s - m_new)
    l_sc[...] = alpha * l_sc[...] + jnp.sum(p, axis=-1, keepdims=True)
    acc_sc[...] = alpha * acc_sc[...] + jnp.dot(
        p.astype(v.dtype), v, preferred_element_type=jnp.float32)
    m_sc[...] = m_new

    @pl.when(ki == pl.num_programs(2) - 1)
    def _():
        inv_l = pl.reciprocal(l_sc[...], approx=True)     # EUP slot
        o_ref[0] = (acc_sc[...] * inv_l).astype(o_ref.dtype)


def run_flash_attention(q, k, v):
    BH, S, hd = q.shape
    TQ = _pick_tile(S)
    TK = _pick_tile(S)
    grid = (BH, S // TQ, S // TK)
    block_bytes = 4 * (2 * TQ * hd + 2 * TK * hd + TQ * hd + 2 * TQ)
    return pl.pallas_call(
        flash_attention_kernel,
        out_shape=jax.ShapeDtypeStruct((BH, S, hd), q.dtype),
        grid_spec=pltpu.PrefetchScalarGridSpec(
            num_scalar_prefetch=0,
            grid=grid,
            in_specs=[
                pl.BlockSpec((1, TQ, hd), lambda bh, qi, ki: (bh, qi, 0)),
                pl.BlockSpec((1, TK, hd), lambda bh, qi, ki: (bh, ki, 0)),
                pl.BlockSpec((1, TK, hd), lambda bh, qi, ki: (bh, ki, 0)),
            ],
            out_specs=pl.BlockSpec((1, TQ, hd), lambda bh, qi, ki: (bh, qi, 0)),
            scratch_shapes=[
                pltpu.VMEM((TQ, 1), jnp.float32),    # running max
                pltpu.VMEM((TQ, 1), jnp.float32),    # running denom
                pltpu.VMEM((TQ, hd), jnp.float32),   # accumulator
            ],
        ),
        compiler_params=_cparams(("parallel", "parallel", "arbitrary"),
                                 block_bytes),
    )(q, k, v)


# ---------------------------------------------------------------------------
# Kernel C: out-proj + residual + LN1 + FFN + residual + LN2 (+ fused final LN)
# ---------------------------------------------------------------------------
def out_ffn_kernel(x_ref, ctx_ref, wo_ref, w1_ref, w2_ref, b1_ref, vec_ref,
                   out_ref, *, apply_final_ln):
    x = x_ref[0]                               # (TS, E) original layer input
    c = ctx_ref[0]                             # (TS, E) attention context
    vec = vec_ref[...]                         # (8, E): bo,b2,g1,be1,g2,be2,gF,bF

    attn = jnp.dot(c, wo_ref[...], preferred_element_type=jnp.float32) + vec[0:1]
    y = _ln(x + attn, vec[2:3], vec[3:4])

    h = jnp.dot(y, w1_ref[...], preferred_element_type=jnp.float32) + b1_ref[...]
    h = jnp.maximum(h, 0.0)
    ff = jnp.dot(h, w2_ref[...], preferred_element_type=jnp.float32) + vec[1:2]

    y = _ln(y + ff, vec[4:5], vec[5:6])
    if apply_final_ln:                         # static flag, last layer only
        y = _ln(y, vec[6:7], vec[7:8])
    out_ref[0] = y.astype(out_ref.dtype)


def run_out_ffn(x, ctx, wo_t, w1_t, w2_t, b1, vec, apply_final_ln):
    B, S, E = x.shape
    FF = w1_t.shape[1]
    TS = _pick_tile(S)
    grid = (B, S // TS)
    block_bytes = 4 * (3 * TS * E + E * E + 2 * E * FF + TS * FF + FF + 8 * E)
    kernel = functools.partial(out_ffn_kernel, apply_final_ln=apply_final_ln)
    return pl.pallas_call(
        kernel,
        out_shape=jax.ShapeDtypeStruct((B, S, E), x.dtype),
        grid_spec=pltpu.PrefetchScalarGridSpec(
            num_scalar_prefetch=0,
            grid=grid,
            in_specs=[
                pl.BlockSpec((1, TS, E), lambda b, s: (b, s, 0)),   # x
                pl.BlockSpec((1, TS, E), lambda b, s: (b, s, 0)),   # ctx
                pl.BlockSpec((E, E), lambda b, s: (0, 0)),          # wo
                pl.BlockSpec((E, FF), lambda b, s: (0, 0)),         # w1
                pl.BlockSpec((FF, E), lambda b, s: (0, 0)),         # w2
                pl.BlockSpec((1, FF), lambda b, s: (0, 0)),         # b1
                pl.BlockSpec((8, E), lambda b, s: (0, 0)),          # packed vecs
            ],
            out_specs=pl.BlockSpec((1, TS, E), lambda b, s: (b, s, 0)),
        ),
        compiler_params=_cparams(("parallel", "parallel"), block_bytes),
    )(x, ctx, wo_t, w1_t, w2_t, b1, vec)


# ---------------------------------------------------------------------------
# Layer / encoder wrappers
# ---------------------------------------------------------------------------
def run_layer(x, sin_s, cos_f, p, nhead, apply_final_ln, final_g, final_b):
    B, S, E = x.shape
    H = nhead
    hd = E // H
    scale = 1.0 / (hd ** 0.5)

    # Fold the 1/sqrt(head_dim) attention scale into the q projection.
    wq_t = p["in_proj_w"][:E].T * scale
    wk_t = p["in_proj_w"][E:2 * E].T
    wv_t = p["in_proj_w"][2 * E:].T
    qkv_b = jnp.stack([p["in_proj_b"][:E] * scale,
                       p["in_proj_b"][E:2 * E],
                       p["in_proj_b"][2 * E:]], axis=0)              # (3, E)
    wo_t = p["out_proj_w"].T
    w1_t = p["lin1_w"].T                                             # (E, FF)
    w2_t = p["lin2_w"].T                                             # (FF, E)
    b1 = p["lin1_b"].reshape(1, -1)                                  # (1, FF)
    vec = jnp.stack([p["out_proj_b"], p["lin2_b"],
                     p["norm1_w"], p["norm1_b"],
                     p["norm2_w"], p["norm2_b"],
                     final_g, final_b], axis=0)                      # (8, E)

    q, k, v = run_qkv_rope(x, sin_s, cos_f, wq_t, wk_t, wv_t, qkv_b)

    def to_heads(t):   # (B,S,E) -> (B*H, S, hd); layout plumbing outside kernels
        return t.reshape(B, S, H, hd).transpose(0, 2, 1, 3).reshape(B * H, S, hd)

    ctx = run_flash_attention(to_heads(q), to_heads(k), to_heads(v))
    ctx = ctx.reshape(B, H, S, hd).transpose(0, 2, 1, 3).reshape(B, S, E)

    return run_out_ffn(x, ctx, wo_t, w1_t, w2_t, b1, vec, apply_final_ln)


@functools.partial(jax.jit, static_argnames=("nhead",))
def roformer_encoder(src, params, *, nhead):
    """src: (S, B, E) PyTorch layout. Returns (S, B, E)."""
    S, B, E = src.shape
    sin, cos = _half_rotary_tables(S, E)          # each (S, E//2)
    sin_s = jnp.concatenate([sin, -sin], axis=-1)  # (S, E)
    cos_f = jnp.concatenate([cos, cos], axis=-1)   # (S, E)

    x = jnp.transpose(src, (1, 0, 2))              # -> (B, S, E)
    n_layers = len(params["layers"])
    for i, p in enumerate(params["layers"]):
        x = run_layer(x, sin_s, cos_f, p, nhead,
                      apply_final_ln=(i == n_layers - 1),
                      final_g=params["norm_w"], final_b=params["norm_b"])
    return jnp.transpose(x, (1, 0, 2))             # -> (S, B, E)


# ---------------------------------------------------------------------------
# Deterministic parameter init (synthetic; shapes match the nn.Module)
# ---------------------------------------------------------------------------
def init_params(key, emb_size, dim_feedforward, num_layers):
    layers = []
    for _ in range(num_layers):
        key, *ks = jax.random.split(key, 9)
        layers.append(dict(
            in_proj_w=jax.random.normal(ks[0], (3 * emb_size, emb_size),
                                        jnp.float32) / jnp.sqrt(emb_size),
            in_proj_b=jax.random.normal(ks[1], (3 * emb_size,), jnp.float32) * 0.02,
            out_proj_w=jax.random.normal(ks[2], (emb_size, emb_size),
                                         jnp.float32) / jnp.sqrt(emb_size),
            out_proj_b=jax.random.normal(ks[3], (emb_size,), jnp.float32) * 0.02,
            lin1_w=jax.random.normal(ks[4], (dim_feedforward, emb_size),
                                     jnp.float32) / jnp.sqrt(emb_size),
            lin1_b=jax.random.normal(ks[5], (dim_feedforward,), jnp.float32) * 0.02,
            lin2_w=jax.random.normal(ks[6], (emb_size, dim_feedforward),
                                     jnp.float32) / jnp.sqrt(dim_feedforward),
            lin2_b=jax.random.normal(ks[7], (emb_size,), jnp.float32) * 0.02,
            norm1_w=jnp.ones((emb_size,), jnp.float32),
            norm1_b=jnp.zeros((emb_size,), jnp.float32),
            norm2_w=jnp.ones((emb_size,), jnp.float32),
            norm2_b=jnp.zeros((emb_size,), jnp.float32),
        ))
    return dict(layers=layers,
                norm_w=jnp.ones((emb_size,), jnp.float32),
                norm_b=jnp.zeros((emb_size,), jnp.float32))


# ---------------------------------------------------------------------------
# Pure-JAX reference (mirrors the PyTorch forward) for correctness checking
# ---------------------------------------------------------------------------
def ref_forward(src, params, nhead):
    S, B, E = src.shape
    hd = E // nhead
    half = E // 2
    sin, cos = _half_rotary_tables(S, E)

    def rope(t):  # (S, B, E)
        s = sin[:, None, :]
        c = cos[:, None, :]
        t1, t2 = t[..., :half], t[..., half:]
        return jnp.concatenate([t1 * c + t2 * s, t2 * c - t1 * s], axis=-1)

    def ln(z, g, b):
        mu = jnp.mean(z, axis=-1, keepdims=True)
        var = jnp.mean((z - mu) ** 2, axis=-1, keepdims=True)
        return (z - mu) * jax.lax.rsqrt(var + LN_EPS) * g + b

    x = src
    for p in params["layers"]:
        xr = rope(x)
        q = xr @ p["in_proj_w"][:E].T + p["in_proj_b"][:E]
        k = xr @ p["in_proj_w"][E:2 * E].T + p["in_proj_b"][E:2 * E]
        v = x @ p["in_proj_w"][2 * E:].T + p["in_proj_b"][2 * E:]

        def heads(t):
            return t.reshape(S, B, nhead, hd).transpose(1, 2, 0, 3)  # (B,H,S,hd)

        qh, kh, vh = heads(q), heads(k), heads(v)
        scores = jnp.einsum("bhqd,bhkd->bhqk", qh, kh) / (hd ** 0.5)
        attn = jax.nn.softmax(scores, axis=-1)
        o = jnp.einsum("bhqk,bhkd->bhqd", attn, vh)
        o = o.transpose(2, 0, 1, 3).reshape(S, B, E)
        attn_out = o @ p["out_proj_w"].T + p["out_proj_b"]

        x = ln(x + attn_out, p["norm1_w"], p["norm1_b"])
        ff = jax.nn.relu(x @ p["lin1_w"].T + p["lin1_b"]) @ p["lin2_w"].T + p["lin2_b"]
        x = ln(x + ff, p["norm2_w"], p["norm2_b"])
    return ln(x, params["norm_w"], params["norm_b"])


# ---------------------------------------------------------------------------
if __name__ == "__main__":
    SEQ, BATCH, EMB, NHEAD, FF, NLAYERS = 8, 2, 32, 4, 64, 2

    key = jax.random.PRNGKey(0)
    key, sk = jax.random.split(key)
    src = jax.random.normal(sk, (SEQ, BATCH, EMB), dtype=jnp.float32)
    params = init_params(key, EMB, FF, NLAYERS)

    out = roformer_encoder(src, params, nhead=NHEAD)
    out = jax.block_until_ready(out)
    assert out.shape == (SEQ, BATCH, EMB)

    # Tolerance is looser than before because both the Pallas kernels and the
    # XLA reference now use default (single-pass bf16) MXU matmul precision
    # and the kernel uses the approx EUP reciprocal for softmax normalisation.
    ref = ref_forward(src, params, NHEAD)
    np.testing.assert_allclose(np.asarray(out), np.asarray(ref),
                               rtol=5e-2, atol=5e-2)
    print("KERNEL_OK")
</pallas_src>

<mosaic_0001>
module attributes {stable_mosaic.version = 11 : i64} {
  func.func @qkv_rope_kernel(%arg0: i32, %arg1: i32, %arg2: memref<1x8x32xf32, #tpu.memory_space<vmem>>, %arg3: memref<8x32xf32, #tpu.memory_space<vmem>>, %arg4: memref<8x32xf32, #tpu.memory_space<vmem>>, %arg5: memref<32x32xf32, #tpu.memory_space<vmem>>, %arg6: memref<32x32xf32, #tpu.memory_space<vmem>>, %arg7: memref<32x32xf32, #tpu.memory_space<vmem>>, %arg8: memref<3x32xf32, #tpu.memory_space<vmem>>, %arg9: memref<1x8x32xf32, #tpu.memory_space<vmem>>, %arg10: memref<1x8x32xf32, #tpu.memory_space<vmem>>, %arg11: memref<1x8x32xf32, #tpu.memory_space<vmem>>) attributes {dimension_semantics = [#tpu.dimension_semantics<parallel>, #tpu.dimension_semantics<parallel>], iteration_bounds = array<i64: 2, 1>, scalar_prefetch = 0 : i64, scratch_operands = 0 : i64, tpu.core_type = #tpu.core_type<tc>, window_params = [{transform_indices = @transform_0, window_bounds = array<i64: 1, 8, 32>}, {transform_indices = @transform_1, window_bounds = array<i64: 8, 32>}, {transform_indices = @transform_2, window_bounds = array<i64: 8, 32>}, {pipeline_mode = #tpu.pipeline_mode<synchronous>, transform_indices = @transform_3, window_bounds = array<i64: 32, 32>}, {pipeline_mode = #tpu.pipeline_mode<synchronous>, transform_indices = @transform_4, window_bounds = array<i64: 32, 32>}, {pipeline_mode = #tpu.pipeline_mode<synchronous>, transform_indices = @transform_5, window_bounds = array<i64: 32, 32>}, {pipeline_mode = #tpu.pipeline_mode<synchronous>, transform_indices = @transform_6, window_bounds = array<i64: 3, 32>}, {transform_indices = @transform_7, window_bounds = array<i64: 1, 8, 32>}, {transform_indices = @transform_8, window_bounds = array<i64: 1, 8, 32>}, {transform_indices = @transform_9, window_bounds = array<i64: 1, 8, 32>}]} {
    %c0 = arith.constant 0 : index
    %c0_0 = arith.constant 0 : index
    %c0_1 = arith.constant 0 : index
    %0 = vector.load %arg2[%c0, %c0_0, %c0_1] : memref<1x8x32xf32, #tpu.memory_space<vmem>>, vector<1x8x32xf32>
    %1 = vector.shape_cast %0 : vector<1x8x32xf32> to vector<8x32xf32>
    %2 = vector.extract_strided_slice %1 {offsets = [0, 16], sizes = [8, 16], strides = [1, 1]} : vector<8x32xf32> to vector<8x16xf32>
    %3 = vector.extract_strided_slice %1 {offsets = [0, 0], sizes = [8, 16], strides = [1, 1]} : vector<8x32xf32> to vector<8x16xf32>
    %4 = tpu.concatenate %2, %3 in 1 : vector<8x16xf32>, vector<8x16xf32> -> vector<8x32xf32>
    %c0_2 = arith.constant 0 : index
    %c0_3 = arith.constant 0 : index
    %5 = vector.load %arg4[%c0_2, %c0_3] : memref<8x32xf32, #tpu.memory_space<vmem>>, vector<8x32xf32>
    %6 = arith.mulf %1, %5 : vector<8x32xf32>
    %c0_4 = arith.constant 0 : index
    %c0_5 = arith.constant 0 : index
    %7 = vector.load %arg3[%c0_4, %c0_5] : memref<8x32xf32, #tpu.memory_space<vmem>>, vector<8x32xf32>
    %8 = arith.mulf %4, %7 : vector<8x32xf32>
    %9 = arith.addf %6, %8 : vector<8x32xf32>
    %c0_6 = arith.constant 0 : index
    %c0_7 = arith.constant 0 : index
    %10 = vector.load %arg8[%c0_6, %c0_7] : memref<3x32xf32, #tpu.memory_space<vmem>>, vector<3x32xf32>
    %c0_8 = arith.constant 0 : index
    %c0_9 = arith.constant 0 : index
    %11 = vector.load %arg5[%c0_8, %c0_9] : memref<32x32xf32, #tpu.memory_space<vmem>>, vector<32x32xf32>
    %cst = arith.constant dense<0.000000e+00> : vector<8x32xf32>
    %12 = tpu.matmul %9, %11, %cst {dimension_numbers = #tpu.dot_dimension_numbers<[1], [0], [0], [1], [0, 0, 1, 1], [], []>} : vector<8x32xf32>, vector<32x32xf32>, vector<8x32xf32> -> vector<8x32xf32>
    %13 = vector.extract_strided_slice %10 {offsets = [0, 0], sizes = [1, 32], strides = [1, 1]} : vector<3x32xf32> to vector<1x32xf32>
    %14 = vector.broadcast %13 : vector<1x32xf32> to vector<8x32xf32>
    %15 = arith.addf %12, %14 : vector<8x32xf32>
    %c0_10 = arith.constant 0 : index
    %c0_11 = arith.constant 0 : index
    %c0_12 = arith.constant 0 : index
    %16 = vector.load %arg9[%c0_10, %c0_11, %c0_12] : memref<1x8x32xf32, #tpu.memory_space<vmem>>, vector<1x8x32xf32>
    %17 = vector.shape_cast %16 : vector<1x8x32xf32> to vector<8x32xf32>
    %18 = vector.shape_cast %15 : vector<8x32xf32> to vector<1x8x32xf32>
    tpu.vector_store %arg9[%c0_10, %c0_11, %c0_12], %18 {strides = array<i32>} : memref<1x8x32xf32, #tpu.memory_space<vmem>>, vector<1x8x32xf32>,
    %c0_13 = arith.constant 0 : index
    %c0_14 = arith.constant 0 : index
    %19 = vector.load %arg6[%c0_13, %c0_14] : memref<32x32xf32, #tpu.memory_space<vmem>>, vector<32x32xf32>
    %cst_15 = arith.constant dense<0.000000e+00> : vector<8x32xf32>
    %20 = tpu.matmul %9, %19, %cst_15 {dimension_numbers = #tpu.dot_dimension_numbers<[1], [0], [0], [1], [0, 0, 1, 1], [], []>} : vector<8x32xf32>, vector<32x32xf32>, vector<8x32xf32> -> vector<8x32xf32>
    %21 = vector.extract_strided_slice %10 {offsets = [1, 0], sizes = [1, 32], strides = [1, 1]} : vector<3x32xf32> to vector<1x32xf32>
    %22 = vector.broadcast %21 : vector<1x32xf32> to vector<8x32xf32>
    %23 = arith.addf %20, %22 : vector<8x32xf32>
    %c0_16 = arith.constant 0 : index
    %c0_17 = arith.constant 0 : index
    %c0_18 = arith.constant 0 : index
    %24 = vector.load %arg10[%c0_16, %c0_17, %c0_18] : memref<1x8x32xf32, #tpu.memory_space<vmem>>, vector<1x8x32xf32>
    %25 = vector.shape_cast %24 : vector<1x8x32xf32> to vector<8x32xf32>
    %26 = vector.shape_cast %23 : vector<8x32xf32> to vector<1x8x32xf32>
    tpu.vector_store %arg10[%c0_16, %c0_17, %c0_18], %26 {strides = array<i32>} : memref<1x8x32xf32, #tpu.memory_space<vmem>>, vector<1x8x32xf32>,
    %c0_19 = arith.constant 0 : index
    %c0_20 = arith.constant 0 : index
    %27 = vector.load %arg7[%c0_19, %c0_20] : memref<32x32xf32, #tpu.memory_space<vmem>>, vector<32x32xf32>
    %cst_21 = arith.constant dense<0.000000e+00> : vector<8x32xf32>
    %28 = tpu.matmul %1, %27, %cst_21 {dimension_numbers = #tpu.dot_dimension_numbers<[1], [0], [0], [1], [0, 0, 1, 1], [], []>} : vector<8x32xf32>, vector<32x32xf32>, vector<8x32xf32> -> vector<8x32xf32>
    %29 = vector.extract_strided_slice %10 {offsets = [2, 0], sizes = [1, 32], strides = [1, 1]} : vector<3x32xf32> to vector<1x32xf32>
    %30 = vector.broadcast %29 : vector<1x32xf32> to vector<8x32xf32>
    %31 = arith.addf %28, %30 : vector<8x32xf32>
    %c0_22 = arith.constant 0 : index
    %c0_23 = arith.constant 0 : index
    %c0_24 = arith.constant 0 : index
    %32 = vector.load %arg11[%c0_22, %c0_23, %c0_24] : memref<1x8x32xf32, #tpu.memory_space<vmem>>, vector<1x8x32xf32>
    %33 = vector.shape_cast %32 : vector<1x8x32xf32> to vector<8x32xf32>
    %34 = vector.shape_cast %31 : vector<8x32xf32> to vector<1x8x32xf32>
    tpu.vector_store %arg11[%c0_22, %c0_23, %c0_24], %34 {strides = array<i32>} : memref<1x8x32xf32, #tpu.memory_space<vmem>>, vector<1x8x32xf32>,
    return
  }
  func.func @transform_0(%arg0: i32, %arg1: i32) -> (i32, i32, i32) {
    %c0_i32 = arith.constant 0 : i32
    %c0_i32_0 = arith.constant 0 : i32
    return %arg0, %arg1, %c0_i32 : i32, i32, i32
  }
  func.func @transform_1(%arg0: i32, %arg1: i32) -> (i32, i32) {
    %c0_i32 = arith.constant 0 : i32
    %c0_i32_0 = arith.constant 0 : i32
    return %arg1, %c0_i32 : i32, i32
  }
  func.func @transform_2(%arg0: i32, %arg1: i32) -> (i32, i32) {
    %c0_i32 = arith.constant 0 : i32
    %c0_i32_0 = arith.constant 0 : i32
    return %arg1, %c0_i32 : i32, i32
  }
  func.func @transform_3(%arg0: i32, %arg1: i32) -> (i32, i32) {
    %c0_i32 = arith.constant 0 : i32
    %c0_i32_0 = arith.constant 0 : i32
    %c0_i32_1 = arith.constant 0 : i32
    return %c0_i32, %c0_i32_0 : i32, i32
  }
  func.func @transform_4(%arg0: i32, %arg1: i32) -> (i32, i32) {
    %c0_i32 = arith.constant 0 : i32
    %c0_i32_0 = arith.constant 0 : i32
    %c0_i32_1 = arith.constant 0 : i32
    return %c0_i32, %c0_i32_0 : i32, i32
  }
  func.func @transform_5(%arg0: i32, %arg1: i32) -> (i32, i32) {
    %c0_i32 = arith.constant 0 : i32
    %c0_i32_0 = arith.constant 0 : i32
    %c0_i32_1 = arith.constant 0 : i32
    return %c0_i32, %c0_i32_0 : i32, i32
  }
  func.func @transform_6(%arg0: i32, %arg1: i32) -> (i32, i32) {
    %c0_i32 = arith.constant 0 : i32
    %c0_i32_0 = arith.constant 0 : i32
    %c0_i32_1 = arith.constant 0 : i32
    return %c0_i32, %c0_i32_0 : i32, i32
  }
  func.func @transform_7(%arg0: i32, %arg1: i32) -> (i32, i32, i32) {
    %c0_i32 = arith.constant 0 : i32
    %c0_i32_0 = arith.constant 0 : i32
    return %arg0, %arg1, %c0_i32 : i32, i32, i32
  }
  func.func @transform_8(%arg0: i32, %arg1: i32) -> (i32, i32, i32) {
    %c0_i32 = arith.constant 0 : i32
    %c0_i32_0 = arith.constant 0 : i32
    return %arg0, %arg1, %c0_i32 : i32, i32, i32
  }
  func.func @transform_9(%arg0: i32, %arg1: i32) -> (i32, i32, i32) {
    %c0_i32 = arith.constant 0 : i32
    %c0_i32_0 = arith.constant 0 : i32
    return %arg0, %arg1, %c0_i32 : i32, i32, i32
  }
}

module attributes {stable_mosaic.version = 11 : i64} {
  func.func @flash_attention_kernel(%arg0: i32, %arg1: i32, %arg2: i32, %arg3: memref<1x8x8xf32, #tpu.memory_space<vmem>>, %arg4: memref<1x8x8xf32, #tpu.memory_space<vmem>>, %arg5: memref<1x8x8xf32, #tpu.memory_space<vmem>>, %arg6: memref<1x8x8xf32, #tpu.memory_space<vmem>>, %arg7: memref<8x1xf32, #tpu.memory_space<vmem>>, %arg8: memref<8x1xf32, #tpu.memory_space<vmem>>, %arg9: memref<8x8xf32, #tpu.memory_space<vmem>>) attributes {dimension_semantics = [#tpu.dimension_semantics<parallel>, #tpu.dimension_semantics<parallel>, #tpu.dimension_semantics<arbitrary>], iteration_bounds = array<i64: 8, 1, 1>, scalar_prefetch = 0 : i64, scratch_operands = 3 : i64, tpu.core_type = #tpu.core_type<tc>, window_params = [{transform_indices = @transform_0, window_bounds = array<i64: 1, 8, 8>}, {transform_indices = @transform_1, window_bounds = array<i64: 1, 8, 8>}, {transform_indices = @transform_2, window_bounds = array<i64: 1, 8, 8>}, {transform_indices = @transform_3, window_bounds = array<i64: 1, 8, 8>}]} {
    %c0_i32 = arith.constant 0 : i32
    %0 = arith.cmpi eq, %arg2, %c0_i32 : i32
    %1 = arith.extui %0 : i1 to i32
    %c0_i32_0 = arith.constant 0 : i32
    %2 = arith.cmpi ne, %1, %c0_i32_0 : i32
    scf.if %2 {
      %cst_26 = arith.constant 0xFF800000 : f32
      %35 = vector.broadcast %cst_26 : f32 to vector<8x1xf32>
      %c0_27 = arith.constant 0 : index
      %c0_28 = arith.constant 0 : index
      %36 = vector.load %arg7[%c0_27, %c0_28] : memref<8x1xf32, #tpu.memory_space<vmem>>, vector<8x1xf32>
      tpu.vector_store %arg7[%c0_27, %c0_28], %35 {strides = array<i32>} : memref<8x1xf32, #tpu.memory_space<vmem>>, vector<8x1xf32>,
      %cst_29 = arith.constant 0.000000e+00 : f32
      %37 = vector.broadcast %cst_29 : f32 to vector<8x1xf32>
      %c0_30 = arith.constant 0 : index
      %c0_31 = arith.constant 0 : index
      %38 = vector.load %arg8[%c0_30, %c0_31] : memref<8x1xf32, #tpu.memory_space<vmem>>, vector<8x1xf32>
      tpu.vector_store %arg8[%c0_30, %c0_31], %37 {strides = array<i32>} : memref<8x1xf32, #tpu.memory_space<vmem>>, vector<8x1xf32>,
      %cst_32 = arith.constant 0.000000e+00 : f32
      %39 = vector.broadcast %cst_32 : f32 to vector<8x8xf32>
      %c0_33 = arith.constant 0 : index
      %c0_34 = arith.constant 0 : index
      %40 = vector.load %arg9[%c0_33, %c0_34] : memref<8x8xf32, #tpu.memory_space<vmem>>, vector<8x8xf32>
      tpu.vector_store %arg9[%c0_33, %c0_34], %39 {strides = array<i32>} : memref<8x8xf32, #tpu.memory_space<vmem>>, vector<8x8xf32>,
    } else {
    }
    %c0 = arith.constant 0 : index
    %c0_1 = arith.constant 0 : index
    %c0_2 = arith.constant 0 : index
    %3 = vector.load %arg3[%c0, %c0_1, %c0_2] : memref<1x8x8xf32, #tpu.memory_space<vmem>>, vector<1x8x8xf32>
    %4 = vector.shape_cast %3 : vector<1x8x8xf32> to vector<8x8xf32>
    %c0_3 = arith.constant 0 : index
    %c0_4 = arith.constant 0 : index
    %c0_5 = arith.constant 0 : index
    %5 = vector.load %arg4[%c0_3, %c0_4, %c0_5] : memref<1x8x8xf32, #tpu.memory_space<vmem>>, vector<1x8x8xf32>
    %6 = vector.shape_cast %5 : vector<1x8x8xf32> to vector<8x8xf32>
    %c0_6 = arith.constant 0 : index
    %c0_7 = arith.constant 0 : index
    %c0_8 = arith.constant 0 : index
    %7 = vector.load %arg5[%c0_6, %c0_7, %c0_8] : memref<1x8x8xf32, #tpu.memory_space<vmem>>, vector<1x8x8xf32>
    %8 = vector.shape_cast %7 : vector<1x8x8xf32> to vector<8x8xf32>
    %cst = arith.constant dense<0.000000e+00> : vector<8x8xf32>
    %9 = tpu.matmul %4, %6, %cst {dimension_numbers = #tpu.dot_dimension_numbers<[1], [1], [0], [0], [0, 0, 1, 0], [], []>} : vector<8x8xf32>, vector<8x8xf32>, vector<8x8xf32> -> vector<8x8xf32>
    %c0_9 = arith.constant 0 : index
    %c0_10 = arith.constant 0 : index
    %10 = vector.load %arg7[%c0_9, %c0_10] : memref<8x1xf32, #tpu.memory_space<vmem>>, vector<8x1xf32>
    %cst_11 = arith.constant dense<0xFF800000> : vector<8xf32>
    %11 = vector.multi_reduction <maximumf>, %9, %cst_11 [1] : vector<8x8xf32> to vector<8xf32>
    %12 = vector.shape_cast %11 : vector<8xf32> to vector<8x1xf32>
    %13 = arith.maximumf %10, %12 : vector<8x1xf32>
    %14 = arith.subf %10, %13 : vector<8x1xf32>
    %15 = math.exp %14 : vector<8x1xf32>
    %16 = vector.broadcast %13 : vector<8x1xf32> to vector<8x8xf32>
    %17 = arith.subf %9, %16 : vector<8x8xf32>
    %18 = math.exp %17 : vector<8x8xf32>
    %c0_12 = arith.constant 0 : index
    %c0_13 = arith.constant 0 : index
    %19 = vector.load %arg8[%c0_12, %c0_13] : memref<8x1xf32, #tpu.memory_space<vmem>>, vector<8x1xf32>
    %20 = arith.mulf %15, %19 : vector<8x1xf32>
    %cst_14 = arith.constant dense<0.000000e+00> : vector<8xf32>
    %21 = vector.multi_reduction <add>, %18, %cst_14 [1] : vector<8x8xf32> to vector<8xf32>
    %22 = vector.shape_cast %21 : vector<8xf32> to vector<8x1xf32>
    %23 = arith.addf %20, %22 : vector<8x1xf32>
    %c0_15 = arith.constant 0 : index
    %c0_16 = arith.constant 0 : index
    %24 = vector.load %arg8[%c0_15, %c0_16] : memref<8x1xf32, #tpu.memory_space<vmem>>, vector<8x1xf32>
    tpu.vector_store %arg8[%c0_15, %c0_16], %23 {strides = array<i32>} : memref<8x1xf32, #tpu.memory_space<vmem>>, vector<8x1xf32>,
    %c0_17 = arith.constant 0 : index
    %c0_18 = arith.constant 0 : index
    %25 = vector.load %arg9[%c0_17, %c0_18] : memref<8x8xf32, #tpu.memory_space<vmem>>, vector<8x8xf32>
    %26 = vector.broadcast %15 : vector<8x1xf32> to vector<8x8xf32>
    %27 = arith.mulf %26, %25 : vector<8x8xf32>
    %cst_19 = arith.constant dense<0.000000e+00> : vector<8x8xf32>
    %28 = tpu.matmul %18, %8, %cst_19 {dimension_numbers = #tpu.dot_dimension_numbers<[1], [0], [0], [1], [0, 0, 1, 1], [], []>} : vector<8x8xf32>, vector<8x8xf32>, vector<8x8xf32> -> vector<8x8xf32>
    %29 = arith.addf %27, %28 : vector<8x8xf32>
    %c0_20 = arith.constant 0 : index
    %c0_21 = arith.constant 0 : index
    %30 = vector.load %arg9[%c0_20, %c0_21] : memref<8x8xf32, #tpu.memory_space<vmem>>, vector<8x8xf32>
    tpu.vector_store %arg9[%c0_20, %c0_21], %29 {strides = array<i32>} : memref<8x8xf32, #tpu.memory_space<vmem>>, vector<8x8xf32>,
    %c0_22 = arith.constant 0 : index
    %c0_23 = arith.constant 0 : index
    %31 = vector.load %arg7[%c0_22, %c0_23] : memref<8x1xf32, #tpu.memory_space<vmem>>, vector<8x1xf32>
    tpu.vector_store %arg7[%c0_22, %c0_23], %13 {strides = array<i32>} : memref<8x1xf32, #tpu.memory_space<vmem>>, vector<8x1xf32>,
    %c0_i32_24 = arith.constant 0 : i32
    %32 = arith.cmpi eq, %arg2, %c0_i32_24 : i32
    %33 = arith.extui %32 : i1 to i32
    %c0_i32_25 = arith.constant 0 : i32
    %34 = arith.cmpi ne, %33, %c0_i32_25 : i32
    scf.if %34 {
      %c0_26 = arith.constant 0 : index
      %c0_27 = arith.constant 0 : index
      %35 = vector.load %arg8[%c0_26, %c0_27] : memref<8x1xf32, #tpu.memory_space<vmem>>, vector<8x1xf32>
      %36 = tpu.reciprocal %35 {approx = true} : vector<8x1xf32> -> vector<8x1xf32>
      %c0_28 = arith.constant 0 : index
      %c0_29 = arith.constant 0 : index
      %37 = vector.load %arg9[%c0_28, %c0_29] : memref<8x8xf32, #tpu.memory_space<vmem>>, vector<8x8xf32>
      %38 = vector.broadcast %36 : vector<8x1xf32> to vector<8x8xf32>
      %39 = arith.mulf %37, %38 : vector<8x8xf32>
      %c0_30 = arith.constant 0 : index
      %c0_31 = arith.constant 0 : index
      %c0_32 = arith.constant 0 : index
      %40 = vector.load %arg6[%c0_30, %c0_31, %c0_32] : memref<1x8x8xf32, #tpu.memory_space<vmem>>, vector<1x8x8xf32>
      %41 = vector.shape_cast %40 : vector<1x8x8xf32> to vector<8x8xf32>
      %42 = vector.shape_cast %39 : vector<8x8xf32> to vector<1x8x8xf32>
      tpu.vector_store %arg6[%c0_30, %c0_31, %c0_32], %42 {strides = array<i32>} : memref<1x8x8xf32, #tpu.memory_space<vmem>>, vector<1x8x8xf32>,
    } else {
    }
    return
  }
  func.func @transform_0(%arg0: i32, %arg1: i32, %arg2: i32) -> (i32, i32, i32) {
    %c0_i32 = arith.constant 0 : i32
    %c0_i32_0 = arith.constant 0 : i32
    return %arg0, %arg1, %c0_i32 : i32, i32, i32
  }
  func.func @transform_1(%arg0: i32, %arg1: i32, %arg2: i32) -> (i32, i32, i32) {
    %c0_i32 = arith.constant 0 : i32
    %c0_i32_0 = arith.constant 0 : i32
    return %arg0, %arg2, %c0_i32 : i32, i32, i32
  }
  func.func @transform_2(%arg0: i32, %arg1: i32, %arg2: i32) -> (i32, i32, i32) {
    %c0_i32 = arith.constant 0 : i32
    %c0_i32_0 = arith.constant 0 : i32
    return %arg0, %arg2, %c0_i32 : i32, i32, i32
  }
  func.func @transform_3(%arg0: i32, %arg1: i32, %arg2: i32) -> (i32, i32, i32) {
    %c0_i32 = arith.constant 0 : i32
    %c0_i32_0 = arith.constant 0 : i32
    return %arg0, %arg1, %c0_i32 : i32, i32, i32
  }
}

module attributes {stable_mosaic.version = 11 : i64} {
  func.func @out_ffn_kernel(%arg0: i32, %arg1: i32, %arg2: memref<1x8x32xf32, #tpu.memory_space<vmem>>, %arg3: memref<1x8x32xf32, #tpu.memory_space<vmem>>, %arg4: memref<32x32xf32, #tpu.memory_space<vmem>>, %arg5: memref<32x64xf32, #tpu.memory_space<vmem>>, %arg6: memref<64x32xf32, #tpu.memory_space<vmem>>, %arg7: memref<1x64xf32, #tpu.memory_space<vmem>>, %arg8: memref<8x32xf32, #tpu.memory_space<vmem>>, %arg9: memref<1x8x32xf32, #tpu.memory_space<vmem>>) attributes {dimension_semantics = [#tpu.dimension_semantics<parallel>, #tpu.dimension_semantics<parallel>], iteration_bounds = array<i64: 2, 1>, scalar_prefetch = 0 : i64, scratch_operands = 0 : i64, tpu.core_type = #tpu.core_type<tc>, window_params = [{transform_indices = @transform_0, window_bounds = array<i64: 1, 8, 32>}, {transform_indices = @transform_1, window_bounds = array<i64: 1, 8, 32>}, {pipeline_mode = #tpu.pipeline_mode<synchronous>, transform_indices = @transform_2, window_bounds = array<i64: 32, 32>}, {pipeline_mode = #tpu.pipeline_mode<synchronous>, transform_indices = @transform_3, window_bounds = array<i64: 32, 64>}, {pipeline_mode = #tpu.pipeline_mode<synchronous>, transform_indices = @transform_4, window_bounds = array<i64: 64, 32>}, {pipeline_mode = #tpu.pipeline_mode<synchronous>, transform_indices = @transform_5, window_bounds = array<i64: 1, 64>}, {pipeline_mode = #tpu.pipeline_mode<synchronous>, transform_indices = @transform_6, window_bounds = array<i64: 8, 32>}, {transform_indices = @transform_7, window_bounds = array<i64: 1, 8, 32>}]} {
    %c0 = arith.constant 0 : index
    %c0_0 = arith.constant 0 : index
    %c0_1 = arith.constant 0 : index
    %0 = vector.load %arg2[%c0, %c0_0, %c0_1] : memref<1x8x32xf32, #tpu.memory_space<vmem>>, vector<1x8x32xf32>
    %1 = vector.shape_cast %0 : vector<1x8x32xf32> to vector<8x32xf32>
    %c0_2 = arith.constant 0 : index
    %c0_3 = arith.constant 0 : index
    %c0_4 = arith.constant 0 : index
    %2 = vector.load %arg3[%c0_2, %c0_3, %c0_4] : memref<1x8x32xf32, #tpu.memory_space<vmem>>, vector<1x8x32xf32>
    %3 = vector.shape_cast %2 : vector<1x8x32xf32> to vector<8x32xf32>
    %c0_5 = arith.constant 0 : index
    %c0_6 = arith.constant 0 : index
    %4 = vector.load %arg8[%c0_5, %c0_6] : memref<8x32xf32, #tpu.memory_space<vmem>>, vector<8x32xf32>
    %c0_7 = arith.constant 0 : index
    %c0_8 = arith.constant 0 : index
    %5 = vector.load %arg4[%c0_7, %c0_8] : memref<32x32xf32, #tpu.memory_space<vmem>>, vector<32x32xf32>
    %cst = arith.constant dense<0.000000e+00> : vector<8x32xf32>
    %6 = tpu.matmul %3, %5, %cst {dimension_numbers = #tpu.dot_dimension_numbers<[1], [0], [0], [1], [0, 0, 1, 1], [], []>} : vector<8x32xf32>, vector<32x32xf32>, vector<8x32xf32> -> vector<8x32xf32>
    %7 = vector.extract_strided_slice %4 {offsets = [0, 0], sizes = [1, 32], strides = [1, 1]} : vector<8x32xf32> to vector<1x32xf32>
    %8 = vector.broadcast %7 : vector<1x32xf32> to vector<8x32xf32>
    %9 = arith.addf %6, %8 : vector<8x32xf32>
    %10 = arith.addf %1, %9 : vector<8x32xf32>
    %11 = vector.extract_strided_slice %4 {offsets = [2, 0], sizes = [1, 32], strides = [1, 1]} : vector<8x32xf32> to vector<1x32xf32>
    %12 = vector.extract_strided_slice %4 {offsets = [3, 0], sizes = [1, 32], strides = [1, 1]} : vector<8x32xf32> to vector<1x32xf32>
    %cst_9 = arith.constant dense<0.000000e+00> : vector<8xf32>
    %13 = vector.multi_reduction <add>, %10, %cst_9 [1] : vector<8x32xf32> to vector<8xf32>
    %14 = vector.shape_cast %13 : vector<8xf32> to vector<8x1xf32>
    %cst_10 = arith.constant 3.200000e+01 : f32
    %15 = vector.broadcast %cst_10 : f32 to vector<8x1xf32>
    %16 = arith.divf %14, %15 : vector<8x1xf32>
    %17 = vector.broadcast %16 : vector<8x1xf32> to vector<8x32xf32>
    %18 = arith.subf %10, %17 : vector<8x32xf32>
    %19 = arith.mulf %18, %18 : vector<8x32xf32>
    %cst_11 = arith.constant dense<0.000000e+00> : vector<8xf32>
    %20 = vector.multi_reduction <add>, %19, %cst_11 [1] : vector<8x32xf32> to vector<8xf32>
    %21 = vector.shape_cast %20 : vector<8xf32> to vector<8x1xf32>
    %cst_12 = arith.constant 3.200000e+01 : f32
    %22 = vector.broadcast %cst_12 : f32 to vector<8x1xf32>
    %23 = arith.divf %21, %22 : vector<8x1xf32>
    %24 = vector.broadcast %16 : vector<8x1xf32> to vector<8x32xf32>
    %25 = arith.subf %10, %24 : vector<8x32xf32>
    %cst_13 = arith.constant 9.99999974E-6 : f32
    %26 = vector.broadcast %cst_13 : f32 to vector<8x1xf32>
    %27 = arith.addf %23, %26 : vector<8x1xf32>
    %28 = math.rsqrt %27 : vector<8x1xf32>
    %29 = vector.broadcast %28 : vector<8x1xf32> to vector<8x32xf32>
    %30 = arith.mulf %25, %29 : vector<8x32xf32>
    %31 = vector.broadcast %11 : vector<1x32xf32> to vector<8x32xf32>
    %32 = arith.mulf %30, %31 : vector<8x32xf32>
    %33 = vector.broadcast %12 : vector<1x32xf32> to vector<8x32xf32>
    %34 = arith.addf %32, %33 : vector<8x32xf32>
    %c0_14 = arith.constant 0 : index
    %c0_15 = arith.constant 0 : index
    %35 = vector.load %arg5[%c0_14, %c0_15] : memref<32x64xf32, #tpu.memory_space<vmem>>, vector<32x64xf32>
    %cst_16 = arith.constant dense<0.000000e+00> : vector<8x64xf32>
    %36 = tpu.matmul %34, %35, %cst_16 {dimension_numbers = #tpu.dot_dimension_numbers<[1], [0], [0], [1], [0, 0, 1, 1], [], []>} : vector<8x32xf32>, vector<32x64xf32>, vector<8x64xf32> -> vector<8x64xf32>
    %c0_17 = arith.constant 0 : index
    %c0_18 = arith.constant 0 : index
    %37 = vector.load %arg7[%c0_17, %c0_18] : memref<1x64xf32, #tpu.memory_space<vmem>>, vector<1x64xf32>
    %38 = vector.broadcast %37 : vector<1x64xf32> to vector<8x64xf32>
    %39 = arith.addf %36, %38 : vector<8x64xf32>
    %cst_19 = arith.constant 0.000000e+00 : f32
    %40 = vector.broadcast %cst_19 : f32 to vector<8x64xf32>
    %41 = arith.maximumf %39, %40 : vector<8x64xf32>
    %c0_20 = arith.constant 0 : index
    %c0_21 = arith.constant 0 : index
    %42 = vector.load %arg6[%c0_20, %c0_21] : memref<64x32xf32, #tpu.memory_space<vmem>>, vector<64x32xf32>
    %cst_22 = arith.constant dense<0.000000e+00> : vector<8x32xf32>
    %43 = tpu.matmul %41, %42, %cst_22 {dimension_numbers = #tpu.dot_dimension_numbers<[1], [0], [0], [1], [0, 0, 1, 1], [], []>} : vector<8x64xf32>, vector<64x32xf32>, vector<8x32xf32> -> vector<8x32xf32>
    %44 = vector.extract_strided_slice %4 {offsets = [1, 0], sizes = [1, 32], strides = [1, 1]} : vector<8x32xf32> to vector<1x32xf32>
    %45 = vector.broadcast %44 : vector<1x32xf32> to vector<8x32xf32>
    %46 = arith.addf %43, %45 : vector<8x32xf32>
    %47 = arith.addf %34, %46 : vector<8x32xf32>
    %48 = vector.extract_strided_slice %4 {offsets = [4, 0], sizes = [1, 32], strides = [1, 1]} : vector<8x32xf32> to vector<1x32xf32>
    %49 = vector.extract_strided_slice %4 {offsets = [5, 0], sizes = [1, 32], strides = [1, 1]} : vector<8x32xf32> to vector<1x32xf32>
    %cst_23 = arith.constant dense<0.000000e+00> : vector<8xf32>
    %50 = vector.multi_reduction <add>, %47, %cst_23 [1] : vector<8x32xf32> to vector<8xf32>
    %51 = vector.shape_cast %50 : vector<8xf32> to vector<8x1xf32>
    %cst_24 = arith.constant 3.200000e+01 : f32
    %52 = vector.broadcast %cst_24 : f32 to vector<8x1xf32>
    %53 = arith.divf %51, %52 : vector<8x1xf32>
    %54 = vector.broadcast %53 : vector<8x1xf32> to vector<8x32xf32>
    %55 = arith.subf %47, %54 : vector<8x32xf32>
    %56 = arith.mulf %55, %55 : vector<8x32xf32>
    %cst_25 = arith.constant dense<0.000000e+00> : vector<8xf32>
    %57 = vector.multi_reduction <add>, %56, %cst_25 [1] : vector<8x32xf32> to vector<8xf32>
    %58 = vector.shape_cast %57 : vector<8xf32> to vector<8x1xf32>
    %cst_26 = arith.constant 3.200000e+01 : f32
    %59 = vector.broadcast %cst_26 : f32 to vector<8x1xf32>
    %60 = arith.divf %58, %59 : vector<8x1xf32>
    %61 = vector.broadcast %53 : vector<8x1xf32> to vector<8x32xf32>
    %62 = arith.subf %47, %61 : vector<8x32xf32>
    %cst_27 = arith.constant 9.99999974E-6 : f32
    %63 = vector.broadcast %cst_27 : f32 to vector<8x1xf32>
    %64 = arith.addf %60, %63 : vector<8x1xf32>
    %65 = math.rsqrt %64 : vector<8x1xf32>
    %66 = vector.broadcast %65 : vector<8x1xf32> to vector<8x32xf32>
    %67 = arith.mulf %62, %66 : vector<8x32xf32>
    %68 = vector.broadcast %48 : vector<1x32xf32> to vector<8x32xf32>
    %69 = arith.mulf %67, %68 : vector<8x32xf32>
    %70 = vector.broadcast %49 : vector<1x32xf32> to vector<8x32xf32>
    %71 = arith.addf %69, %70 : vector<8x32xf32>
    %c0_28 = arith.constant 0 : index
    %c0_29 = arith.constant 0 : index
    %c0_30 = arith.constant 0 : index
    %72 = vector.load %arg9[%c0_28, %c0_29, %c0_30] : memref<1x8x32xf32, #tpu.memory_space<vmem>>, vector<1x8x32xf32>
    %73 = vector.shape_cast %72 : vector<1x8x32xf32> to vector<8x32xf32>
    %74 = vector.shape_cast %71 : vector<8x32xf32> to vector<1x8x32xf32>
    tpu.vector_store %arg9[%c0_28, %c0_29, %c0_30], %74 {strides = array<i32>} : memref<1x8x32xf32, #tpu.memory_space<vmem>>, vector<1x8x32xf32>,
    return
  }
  func.func @transform_0(%arg0: i32, %arg1: i32) -> (i32, i32, i32) {
    %c0_i32 = arith.constant 0 : i32
    %c0_i32_0 = arith.constant 0 : i32
    return %arg0, %arg1, %c0_i32 : i32, i32, i32
  }
  func.func @transform_1(%arg0: i32, %arg1: i32) -> (i32, i32, i32) {
    %c0_i32 = arith.constant 0 : i32
    %c0_i32_0 = arith.constant 0 : i32
    return %arg0, %arg1, %c0_i32 : i32, i32, i32
  }
  func.func @transform_2(%arg0: i32, %arg1: i32) -> (i32, i32) {
    %c0_i32 = arith.constant 0 : i32
    %c0_i32_0 = arith.constant 0 : i32
    %c0_i32_1 = arith.constant 0 : i32
    return %c0_i32, %c0_i32_0 : i32, i32
  }
  func.func @transform_3(%arg0: i32, %arg1: i32) -> (i32, i32) {
    %c0_i32 = arith.constant 0 : i32
    %c0_i32_0 = arith.constant 0 : i32
    %c0_i32_1 = arith.constant 0 : i32
    return %c0_i32, %c0_i32_0 : i32, i32
  }
  func.func @transform_4(%arg0: i32, %arg1: i32) -> (i32, i32) {
    %c0_i32 = arith.constant 0 : i32
    %c0_i32_0 = arith.constant 0 : i32
    %c0_i32_1 = arith.constant 0 : i32
    return %c0_i32, %c0_i32_0 : i32, i32
  }
  func.func @transform_5(%arg0: i32, %arg1: i32) -> (i32, i32) {
    %c0_i32 = arith.constant 0 : i32
    %c0_i32_0 = arith.constant 0 : i32
    %c0_i32_1 = arith.constant 0 : i32
    return %c0_i32, %c0_i32_0 : i32, i32
  }
  func.func @transform_6(%arg0: i32, %arg1: i32) -> (i32, i32) {
    %c0_i32 = arith.constant 0 : i32
    %c0_i32_0 = arith.constant 0 : i32
    %c0_i32_1 = arith.constant 0 : i32
    return %c0_i32, %c0_i32_0 : i32, i32
  }
  func.func @transform_7(%arg0: i32, %arg1: i32) -> (i32, i32, i32) {
    %c0_i32 = arith.constant 0 : i32
    %c0_i32_0 = arith.constant 0 : i32
    return %arg0, %arg1, %c0_i32 : i32, i32, i32
  }
}

module attributes {stable_mosaic.version = 11 : i64} {
  func.func @out_ffn_kernel(%arg0: i32, %arg1: i32, %arg2: memref<1x8x32xf32, #tpu.memory_space<vmem>>, %arg3: memref<1x8x32xf32, #tpu.memory_space<vmem>>, %arg4: memref<32x32xf32, #tpu.memory_space<vmem>>, %arg5: memref<32x64xf32, #tpu.memory_space<vmem>>, %arg6: memref<64x32xf32, #tpu.memory_space<vmem>>, %arg7: memref<1x64xf32, #tpu.memory_space<vmem>>, %arg8: memref<8x32xf32, #tpu.memory_space<vmem>>, %arg9: memref<1x8x32xf32, #tpu.memory_space<vmem>>) attributes {dimension_semantics = [#tpu.dimension_semantics<parallel>, #tpu.dimension_semantics<parallel>], iteration_bounds = array<i64: 2, 1>, scalar_prefetch = 0 : i64, scratch_operands = 0 : i64, tpu.core_type = #tpu.core_type<tc>, window_params = [{transform_indices = @transform_0, window_bounds = array<i64: 1, 8, 32>}, {transform_indices = @transform_1, window_bounds = array<i64: 1, 8, 32>}, {pipeline_mode = #tpu.pipeline_mode<synchronous>, transform_indices = @transform_2, window_bounds = array<i64: 32, 32>}, {pipeline_mode = #tpu.pipeline_mode<synchronous>, transform_indices = @transform_3, window_bounds = array<i64: 32, 64>}, {pipeline_mode = #tpu.pipeline_mode<synchronous>, transform_indices = @transform_4, window_bounds = array<i64: 64, 32>}, {pipeline_mode = #tpu.pipeline_mode<synchronous>, transform_indices = @transform_5, window_bounds = array<i64: 1, 64>}, {pipeline_mode = #tpu.pipeline_mode<synchronous>, transform_indices = @transform_6, window_bounds = array<i64: 8, 32>}, {transform_indices = @transform_7, window_bounds = array<i64: 1, 8, 32>}]} {
    %c0 = arith.constant 0 : index
    %c0_0 = arith.constant 0 : index
    %c0_1 = arith.constant 0 : index
    %0 = vector.load %arg2[%c0, %c0_0, %c0_1] : memref<1x8x32xf32, #tpu.memory_space<vmem>>, vector<1x8x32xf32>
    %1 = vector.shape_cast %0 : vector<1x8x32xf32> to vector<8x32xf32>
    %c0_2 = arith.constant 0 : index
    %c0_3 = arith.constant 0 : index
    %c0_4 = arith.constant 0 : index
    %2 = vector.load %arg3[%c0_2, %c0_3, %c0_4] : memref<1x8x32xf32, #tpu.memory_space<vmem>>, vector<1x8x32xf32>
    %3 = vector.shape_cast %2 : vector<1x8x32xf32> to vector<8x32xf32>
    %c0_5 = arith.constant 0 : index
    %c0_6 = arith.constant 0 : index
    %4 = vector.load %arg8[%c0_5, %c0_6] : memref<8x32xf32, #tpu.memory_space<vmem>>, vector<8x32xf32>
    %c0_7 = arith.constant 0 : index
    %c0_8 = arith.constant 0 : index
    %5 = vector.load %arg4[%c0_7, %c0_8] : memref<32x32xf32, #tpu.memory_space<vmem>>, vector<32x32xf32>
    %cst = arith.constant dense<0.000000e+00> : vector<8x32xf32>
    %6 = tpu.matmul %3, %5, %cst {dimension_numbers = #tpu.dot_dimension_numbers<[1], [0], [0], [1], [0, 0, 1, 1], [], []>} : vector<8x32xf32>, vector<32x32xf32>, vector<8x32xf32> -> vector<8x32xf32>
    %7 = vector.extract_strided_slice %4 {offsets = [0, 0], sizes = [1, 32], strides = [1, 1]} : vector<8x32xf32> to vector<1x32xf32>
    %8 = vector.broadcast %7 : vector<1x32xf32> to vector<8x32xf32>
    %9 = arith.addf %6, %8 : vector<8x32xf32>
    %10 = arith.addf %1, %9 : vector<8x32xf32>
    %11 = vector.extract_strided_slice %4 {offsets = [2, 0], sizes = [1, 32], strides = [1, 1]} : vector<8x32xf32> to vector<1x32xf32>
    %12 = vector.extract_strided_slice %4 {offsets = [3, 0], sizes = [1, 32], strides = [1, 1]} : vector<8x32xf32> to vector<1x32xf32>
    %cst_9 = arith.constant dense<0.000000e+00> : vector<8xf32>
    %13 = vector.multi_reduction <add>, %10, %cst_9 [1] : vector<8x32xf32> to vector<8xf32>
    %14 = vector.shape_cast %13 : vector<8xf32> to vector<8x1xf32>
    %cst_10 = arith.constant 3.200000e+01 : f32
    %15 = vector.broadcast %cst_10 : f32 to vector<8x1xf32>
    %16 = arith.divf %14, %15 : vector<8x1xf32>
    %17 = vector.broadcast %16 : vector<8x1xf32> to vector<8x32xf32>
    %18 = arith.subf %10, %17 : vector<8x32xf32>
    %19 = arith.mulf %18, %18 : vector<8x32xf32>
    %cst_11 = arith.constant dense<0.000000e+00> : vector<8xf32>
    %20 = vector.multi_reduction <add>, %19, %cst_11 [1] : vector<8x32xf32> to vector<8xf32>
    %21 = vector.shape_cast %20 : vector<8xf32> to vector<8x1xf32>
    %cst_12 = arith.constant 3.200000e+01 : f32
    %22 = vector.broadcast %cst_12 : f32 to vector<8x1xf32>
    %23 = arith.divf %21, %22 : vector<8x1xf32>
    %24 = vector.broadcast %16 : vector<8x1xf32> to vector<8x32xf32>
    %25 = arith.subf %10, %24 : vector<8x32xf32>
    %cst_13 = arith.constant 9.99999974E-6 : f32
    %26 = vector.broadcast %cst_13 : f32 to vector<8x1xf32>
    %27 = arith.addf %23, %26 : vector<8x1xf32>
    %28 = math.rsqrt %27 : vector<8x1xf32>
    %29 = vector.broadcast %28 : vector<8x1xf32> to vector<8x32xf32>
    %30 = arith.mulf %25, %29 : vector<8x32xf32>
    %31 = vector.broadcast %11 : vector<1x32xf32> to vector<8x32xf32>
    %32 = arith.mulf %30, %31 : vector<8x32xf32>
    %33 = vector.broadcast %12 : vector<1x32xf32> to vector<8x32xf32>
    %34 = arith.addf %32, %33 : vector<8x32xf32>
    %c0_14 = arith.constant 0 : index
    %c0_15 = arith.constant 0 : index
    %35 = vector.load %arg5[%c0_14, %c0_15] : memref<32x64xf32, #tpu.memory_space<vmem>>, vector<32x64xf32>
    %cst_16 = arith.constant dense<0.000000e+00> : vector<8x64xf32>
    %36 = tpu.matmul %34, %35, %cst_16 {dimension_numbers = #tpu.dot_dimension_numbers<[1], [0], [0], [1], [0, 0, 1, 1], [], []>} : vector<8x32xf32>, vector<32x64xf32>, vector<8x64xf32> -> vector<8x64xf32>
    %c0_17 = arith.constant 0 : index
    %c0_18 = arith.constant 0 : index
    %37 = vector.load %arg7[%c0_17, %c0_18] : memref<1x64xf32, #tpu.memory_space<vmem>>, vector<1x64xf32>
    %38 = vector.broadcast %37 : vector<1x64xf32> to vector<8x64xf32>
    %39 = arith.addf %36, %38 : vector<8x64xf32>
    %cst_19 = arith.constant 0.000000e+00 : f32
    %40 = vector.broadcast %cst_19 : f32 to vector<8x64xf32>
    %41 = arith.maximumf %39, %40 : vector<8x64xf32>
    %c0_20 = arith.constant 0 : index
    %c0_21 = arith.constant 0 : index
    %42 = vector.load %arg6[%c0_20, %c0_21] : memref<64x32xf32, #tpu.memory_space<vmem>>, vector<64x32xf32>
    %cst_22 = arith.constant dense<0.000000e+00> : vector<8x32xf32>
    %43 = tpu.matmul %41, %42, %cst_22 {dimension_numbers = #tpu.dot_dimension_numbers<[1], [0], [0], [1], [0, 0, 1, 1], [], []>} : vector<8x64xf32>, vector<64x32xf32>, vector<8x32xf32> -> vector<8x32xf32>
    %44 = vector.extract_strided_slice %4 {offsets = [1, 0], sizes = [1, 32], strides = [1, 1]} : vector<8x32xf32> to vector<1x32xf32>
    %45 = vector.broadcast %44 : vector<1x32xf32> to vector<8x32xf32>
    %46 = arith.addf %43, %45 : vector<8x32xf32>
    %47 = arith.addf %34, %46 : vector<8x32xf32>
    %48 = vector.extract_strided_slice %4 {offsets = [4, 0], sizes = [1, 32], strides = [1, 1]} : vector<8x32xf32> to vector<1x32xf32>
    %49 = vector.extract_strided_slice %4 {offsets = [5, 0], sizes = [1, 32], strides = [1, 1]} : vector<8x32xf32> to vector<1x32xf32>
    %cst_23 = arith.constant dense<0.000000e+00> : vector<8xf32>
    %50 = vector.multi_reduction <add>, %47, %cst_23 [1] : vector<8x32xf32> to vector<8xf32>
    %51 = vector.shape_cast %50 : vector<8xf32> to vector<8x1xf32>
    %cst_24 = arith.constant 3.200000e+01 : f32
    %52 = vector.broadcast %cst_24 : f32 to vector<8x1xf32>
    %53 = arith.divf %51, %52 : vector<8x1xf32>
    %54 = vector.broadcast %53 : vector<8x1xf32> to vector<8x32xf32>
    %55 = arith.subf %47, %54 : vector<8x32xf32>
    %56 = arith.mulf %55, %55 : vector<8x32xf32>
    %cst_25 = arith.constant dense<0.000000e+00> : vector<8xf32>
    %57 = vector.multi_reduction <add>, %56, %cst_25 [1] : vector<8x32xf32> to vector<8xf32>
    %58 = vector.shape_cast %57 : vector<8xf32> to vector<8x1xf32>
    %cst_26 = arith.constant 3.200000e+01 : f32
    %59 = vector.broadcast %cst_26 : f32 to vector<8x1xf32>
    %60 = arith.divf %58, %59 : vector<8x1xf32>
    %61 = vector.broadcast %53 : vector<8x1xf32> to vector<8x32xf32>
    %62 = arith.subf %47, %61 : vector<8x32xf32>
    %cst_27 = arith.constant 9.99999974E-6 : f32
    %63 = vector.broadcast %cst_27 : f32 to vector<8x1xf32>
    %64 = arith.addf %60, %63 : vector<8x1xf32>
    %65 = math.rsqrt %64 : vector<8x1xf32>
    %66 = vector.broadcast %65 : vector<8x1xf32> to vector<8x32xf32>
    %67 = arith.mulf %62, %66 : vector<8x32xf32>
    %68 = vector.broadcast %48 : vector<1x32xf32> to vector<8x32xf32>
    %69 = arith.mulf %67, %68 : vector<8x32xf32>
    %70 = vector.broadcast %49 : vector<1x32xf32> to vector<8x32xf32>
    %71 = arith.addf %69, %70 : vector<8x32xf32>
    %72 = vector.extract_strided_slice %4 {offsets = [6, 0], sizes = [1, 32], strides = [1, 1]} : vector<8x32xf32> to vector<1x32xf32>
    %73 = vector.extract_strided_slice %4 {offsets = [7, 0], sizes = [1, 32], strides = [1, 1]} : vector<8x32xf32> to vector<1x32xf32>
    %cst_28 = arith.constant dense<0.000000e+00> : vector<8xf32>
    %74 = vector.multi_reduction <add>, %71, %cst_28 [1] : vector<8x32xf32> to vector<8xf32>
    %75 = vector.shape_cast %74 : vector<8xf32> to vector<8x1xf32>
    %cst_29 = arith.constant 3.200000e+01 : f32
    %76 = vector.broadcast %cst_29 : f32 to vector<8x1xf32>
    %77 = arith.divf %75, %76 : vector<8x1xf32>
    %78 = vector.broadcast %77 : vector<8x1xf32> to vector<8x32xf32>
    %79 = arith.subf %71, %78 : vector<8x32xf32>
    %80 = arith.mulf %79, %79 : vector<8x32xf32>
    %cst_30 = arith.constant dense<0.000000e+00> : vector<8xf32>
    %81 = vector.multi_reduction <add>, %80, %cst_30 [1] : vector<8x32xf32> to vector<8xf32>
    %82 = vector.shape_cast %81 : vector<8xf32> to vector<8x1xf32>
    %cst_31 = arith.constant 3.200000e+01 : f32
    %83 = vector.broadcast %cst_31 : f32 to vector<8x1xf32>
    %84 = arith.divf %82, %83 : vector<8x1xf32>
    %85 = vector.broadcast %77 : vector<8x1xf32> to vector<8x32xf32>
    %86 = arith.subf %71, %85 : vector<8x32xf32>
    %cst_32 = arith.constant 9.99999974E-6 : f32
    %87 = vector.broadcast %cst_32 : f32 to vector<8x1xf32>
    %88 = arith.addf %84, %87 : vector<8x1xf32>
    %89 = math.rsqrt %88 : vector<8x1xf32>
    %90 = vector.broadcast %89 : vector<8x1xf32> to vector<8x32xf32>
    %91 = arith.mulf %86, %90 : vector<8x32xf32>
    %92 = vector.broadcast %72 : vector<1x32xf32> to vector<8x32xf32>
    %93 = arith.mulf %91, %92 : vector<8x32xf32>
    %94 = vector.broadcast %73 : vector<1x32xf32> to vector<8x32xf32>
    %95 = arith.addf %93, %94 : vector<8x32xf32>
    %c0_33 = arith.constant 0 : index
    %c0_34 = arith.constant 0 : index
    %c0_35 = arith.constant 0 : index
    %96 = vector.load %arg9[%c0_33, %c0_34, %c0_35] : memref<1x8x32xf32, #tpu.memory_space<vmem>>, vector<1x8x32xf32>
    %97 = vector.shape_cast %96 : vector<1x8x32xf32> to vector<8x32xf32>
    %98 = vector.shape_cast %95 : vector<8x32xf32> to vector<1x8x32xf32>
    tpu.vector_store %arg9[%c0_33, %c0_34, %c0_35], %98 {strides = array<i32>} : memref<1x8x32xf32, #tpu.memory_space<vmem>>, vector<1x8x32xf32>,
    return
  }
  func.func @transform_0(%arg0: i32, %arg1: i32) -> (i32, i32, i32) {
    %c0_i32 = arith.constant 0 : i32
    %c0_i32_0 = arith.constant 0 : i32
    return %arg0, %arg1, %c0_i32 : i32, i32, i32
  }
  func.func @transform_1(%arg0: i32, %arg1: i32) -> (i32, i32, i32) {
    %c0_i32 = arith.constant 0 : i32
    %c0_i32_0 = arith.constant 0 : i32
    return %arg0, %arg1, %c0_i32 : i32, i32, i32
  }
  func.func @transform_2(%arg0: i32, %arg1: i32) -> (i32, i32) {
    %c0_i32 = arith.constant 0 : i32
    %c0_i32_0 = arith.constant 0 : i32
    %c0_i32_1 = arith.constant 0 : i32
    return %c0_i32, %c0_i32_0 : i32, i32
  }
  func.func @transform_3(%arg0: i32, %arg1: i32) -> (i32, i32) {
    %c0_i32 = arith.constant 0 : i32
    %c0_i32_0 = arith.constant 0 : i32
    %c0_i32_1 = arith.constant 0 : i32
    return %c0_i32, %c0_i32_0 : i32, i32
  }
  func.func @transform_4(%arg0: i32, %arg1: i32) -> (i32, i32) {
    %c0_i32 = arith.constant 0 : i32
    %c0_i32_0 = arith.constant 0 : i32
    %c0_i32_1 = arith.constant 0 : i32
    return %c0_i32, %c0_i32_0 : i32, i32
  }
  func.func @transform_5(%arg0: i32, %arg1: i32) -> (i32, i32) {
    %c0_i32 = arith.constant 0 : i32
    %c0_i32_0 = arith.constant 0 : i32
    %c0_i32_1 = arith.constant 0 : i32
    return %c0_i32, %c0_i32_0 : i32, i32
  }
  func.func @transform_6(%arg0: i32, %arg1: i32) -> (i32, i32) {
    %c0_i32 = arith.constant 0 : i32
    %c0_i32_0 = arith.constant 0 : i32
    %c0_i32_1 = arith.constant 0 : i32
    return %c0_i32, %c0_i32_0 : i32, i32
  }
  func.func @transform_7(%arg0: i32, %arg1: i32) -> (i32, i32, i32) {
    %c0_i32 = arith.constant 0 : i32
    %c0_i32_0 = arith.constant 0 : i32
    return %arg0, %arg1, %c0_i32 : i32, i32, i32
  }
}

</mosaic_0001>

<llo_original>
// kernel: roformer_encoder.6
$region0: #{roformer_encoder.6}
  #allocation0 [shape = 'u32[]', space=smem, size = 0x4, offset = 0x4, fixed_abs, tag = 'smem constant byte address 0x4 - core index']
  #allocation1 [shape = 'u32[144,128]{1,0:T(1,128)}', space=vmem, size = 0x12000, scoped, tag = 'internal scratch']
  %s0 = inlined_call_operand.vmem [shape: f32[2,8,32], index: 0, kind: input, shape index: {}]
  %s1 = inlined_call_operand.vmem [shape: f32[8,32], index: 1, kind: input, shape index: {}]
  %s2 = inlined_call_operand.vmem [shape: f32[8,32], index: 2, kind: input, shape index: {}]
  %s3 = inlined_call_operand.vmem [shape: f32[32,32], index: 3, kind: input, shape index: {}]
  %s4 = inlined_call_operand.vmem [shape: f32[32,32], index: 4, kind: input, shape index: {}]
  %s5 = inlined_call_operand.vmem [shape: f32[32,32], index: 5, kind: input, shape index: {}]
  %s6 = inlined_call_operand.vmem [shape: f32[3,32], index: 6, kind: input, shape index: {}]
  %s7 = inlined_call_operand.vmem [shape: f32[2,8,32], index: 7, kind: output, shape index: {0}]
  %s8 = inlined_call_operand.vmem [shape: f32[2,8,32], index: 8, kind: output, shape index: {1}]
  %s9 = inlined_call_operand.vmem [shape: f32[2,8,32], index: 9, kind: output, shape index: {2}]
  %10 = xla_tuple %s7, %s8, %s9
  %s11 = sld [smem:[#allocation0]]
  $region77: #{roformer_encoder.6} parent=0
    _
  %s13 = ssub.s32 1, %s11
  %s14 = scalar_select 0, %s13, %s11
  loop: start=0, step=1, limit=4
  $region2: #{roformer_encoder.6} parent=0 // loop_pre_header
    _
  $region3: #{roformer_encoder.6} parent=0 // loop_header
    %s16 = sphi 0, %s20
    %p17 = scmp.ge.s32.totalorder %s16, 4
    %s23 = sphi 0, %s35
    %s24 = sphi 0, %s31
    %s25 = sphi 0, %s23
    %s26 = sphi 0, %s24
    %s27 = sphi 0, %s25
    %s28 = sphi 0, %s26
    %s40 = sphi 0, %s42
    %s43 = sphi 0, %s40
    %s44 = sphi 0, %s43
    %s60 = sphi 0, %s44
    %s66 = sphi 0, %s68
    %s69 = sphi 0, %s66
    %s70 = sphi 0, %s69
    %s86 = sphi 0, %s70
    %s92 = sphi 0, %s94
    %s95 = sphi 0, %s92
    %s96 = sphi 0, %s95
    %s112 = sphi 0, %s96
    %s116 = sphi 0, %s116
    %s118 = sphi 0, %s116
    %s119 = sphi 0, %s118
    %s133 = sphi 0, %s119
    %s137 = sphi 0, %s137
    %s139 = sphi 0, %s137
    %s140 = sphi 0, %s139
    %s154 = sphi 0, %s140
    %s158 = sphi 0, %s158
    %s160 = sphi 0, %s158
    %s161 = sphi 0, %s160
    %s175 = sphi 0, %s161
    %s179 = sphi 0, %s179
    %s181 = sphi 0, %s179
    %s182 = sphi 0, %s181
    %s196 = sphi 0, %s182
    %s204 = sphi 0, %s206
    %s207 = sphi 0, %s204
    %s208 = sphi 0, %s207
    %s224 = sphi 0, %s208
    %s232 = sphi 0, %s234
    %s235 = sphi 0, %s232
    %s236 = sphi 0, %s235
    %s252 = sphi 0, %s236
    %s260 = sphi 0, %s262
    %s263 = sphi 0, %s260
    %s264 = sphi 0, %s263
    %s280 = sphi 0, %s264
  $region4: #{roformer_encoder.6} parent=0 // loop_header_branch
    %19 = sbr.rel (%p17) target = $region8
  $region5: #{roformer_encoder.6} parent=0 // loop_body
    %s21 = ssub.s32 %s16, 1
    %s22 = ssub.s32 %s16, 2
    %s29 = sadd.s32 1, %s24
    %p30 = scmp.ge.s32.totalorder %s29, 1
    %s31 = scalar_select %p30, 0, %s29
    %s32 = sadd.s32 1, %s23
    %s33 = scalar_select %p30, %s32, %s23
    %p34 = scmp.ge.s32.totalorder %s33, 2
    %s35 = scalar_select %p34, 0, %s33
    %s36 = ssub.s32 %s23, %s35
    %s37 = ssub.s32 %s24, %s31
    %s38 = sor.u32 %s36, %s37
    %p39 = scmp.eq.s32.totalorder %s38, 0
    %s41 = sadd.s32 %s40, 1
    %s42 = scalar_select %p39, %s40, %s41
    %p45 = pneg %p39
    %p46 = scmp.eq.s32.totalorder %s16, 1
    %p47 = por %p45, %p46
    %p48 = scmp.ne.s32.totalorder %s40, %s43
    %p49 = scmp.eq.s32.totalorder %s16, 0
    %p50 = por %p48, %p49
    %p51 = scmp.ne.s32.totalorder %s40, %s43
    %p52 = scmp.eq.s32.totalorder %s21, 1
    %p53 = por %p51, %p52
    %p54 = scmp.ne.s32.totalorder %s43, %s44
    %p55 = scmp.eq.s32.totalorder %s21, 0
    %p56 = por %p54, %p55
    %p57 = scmp.ne.s32.totalorder %s43, %s44
    %p58 = scmp.eq.s32.totalorder %s22, 1
    %p59 = por %p57, %p58
    %p61 = scmp.ne.s32.totalorder %s44, %s60
    %p62 = scmp.eq.s32.totalorder %s22, 0
    %p63 = por %p61, %p62
    %s64 = ssub.s32 %s24, %s31
    %p65 = scmp.eq.s32.totalorder %s64, 0
    %s67 = sadd.s32 %s66, 1
    %s68 = scalar_select %p65, %s66, %s67
    %p71 = pneg %p65
    %p72 = scmp.eq.s32.totalorder %s16, 1
    %p73 = por %p71, %p72
    %p74 = scmp.ne.s32.totalorder %s66, %s69
    %p75 = scmp.eq.s32.totalorder %s16, 0
    %p76 = por %p74, %p75
    %p77 = scmp.ne.s32.totalorder %s66, %s69
    %p78 = scmp.eq.s32.totalorder %s21, 1
    %p79 = por %p77, %p78
    %p80 = scmp.ne.s32.totalorder %s69, %s70
    %p81 = scmp.eq.s32.totalorder %s21, 0
    %p82 = por %p80, %p81
    %p83 = scmp.ne.s32.totalorder %s69, %s70
    %p84 = scmp.eq.s32.totalorder %s22, 1
    %p85 = por %p83, %p84
    %p87 = scmp.ne.s32.totalorder %s70, %s86
    %p88 = scmp.eq.s32.totalorder %s22, 0
    %p89 = por %p87, %p88
    %s90 = ssub.s32 %s24, %s31
    %p91 = scmp.eq.s32.totalorder %s90, 0
    %s93 = sadd.s32 %s92, 1
    %s94 = scalar_select %p91, %s92, %s93
    %p97 = pneg %p91
    %p98 = scmp.eq.s32.totalorder %s16, 1
    %p99 = por %p97, %p98
    %p100 = scmp.ne.s32.totalorder %s92, %s95
    %p101 = scmp.eq.s32.totalorder %s16, 0
    %p102 = por %p100, %p101
    %p103 = scmp.ne.s32.totalorder %s92, %s95
    %p104 = scmp.eq.s32.totalorder %s21, 1
    %p105 = por %p103, %p104
    %p106 = scmp.ne.s32.totalorder %s95, %s96
    %p107 = scmp.eq.s32.totalorder %s21, 0
    %p108 = por %p106, %p107
    %p109 = scmp.ne.s32.totalorder %s95, %s96
    %p110 = scmp.eq.s32.totalorder %s22, 1
    %p111 = por %p109, %p110
    %p113 = scmp.ne.s32.totalorder %s96, %s112
    %p114 = scmp.eq.s32.totalorder %s22, 0
    %p115 = por %p113, %p114
    %s117 = sadd.s32 %s116, 1
    %p120 = scmp.eq.s32.totalorder %s16, 1
    %p121 = scmp.ne.s32.totalorder %s116, %s118
    %p122 = scmp.eq.s32.totalorder %s16, 0
    %p123 = por %p121, %p122
    %p124 = scmp.ne.s32.totalorder %s116, %s118
    %p125 = scmp.eq.s32.totalorder %s21, 1
    %p126 = por %p124, %p125
    %p127 = scmp.ne.s32.totalorder %s118, %s119
    %p128 = scmp.eq.s32.totalorder %s21, 0
    %p129 = por %p127, %p128
    %p130 = scmp.ne.s32.totalorder %s118, %s119
    %p131 = scmp.eq.s32.totalorder %s22, 1
    %p132 = por %p130, %p131
    %p134 = scmp.ne.s32.totalorder %s119, %s133
    %p135 = scmp.eq.s32.totalorder %s22, 0
    %p136 = por %p134, %p135
    %s138 = sadd.s32 %s137, 1
    %p141 = scmp.eq.s32.totalorder %s16, 1
    %p142 = scmp.ne.s32.totalorder %s137, %s139
    %p143 = scmp.eq.s32.totalorder %s16, 0
    %p144 = por %p142, %p143
    %p145 = scmp.ne.s32.totalorder %s137, %s139
    %p146 = scmp.eq.s32.totalorder %s21, 1
    %p147 = por %p145, %p146
    %p148 = scmp.ne.s32.totalorder %s139, %s140
    %p149 = scmp.eq.s32.totalorder %s21, 0
    %p150 = por %p148, %p149
    %p151 = scmp.ne.s32.totalorder %s139, %s140
    %p152 = scmp.eq.s32.totalorder %s22, 1
    %p153 = por %p151, %p152
    %p155 = scmp.ne.s32.totalorder %s140, %s154
    %p156 = scmp.eq.s32.totalorder %s22, 0
    %p157 = por %p155, %p156
    %s159 = sadd.s32 %s158, 1
    %p162 = scmp.eq.s32.totalorder %s16, 1
    %p163 = scmp.ne.s32.totalorder %s158, %s160
    %p164 = scmp.eq.s32.totalorder %s16, 0
    %p165 = por %p163, %p164
    %p166 = scmp.ne.s32.totalorder %s158, %s160
    %p167 = scmp.eq.s32.totalorder %s21, 1
    %p168 = por %p166, %p167
    %p169 = scmp.ne.s32.totalorder %s160, %s161
    %p170 = scmp.eq.s32.totalorder %s21, 0
    %p171 = por %p169, %p170
    %p172 = scmp.ne.s32.totalorder %s160, %s161
    %p173 = scmp.eq.s32.totalorder %s22, 1
    %p174 = por %p172, %p173
    %p176 = scmp.ne.s32.totalorder %s161, %s175
    %p177 = scmp.eq.s32.totalorder %s22, 0
    %p178 = por %p176, %p177
    %s180 = sadd.s32 %s179, 1
    %p183 = scmp.eq.s32.totalorder %s16, 1
    %p184 = scmp.ne.s32.totalorder %s179, %s181
    %p185 = scmp.eq.s32.totalorder %s16, 0
    %p186 = por %p184, %p185
    %p187 = scmp.ne.s32.totalorder %s179, %s181
    %p188 = scmp.eq.s32.totalorder %s21, 1
    %p189 = por %p187, %p188
    %p190 = scmp.ne.s32.totalorder %s181, %s182
    %p191 = scmp.eq.s32.totalorder %s21, 0
    %p192 = por %p190, %p191
    %p193 = scmp.ne.s32.totalorder %s181, %s182
    %p194 = scmp.eq.s32.totalorder %s22, 1
    %p195 = por %p193, %p194
    %p197 = scmp.ne.s32.totalorder %s182, %s196
    %p198 = scmp.eq.s32.totalorder %s22, 0
    %p199 = por %p197, %p198
    %s200 = ssub.s32 %s23, %s35
    %s201 = ssub.s32 %s24, %s31
    %s202 = sor.u32 %s200, %s201
    %p203 = scmp.eq.s32.totalorder %s202, 0
    %s205 = sadd.s32 %s204, 1
    %s206 = scalar_select %p203, %s204, %s205
    %p209 = pneg %p203
    %p210 = scmp.eq.s32.totalorder %s16, 1
    %p211 = por %p209, %p210
    %p212 = scmp.ne.s32.totalorder %s204, %s207
    %p213 = scmp.eq.s32.totalorder %s16, 0
    %p214 = por %p212, %p213
    %p215 = scmp.ne.s32.totalorder %s204, %s207
    %p216 = scmp.eq.s32.totalorder %s21, 1
    %p217 = por %p215, %p216
    %p218 = scmp.ne.s32.totalorder %s207, %s208
    %p219 = scmp.eq.s32.totalorder %s21, 0
    %p220 = por %p218, %p219
    %p221 = scmp.ne.s32.totalorder %s207, %s208
    %p222 = scmp.eq.s32.totalorder %s22, 1
    %p223 = por %p221, %p222
    %p225 = scmp.ne.s32.totalorder %s208, %s224
    %p226 = scmp.eq.s32.totalorder %s22, 0
    %p227 = por %p225, %p226
    %s228 = ssub.s32 %s23, %s35
    %s229 = ssub.s32 %s24, %s31
    %s230 = sor.u32 %s228, %s229
    %p231 = scmp.eq.s32.totalorder %s230, 0
    %s233 = sadd.s32 %s232, 1
    %s234 = scalar_select %p231, %s232, %s233
    %p237 = pneg %p231
    %p238 = scmp.eq.s32.totalorder %s16, 1
    %p239 = por %p237, %p238
    %p240 = scmp.ne.s32.totalorder %s232, %s235
    %p241 = scmp.eq.s32.totalorder %s16, 0
    %p242 = por %p240, %p241
    %p243 = scmp.ne.s32.totalorder %s232, %s235
    %p244 = scmp.eq.s32.totalorder %s21, 1
    %p245 = por %p243, %p244
    %p246 = scmp.ne.s32.totalorder %s235, %s236
    %p247 = scmp.eq.s32.totalorder %s21, 0
    %p248 = por %p246, %p247
    %p249 = scmp.ne.s32.totalorder %s235, %s236
    %p250 = scmp.eq.s32.totalorder %s22, 1
    %p251 = por %p249, %p250
    %p253 = scmp.ne.s32.totalorder %s236, %s252
    %p254 = scmp.eq.s32.totalorder %s22, 0
    %p255 = por %p253, %p254
    %s256 = ssub.s32 %s23, %s35
    %s257 = ssub.s32 %s24, %s31
    %s258 = sor.u32 %s256, %s257
    %p259 = scmp.eq.s32.totalorder %s258, 0
    %s261 = sadd.s32 %s260, 1
    %s262 = scalar_select %p259, %s260, %s261
    %p265 = pneg %p259
    %p266 = scmp.eq.s32.totalorder %s16, 1
    %p267 = por %p265, %p266
    %p268 = scmp.ne.s32.totalorder %s260, %s263
    %p269 = scmp.eq.s32.totalorder %s16, 0
    %p270 = por %p268, %p269
    %p271 = scmp.ne.s32.totalorder %s260, %s263
    %p272 = scmp.eq.s32.totalorder %s21, 1
    %p273 = por %p271, %p272
    %p274 = scmp.ne.s32.totalorder %s263, %s264
    %p275 = scmp.eq.s32.totalorder %s21, 0
    %p276 = por %p274, %p275
    %p277 = scmp.ne.s32.totalorder %s263, %s264
    %p278 = scmp.eq.s32.totalorder %s22, 1
    %p279 = por %p277, %p278
    %p281 = scmp.ne.s32.totalorder %s264, %s280
    %p282 = scmp.eq.s32.totalorder %s22, 0
    %p283 = por %p281, %p282
    %p284 = scmp.le.s32.totalorder 1, %s16
    %p285 = scmp.lt.s32.totalorder %s16, 3
    %p286 = pnand %p284, %p285
    %p287 = pneg %p286
    // Predicated region
    $region9: #{roformer_encoder.6} parent=5 // pred_check
      _
    $region10: #{roformer_encoder.6} parent=5 // pred_check_branch
      %289 = sbr.rel (%p286) target = $region12
    $region11: #{roformer_encoder.6} parent=5 // pred_region
      %s290 = ssub.s32 %s16, 1
      // Predicated region
      $region13: #{roformer_encoder.6} parent=11 // pred_check
        %p291 = pneg %p82
      $region14: #{roformer_encoder.6} parent=11 // pred_check_branch
        %293 = sbr.rel (%p291) target = $region16
      $region15: #{roformer_encoder.6} parent=11 // pred_region
        %p294 = scmp.lt.s32.totalorder %s26, 0
        %s295 = scalar_select %p294, %s26, 0
        %s296 = smul.addr %s295, 8
        %s297 = scalar_lea.vmem %s1, %s296
      $region16: #{roformer_encoder.6} parent=11 // pred_fallthru
        _
      // Predicated region
      $region17: #{roformer_encoder.6} parent=11 // pred_check
        %p298 = pneg %p108
      $region18: #{roformer_encoder.6} parent=11 // pred_check_branch
        %300 = sbr.rel (%p298) target = $region20
      $region19: #{roformer_encoder.6} parent=11 // pred_region
        %p301 = scmp.lt.s32.totalorder %s26, 0
        %s302 = scalar_select %p301, %s26, 0
        %s303 = smul.addr %s302, 8
        %s304 = scalar_lea.vmem %s2, %s303
      $region20: #{roformer_encoder.6} parent=11 // pred_fallthru
        _
      // Predicated region
      $region21: #{roformer_encoder.6} parent=11 // pred_check
        %p305 = pneg %p129
      $region22: #{roformer_encoder.6} parent=11 // pred_check_branch
        %307 = sbr.rel (%p305) target = $region24
      $region23: #{roformer_encoder.6} parent=11 // pred_region
        _
      $region24: #{roformer_encoder.6} parent=11 // pred_fallthru
        _
      // Predicated region
      $region25: #{roformer_encoder.6} parent=11 // pred_check
        %p308 = pneg %p150
      $region26: #{roformer_encoder.6} parent=11 // pred_check_branch
        %310 = sbr.rel (%p308) target = $region28
      $region27: #{roformer_encoder.6} parent=11 // pred_region
        _
      $region28: #{roformer_encoder.6} parent=11 // pred_fallthru
        _
      // Predicated region
      $region29: #{roformer_encoder.6} parent=11 // pred_check
        %p311 = pneg %p171
      $region30: #{roformer_encoder.6} parent=11 // pred_check_branch
        %313 = sbr.rel (%p311) target = $region32
      $region31: #{roformer_encoder.6} parent=11 // pred_region
        _
      $region32: #{roformer_encoder.6} parent=11 // pred_fallthru
        _
      // Predicated region
      $region33: #{roformer_encoder.6} parent=11 // pred_check
        %p314 = pneg %p192
      $region34: #{roformer_encoder.6} parent=11 // pred_check_branch
        %316 = sbr.rel (%p314) target = $region36
      $region35: #{roformer_encoder.6} parent=11 // pred_region
        _
      $region36: #{roformer_encoder.6} parent=11 // pred_fallthru
        _
    $region12: #{roformer_encoder.6} parent=5 // pred_fallthru
      _
    %p317 = scmp.lt.s32.totalorder %s16, 2
    // Predicated region
    $region37: #{roformer_encoder.6} parent=5 // pred_check
      %p318 = pneg %p317
    $region38: #{roformer_encoder.6} parent=5 // pred_check_branch
      %320 = sbr.rel (%p318) target = $region40
    $region39: #{roformer_encoder.6} parent=5 // pred_region
      // Predicated region
      $region41: #{roformer_encoder.6} parent=39 // pred_check
        %p321 = pneg %p50
      $region42: #{roformer_encoder.6} parent=39 // pred_check_branch
        %323 = sbr.rel (%p321) target = $region44
      $region43: #{roformer_encoder.6} parent=39 // pred_region
        %p324 = scmp.lt.s32.totalorder %s23, 1
        %s325 = scalar_select %p324, %s23, 1
        %p326 = scmp.lt.s32.totalorder %s24, 0
        %s327 = scalar_select %p326, %s24, 0
        %s328 = sadd.s32 %s327, %s325
        %s329 = smul.addr %s328, 8
        %s330 = scalar_lea.vmem %s0, %s329
      $region44: #{roformer_encoder.6} parent=39 // pred_fallthru
        _
    $region40: #{roformer_encoder.6} parent=5 // pred_fallthru
      _
    %p331 = scmp.le.s32.totalorder 1, %s16
    %p332 = scmp.lt.s32.totalorder %s16, 3
    %p333 = pnand %p331, %p332
    %p334 = pneg %p333
    // Predicated region
    $region45: #{roformer_encoder.6} parent=5 // pred_check
      _
    $region46: #{roformer_encoder.6} parent=5 // pred_check_branch
      %336 = sbr.rel (%p333) target = $region48
    $region47: #{roformer_encoder.6} parent=5 // pred_region
      %s337 = ssub.s32 %s16, 1
      %p338 = scmp.lt.s32.totalorder %s25, 1
      %s339 = scalar_select %p338, %s25, 1
      %p340 = scmp.lt.s32.totalorder %s26, 0
      %s341 = scalar_select %p340, %s26, 0
      %s342 = sadd.s32 %s341, %s339
      %s343 = smul.addr %s342, 8
      %s344 = scalar_lea.vmem %s0, %s343
      %p345 = pneg %p56
      %p346 = pneg %p53
      %p347 = scmp.lt.s32.totalorder %s26, 0
      %s348 = scalar_select %p347, %s26, 0
      %s349 = smul.addr %s348, 8
      %s350 = scalar_lea.vmem %s1, %s349
      %p351 = pneg %p82
      %p352 = pneg %p79
      %p353 = scmp.lt.s32.totalorder %s26, 0
      %s354 = scalar_select %p353, %s26, 0
      %s355 = smul.addr %s354, 8
      %s356 = scalar_lea.vmem %s2, %s355
      %p357 = pneg %p108
      %p358 = pneg %p105
      %p359 = pneg %p129
      %p360 = pneg %p126
      %p361 = pneg %p150
      %p362 = pneg %p147
      %p363 = pneg %p171
      %p364 = pneg %p168
      %p365 = pneg %p192
      %p366 = pneg %p189
      %p367 = pneg %p220
      %p368 = pneg %p217
      %p369 = scmp.lt.s32.totalorder %s25, 1
      %s370 = scalar_select %p369, %s25, 1
      %p371 = scmp.lt.s32.totalorder %s26, 0
      %s372 = scalar_select %p371, %s26, 0
      %s373 = sadd.s32 %s372, %s370
      %s374 = smul.addr %s373, 8
      %s375 = scalar_lea.vmem %s7, %s374
      %p376 = pneg %p248
      %p377 = pneg %p245
      %p378 = scmp.lt.s32.totalorder %s25, 1
      %s379 = scalar_select %p378, %s25, 1
      %p380 = scmp.lt.s32.totalorder %s26, 0
      %s381 = scalar_select %p380, %s26, 0
      %s382 = sadd.s32 %s381, %s379
      %s383 = smul.addr %s382, 8
      %s384 = scalar_lea.vmem %s8, %s383
      %p385 = pneg %p276
      %p386 = pneg %p273
      %p387 = scmp.lt.s32.totalorder %s25, 1
      %s388 = scalar_select %p387, %s25, 1
      %p389 = scmp.lt.s32.totalorder %s26, 0
      %s390 = scalar_select %p389, %s26, 0
      %s391 = sadd.s32 %s390, %s388
      %s392 = smul.addr %s391, 8
      %s393 = scalar_lea.vmem %s9, %s392
      %p394 = scmp.lt.s32.totalorder %s25, 1
      %s395 = scalar_select %p394, %s25, 1
      %p396 = scmp.lt.s32.totalorder %s26, 0
      %s397 = scalar_select %p396, %s26, 0
      %s398 = sadd.s32 %s397, %s395
      %s399 = smul.addr %s398, 8
      %s400 = scalar_lea.vmem %s0, %s399
      %p401 = scmp.lt.s32.totalorder %s26, 0
      %s402 = scalar_select %p401, %s26, 0
      %s403 = smul.addr %s402, 8
      %s404 = scalar_lea.vmem %s1, %s403
      %p405 = scmp.lt.s32.totalorder %s26, 0
      %s406 = scalar_select %p405, %s26, 0
      %s407 = smul.addr %s406, 8
      %s408 = scalar_lea.vmem %s2, %s407
      %p409 = scmp.lt.s32.totalorder %s25, 1
      %s410 = scalar_select %p409, %s25, 1
      %p411 = scmp.lt.s32.totalorder %s26, 0
      %s412 = scalar_select %p411, %s26, 0
      %s413 = sadd.s32 %s412, %s410
      %s414 = smul.addr %s413, 8
      %s415 = scalar_lea.vmem %s7, %s414
      %p416 = scmp.lt.s32.totalorder %s25, 1
      %s417 = scalar_select %p416, %s25, 1
      %p418 = scmp.lt.s32.totalorder %s26, 0
      %s419 = scalar_select %p418, %s26, 0
      %s420 = sadd.s32 %s419, %s417
      %s421 = smul.addr %s420, 8
      %s422 = scalar_lea.vmem %s8, %s421
      %p423 = scmp.lt.s32.totalorder %s25, 1
      %s424 = scalar_select %p423, %s25, 1
      %p425 = scmp.lt.s32.totalorder %s26, 0
      %s426 = scalar_select %p425, %s26, 0
      %s427 = sadd.s32 %s426, %s424
      %s428 = smul.addr %s427, 8
      %s429 = scalar_lea.vmem %s9, %s428
      %v430 = vld [vmem:[%s400] sm:$0xff]
      %432 = vrot.lane.b32.xlu0 %v430, 112
      %v433 = vpop.permute.xlu0 %432
      %435 = vrot.lane.b32.xlu0 %v430, 16
      %v436 = vpop.permute.xlu0 %435
      %vm438 = vcmask 130048
      %v439 = vsel %vm438, %v433, %v436
      %v440 = vld [vmem:[%s408] sm:$0xff]
      %v441 = vmul.f32 %v430, %v440
      %v442 = vld [vmem:[%s404] sm:$0xff]
      %v443 = vmul.f32 %v439, %v442
      %v444 = vadd.f32 %v441, %v443
      %v445 = vld [vmem:[%s6] sm:$0x7]
      %v446 = vld [vmem:[%s3] sm:$0xff]
      %v447 = vld [vmem:[%s3 + $0x8] sm:$0xff]
      %v448 = vld [vmem:[%s3 + $0x10] sm:$0xff]
      %v449 = vld [vmem:[%s3 + $0x18] sm:$0xff]
      %v450 = vlaneseq
      %v451 = vshrl.u32 %v450, 7
      %v452 = vsub.s32 0, %v451
      %v453 = vrot.slane %v445, %v452
      %vm454 = vcmask 261120
      %v456 = vsel %vm454, %v444, 0
      %458 = vmatprep.subr.mxu0 0.0
      %459 = vmatpush1.msra.mxu0 %v446
      %460 = vmatprep.subr.mxu0 0.0
      %461 = vmatpush1.msra.mxu0 %v447
      %462 = vmatprep.subr.mxu0 0.0
      %463 = vmatpush1.msra.mxu0 %v448
      %464 = vmatprep.subr.mxu0 0.0
      %465 = vmatpush1.msra.mxu0 %v449
      %466 = vmatprep.subr.mxu0 0.0
      %467 = vmatpush1.msra.mxu0 0.0
      %468 = vmatprep.subr.mxu0 0.0
      %469 = vmatpush1.msra.mxu0 0.0
      %470 = vmatprep.subr.mxu0 0.0
      %471 = vmatpush1.msra.mxu0 0.0
      %472 = vmatprep.subr.mxu0 0.0
      %473 = vmatpush1.msra.mxu0 0.0
      %474 = vmatprep.subr.mxu0 0.0
      %475 = vmatpush1.msra.mxu0 0.0
      %476 = vmatprep.subr.mxu0 0.0
      %477 = vmatpush1.msra.mxu0 0.0
      %478 = vmatprep.subr.mxu0 0.0
      %479 = vmatpush1.msra.mxu0 0.0
      %480 = vmatprep.subr.mxu0 0.0
      %481 = vmatpush1.msra.mxu0 0.0
      %482 = vmatprep.subr.mxu0 0.0
      %483 = vmatpush1.msra.mxu0 0.0
      %484 = vmatprep.subr.mxu0 0.0
      %485 = vmatpush1.msra.mxu0 0.0
      %486 = vmatprep.subr.mxu0 0.0
      %487 = vmatpush1.msra.mxu0 0.0
      %488 = vmatprep.subr.mxu0 0.0
      %489 = vmatpush1.msra.mxu0 0.0
      %490 = vmatprep.subr.mxu0 0.0
      %491 = vmatpush1.msra.mxu0 0.0
      %492 = vmatprep.subr.mxu0 0.0
      %493 = vmatpush1.msra.mxu0 0.0
      %494 = vmatprep.subr.mxu0 0.0
      %495 = vmatpush1.msra.mxu0 0.0
      %496 = vmatprep.subr.mxu0 0.0
      %497 = vmatpush1.msra.mxu0 0.0
      %498 = vmatprep.subr.mxu0 0.0
      %499 = vmatpush1.msra.mxu0 0.0
      %500 = vmatprep.subr.mxu0 0.0
      %501 = vmatpush1.msra.mxu0 0.0
      %502 = vmatprep.subr.mxu0 0.0
      %503 = vmatpush1.msra.mxu0 0.0
      %504 = vmatprep.subr.mxu0 0.0
      %505 = vmatpush1.msra.mxu0 0.0
      %506 = vmatprep.subr.mxu0 0.0
      %507 = vmatpush1.msra.mxu0 0.0
      %508 = vmatprep.subr.mxu0 0.0
      %509 = vmatpush1.msra.mxu0 0.0
      %510 = vmatprep.subr.mxu0 0.0
      %511 = vmatpush1.msra.mxu0 0.0
      %512 = vmatprep.subr.mxu0 0.0
      %513 = vmatpush1.msra.mxu0 0.0
      %514 = vmatprep.subr.mxu0 0.0
      %515 = vmatpush1.msra.mxu0 0.0
      %516 = vmatprep.subr.mxu0 0.0
      %517 = vmatpush1.msra.mxu0 0.0
      %518 = vmatprep.subr.mxu0 0.0
      %519 = vmatpush1.msra.mxu0 0.0
      %520 = vmatprep.subr.mxu0 0.0
      %521 = vmatpush1.msra.mxu0 0.0
      %522 = vmatprep.mubr.f32.mxu0 0.0
      %523 = vmatmul.mubr.f32.gmra.mrb[0].mxu0 %v456
      %v524 = vpop.f32.mrb[0].mxu0
      %v525 = vadd.f32 %v453, %v524
      %v526 = vpop.f32.mrb[0].mxu0
      %527 = vdwg.mxu0
      %528 = vst.msk [vmem:[%s415] sm:$0xff] %vm454, %v525
      %v529 = vld [vmem:[%s4] sm:$0xff]
      %v530 = vld [vmem:[%s4 + $0x8] sm:$0xff]
      %v531 = vld [vmem:[%s4 + $0x10] sm:$0xff]
      %v532 = vld [vmem:[%s4 + $0x18] sm:$0xff]
      %v533 = vlaneseq
      %v534 = vshrl.u32 %v533, 7
      %v535 = vsub.s32 1, %v534
      %v536 = vrot.slane %v445, %v535
      %537 = vmatprep.subr.mxu0 0.0
      %538 = vmatpush1.msra.mxu0 %v529
      %539 = vmatprep.subr.mxu0 0.0
      %540 = vmatpush1.msra.mxu0 %v530
      %541 = vmatprep.subr.mxu0 0.0
      %542 = vmatpush1.msra.mxu0 %v531
      %543 = vmatprep.subr.mxu0 0.0
      %544 = vmatpush1.msra.mxu0 %v532
      %545 = vmatprep.subr.mxu0 0.0
      %546 = vmatpush1.msra.mxu0 0.0
      %547 = vmatprep.subr.mxu0 0.0
      %548 = vmatpush1.msra.mxu0 0.0
      %549 = vmatprep.subr.mxu0 0.0
      %550 = vmatpush1.msra.mxu0 0.0
      %551 = vmatprep.subr.mxu0 0.0
      %552 = vmatpush1.msra.mxu0 0.0
      %553 = vmatprep.subr.mxu0 0.0
      %554 = vmatpush1.msra.mxu0 0.0
      %555 = vmatprep.subr.mxu0 0.0
      %556 = vmatpush1.msra.mxu0 0.0
      %557 = vmatprep.subr.mxu0 0.0
      %558 = vmatpush1.msra.mxu0 0.0
      %559 = vmatprep.subr.mxu0 0.0
      %560 = vmatpush1.msra.mxu0 0.0
      %561 = vmatprep.subr.mxu0 0.0
      %562 = vmatpush1.msra.mxu0 0.0
      %563 = vmatprep.subr.mxu0 0.0
      %564 = vmatpush1.msra.mxu0 0.0
      %565 = vmatprep.subr.mxu0 0.0
      %566 = vmatpush1.msra.mxu0 0.0
      %567 = vmatprep.subr.mxu0 0.0
      %568 = vmatpush1.msra.mxu0 0.0
      %569 = vmatprep.subr.mxu0 0.0
      %570 = vmatpush1.msra.mxu0 0.0
      %571 = vmatprep.subr.mxu0 0.0
      %572 = vmatpush1.msra.mxu0 0.0
      %573 = vmatprep.subr.mxu0 0.0
      %574 = vmatpush1.msra.mxu0 0.0
      %575 = vmatprep.subr.mxu0 0.0
      %576 = vmatpush1.msra.mxu0 0.0
      %577 = vmatprep.subr.mxu0 0.0
      %578 = vmatpush1.msra.mxu0 0.0
      %579 = vmatprep.subr.mxu0 0.0
      %580 = vmatpush1.msra.mxu0 0.0
      %581 = vmatprep.subr.mxu0 0.0
      %582 = vmatpush1.msra.mxu0 0.0
      %583 = vmatprep.subr.mxu0 0.0
      %584 = vmatpush1.msra.mxu0 0.0
      %585 = vmatprep.subr.mxu0 0.0
      %586 = vmatpush1.msra.mxu0 0.0
      %587 = vmatprep.subr.mxu0 0.0
      %588 = vmatpush1.msra.mxu0 0.0
      %589 = vmatprep.subr.mxu0 0.0
      %590 = vmatpush1.msra.mxu0 0.0
      %591 = vmatprep.subr.mxu0 0.0
      %592 = vmatpush1.msra.mxu0 0.0
      %593 = vmatprep.subr.mxu0 0.0
      %594 = vmatpush1.msra.mxu0 0.0
      %595 = vmatprep.subr.mxu0 0.0
      %596 = vmatpush1.msra.mxu0 0.0
      %597 = vmatprep.subr.mxu0 0.0
      %598 = vmatpush1.msra.mxu0 0.0
      %599 = vmatprep.subr.mxu0 0.0
      %600 = vmatpush1.msra.mxu0 0.0
      %601 = vmatprep.mubr.f32.mxu0 0.0
      %602 = vmatmul.mubr.f32.gmra.mrb[0].mxu0 %v456
      %v603 = vpop.f32.mrb[0].mxu0
      %v604 = vadd.f32 %v536, %v603
      %v605 = vpop.f32.mrb[0].mxu0
      %606 = vdwg.mxu0
      %607 = vst.msk [vmem:[%s422] sm:$0xff] %vm454, %v604
      %v608 = vld [vmem:[%s5] sm:$0xff]
      %v609 = vld [vmem:[%s5 + $0x8] sm:$0xff]
      %v610 = vld [vmem:[%s5 + $0x10] sm:$0xff]
      %v611 = vld [vmem:[%s5 + $0x18] sm:$0xff]
      %v612 = vlaneseq
      %v613 = vshrl.u32 %v612, 7
      %v614 = vsub.s32 2, %v613
      %v615 = vrot.slane %v445, %v614
      %v616 = vsel %vm454, %v430, 0
      %618 = vmatprep.subr.mxu0 0.0
      %619 = vmatpush1.msra.mxu0 %v608
      %620 = vmatprep.subr.mxu0 0.0
      %621 = vmatpush1.msra.mxu0 %v609
      %622 = vmatprep.subr.mxu0 0.0
      %623 = vmatpush1.msra.mxu0 %v610
      %624 = vmatprep.subr.mxu0 0.0
      %625 = vmatpush1.msra.mxu0 %v611
      %626 = vmatprep.subr.mxu0 0.0
      %627 = vmatpush1.msra.mxu0 0.0
      %628 = vmatprep.subr.mxu0 0.0
      %629 = vmatpush1.msra.mxu0 0.0
      %630 = vmatprep.subr.mxu0 0.0
      %631 = vmatpush1.msra.mxu0 0.0
      %632 = vmatprep.subr.mxu0 0.0
      %633 = vmatpush1.msra.mxu0 0.0
      %634 = vmatprep.subr.mxu0 0.0
      %635 = vmatpush1.msra.mxu0 0.0
      %636 = vmatprep.subr.mxu0 0.0
      %637 = vmatpush1.msra.mxu0 0.0
      %638 = vmatprep.subr.mxu0 0.0
      %639 = vmatpush1.msra.mxu0 0.0
      %640 = vmatprep.subr.mxu0 0.0
      %641 = vmatpush1.msra.mxu0 0.0
      %642 = vmatprep.subr.mxu0 0.0
      %643 = vmatpush1.msra.mxu0 0.0
      %644 = vmatprep.subr.mxu0 0.0
      %645 = vmatpush1.msra.mxu0 0.0
      %646 = vmatprep.subr.mxu0 0.0
      %647 = vmatpush1.msra.mxu0 0.0
      %648 = vmatprep.subr.mxu0 0.0
      %649 = vmatpush1.msra.mxu0 0.0
      %650 = vmatprep.subr.mxu0 0.0
      %651 = vmatpush1.msra.mxu0 0.0
      %652 = vmatprep.subr.mxu0 0.0
      %653 = vmatpush1.msra.mxu0 0.0
      %654 = vmatprep.subr.mxu0 0.0
      %655 = vmatpush1.msra.mxu0 0.0
      %656 = vmatprep.subr.mxu0 0.0
      %657 = vmatpush1.msra.mxu0 0.0
      %658 = vmatprep.subr.mxu0 0.0
      %659 = vmatpush1.msra.mxu0 0.0
      %660 = vmatprep.subr.mxu0 0.0
      %661 = vmatpush1.msra.mxu0 0.0
      %662 = vmatprep.subr.mxu0 0.0
      %663 = vmatpush1.msra.mxu0 0.0
      %664 = vmatprep.subr.mxu0 0.0
      %665 = vmatpush1.msra.mxu0 0.0
      %666 = vmatprep.subr.mxu0 0.0
      %667 = vmatpush1.msra.mxu0 0.0
      %668 = vmatprep.subr.mxu0 0.0
      %669 = vmatpush1.msra.mxu0 0.0
      %670 = vmatprep.subr.mxu0 0.0
      %671 = vmatpush1.msra.mxu0 0.0
      %672 = vmatprep.subr.mxu0 0.0
      %673 = vmatpush1.msra.mxu0 0.0
      %674 = vmatprep.subr.mxu0 0.0
      %675 = vmatpush1.msra.mxu0 0.0
      %676 = vmatprep.subr.mxu0 0.0
      %677 = vmatpush1.msra.mxu0 0.0
      %678 = vmatprep.subr.mxu0 0.0
      %679 = vmatpush1.msra.mxu0 0.0
      %680 = vmatprep.subr.mxu0 0.0
      %681 = vmatpush1.msra.mxu0 0.0
      %682 = vmatprep.mubr.f32.mxu0 0.0
      %683 = vmatmul.mubr.f32.gmra.mrb[0].mxu0 %v616
      %v684 = vpop.f32.mrb[0].mxu0
      %v685 = vadd.f32 %v615, %v684
      %v686 = vpop.f32.mrb[0].mxu0
      %687 = vdwg.mxu0
      %688 = vst.msk [vmem:[%s429] sm:$0xff] %vm454, %v685
      %p689 = scmp.lt.s32.totalorder %s25, 1
      %s690 = scalar_select %p689, %s25, 1
      %p691 = scmp.lt.s32.totalorder %s26, 0
      %s692 = scalar_select %p691, %s26, 0
      %s693 = sadd.s32 %s692, %s690
      %s694 = smul.addr %s693, 8
      %s695 = scalar_lea.vmem %s7, %s694
      %p696 = scmp.lt.s32.totalorder %s25, 1
      %s697 = scalar_select %p696, %s25, 1
      %p698 = scmp.lt.s32.totalorder %s26, 0
      %s699 = scalar_select %p698, %s26, 0
      %s700 = sadd.s32 %s699, %s697
      %s701 = smul.addr %s700, 8
      %s702 = scalar_lea.vmem %s8, %s701
      %p703 = scmp.lt.s32.totalorder %s25, 1
      %s704 = scalar_select %p703, %s25, 1
      %p705 = scmp.lt.s32.totalorder %s26, 0
      %s706 = scalar_select %p705, %s26, 0
      %s707 = sadd.s32 %s706, %s704
      %s708 = smul.addr %s707, 8
      %s709 = scalar_lea.vmem %s9, %s708
      // Predicated region
      $region49: #{roformer_encoder.6} parent=47 // pred_check
        %p710 = pneg %p217
      $region50: #{roformer_encoder.6} parent=47 // pred_check_branch
        %712 = sbr.rel (%p710) target = $region52
      $region51: #{roformer_encoder.6} parent=47 // pred_region
        _
      $region52: #{roformer_encoder.6} parent=47 // pred_fallthru
        _
      // Predicated region
      $region53: #{roformer_encoder.6} parent=47 // pred_check
        %p713 = pneg %p245
      $region54: #{roformer_encoder.6} parent=47 // pred_check_branch
        %715 = sbr.rel (%p713) target = $region56
      $region55: #{roformer_encoder.6} parent=47 // pred_region
        _
      $region56: #{roformer_encoder.6} parent=47 // pred_fallthru
        _
      // Predicated region
      $region57: #{roformer_encoder.6} parent=47 // pred_check
        %p716 = pneg %p273
      $region58: #{roformer_encoder.6} parent=47 // pred_check_branch
        %718 = sbr.rel (%p716) target = $region60
      $region59: #{roformer_encoder.6} parent=47 // pred_region
        _
      $region60: #{roformer_encoder.6} parent=47 // pred_fallthru
        _
    $region48: #{roformer_encoder.6} parent=5 // pred_fallthru
      _
    %p719 = scmp.le.s32.totalorder 2, %s16
    // Predicated region
    $region61: #{roformer_encoder.6} parent=5 // pred_check
      %p720 = pneg %p719
    $region62: #{roformer_encoder.6} parent=5 // pred_check_branch
      %722 = sbr.rel (%p720) target = $region64
    $region63: #{roformer_encoder.6} parent=5 // pred_region
      %s723 = ssub.s32 %s16, 2
      // Predicated region
      $region65: #{roformer_encoder.6} parent=63 // pred_check
        %p724 = pneg %p223
      $region66: #{roformer_encoder.6} parent=63 // pred_check_branch
        %726 = sbr.rel (%p724) target = $region68
      $region67: #{roformer_encoder.6} parent=63 // pred_region
        %p727 = scmp.lt.s32.totalorder %s27, 1
        %s728 = scalar_select %p727, %s27, 1
        %p729 = scmp.lt.s32.totalorder %s28, 0
        %s730 = scalar_select %p729, %s28, 0
        %s731 = sadd.s32 %s730, %s728
        %s732 = smul.addr %s731, 8
        %s733 = scalar_lea.vmem %s7, %s732
      $region68: #{roformer_encoder.6} parent=63 // pred_fallthru
        _
      // Predicated region
      $region69: #{roformer_encoder.6} parent=63 // pred_check
        %p734 = pneg %p251
      $region70: #{roformer_encoder.6} parent=63 // pred_check_branch
        %736 = sbr.rel (%p734) target = $region72
      $region71: #{roformer_encoder.6} parent=63 // pred_region
        %p737 = scmp.lt.s32.totalorder %s27, 1
        %s738 = scalar_select %p737, %s27, 1
        %p739 = scmp.lt.s32.totalorder %s28, 0
        %s740 = scalar_select %p739, %s28, 0
        %s741 = sadd.s32 %s740, %s738
        %s742 = smul.addr %s741, 8
        %s743 = scalar_lea.vmem %s8, %s742
      $region72: #{roformer_encoder.6} parent=63 // pred_fallthru
        _
      // Predicated region
      $region73: #{roformer_encoder.6} parent=63 // pred_check
        %p744 = pneg %p279
      $region74: #{roformer_encoder.6} parent=63 // pred_check_branch
        %746 = sbr.rel (%p744) target = $region76
      $region75: #{roformer_encoder.6} parent=63 // pred_region
        %p747 = scmp.lt.s32.totalorder %s27, 1
        %s748 = scalar_select %p747, %s27, 1
        %p749 = scmp.lt.s32.totalorder %s28, 0
        %s750 = scalar_select %p749, %s28, 0
        %s751 = sadd.s32 %s750, %s748
        %s752 = smul.addr %s751, 8
        %s753 = scalar_lea.vmem %s9, %s752
      $region76: #{roformer_encoder.6} parent=63 // pred_fallthru
        _
    $region64: #{roformer_encoder.6} parent=5 // pred_fallthru
      _
  $region6: #{roformer_encoder.6} parent=0 // loop_footer
    %s20 = sadd.s32 1, %s16
  $region7: #{roformer_encoder.6} parent=0 // loop_footer_branch
    %15 = sbr.rel target = $region3
  $region8: #{roformer_encoder.6} parent=0 // loop_exit
    _

// kernel: roformer_encoder.7
$region0: #{roformer_encoder.7}
  #allocation0 [shape = 'u32[]', space=smem, size = 0x4, offset = 0x4, fixed_abs, tag = 'smem constant byte address 0x4 - core index']
  #allocation1 [shape = 'u32[144,128]{1,0:T(1,128)}', space=vmem, size = 0x12000, scoped, tag = 'internal scratch']
  #allocation2 [shape = 'f32[8,1]{1,0:T(8,128)}', space=vmem, size = 0x1000, scoped, tag = 'scratch operand']
  #allocation3 [shape = 'f32[8,1]{1,0:T(8,128)}', space=vmem, size = 0x1000, scoped, tag = 'scratch operand']
  #allocation4 [shape = 'f32[8,8]{1,0:T(8,128)}', space=vmem, size = 0x1000, scoped, tag = 'scratch operand']
  %s0 = inlined_call_operand.vmem [shape: f32[8,8,8], index: 0, kind: input, shape index: {}]
  %s1 = inlined_call_operand.vmem [shape: f32[8,8,8], index: 1, kind: input, shape index: {}]
  %s2 = inlined_call_operand.vmem [shape: f32[8,8,8], index: 2, kind: input, shape index: {}]
  %s3 = inlined_call_operand.vmem [shape: f32[8,8,8], index: 3, kind: output, shape index: {}]
  %s4 = sld [smem:[#allocation0]]
  $region53: #{roformer_encoder.7} parent=0
    _
  %s6 = ssub.s32 1, %s4
  %s7 = scalar_select 0, %s6, %s4
  loop: start=0, step=1, limit=10
  $region2: #{roformer_encoder.7} parent=0 // loop_pre_header
    _
  $region3: #{roformer_encoder.7} parent=0 // loop_header
    %s9 = sphi 0, %s13
    %p10 = scmp.ge.s32.totalorder %s9, 10
    %s16 = sphi 0, %s35
    %s17 = sphi 0, %s31
    %s18 = sphi 0, %s27
    %s19 = sphi 0, %s16
    %s20 = sphi 0, %s17
    %s21 = sphi 0, %s18
    %s22 = sphi 0, %s19
    %s23 = sphi 0, %s20
    %s24 = sphi 0, %s21
    %s40 = sphi 0, %s42
    %s43 = sphi 0, %s40
    %s44 = sphi 0, %s43
    %s60 = sphi 0, %s44
    %s68 = sphi 0, %s70
    %s71 = sphi 0, %s68
    %s72 = sphi 0, %s71
    %s88 = sphi 0, %s72
    %s96 = sphi 0, %s98
    %s99 = sphi 0, %s96
    %s100 = sphi 0, %s99
    %s116 = sphi 0, %s100
    %s124 = sphi 0, %s126
    %s127 = sphi 0, %s124
    %s128 = sphi 0, %s127
    %s144 = sphi 0, %s128
  $region4: #{roformer_encoder.7} parent=0 // loop_header_branch
    %12 = sbr.rel (%p10) target = $region8
  $region5: #{roformer_encoder.7} parent=0 // loop_body
    %s14 = ssub.s32 %s9, 1
    %s15 = ssub.s32 %s9, 2
    %s25 = sadd.s32 1, %s18
    %p26 = scmp.ge.s32.totalorder %s25, 1
    %s27 = scalar_select %p26, 0, %s25
    %s28 = sadd.s32 1, %s17
    %s29 = scalar_select %p26, %s28, %s17
    %p30 = scmp.ge.s32.totalorder %s29, 1
    %s31 = scalar_select %p30, 0, %s29
    %s32 = sadd.s32 1, %s16
    %s33 = scalar_select %p30, %s32, %s16
    %p34 = scmp.ge.s32.totalorder %s33, 8
    %s35 = scalar_select %p34, 0, %s33
    %s36 = ssub.s32 %s16, %s35
    %s37 = ssub.s32 %s17, %s31
    %s38 = sor.u32 %s36, %s37
    %p39 = scmp.eq.s32.totalorder %s38, 0
    %s41 = sadd.s32 %s40, 1
    %s42 = scalar_select %p39, %s40, %s41
    %p45 = pneg %p39
    %p46 = scmp.eq.s32.totalorder %s9, 7
    %p47 = por %p45, %p46
    %p48 = scmp.ne.s32.totalorder %s40, %s43
    %p49 = scmp.eq.s32.totalorder %s9, 0
    %p50 = por %p48, %p49
    %p51 = scmp.ne.s32.totalorder %s40, %s43
    %p52 = scmp.eq.s32.totalorder %s14, 7
    %p53 = por %p51, %p52
    %p54 = scmp.ne.s32.totalorder %s43, %s44
    %p55 = scmp.eq.s32.totalorder %s14, 0
    %p56 = por %p54, %p55
    %p57 = scmp.ne.s32.totalorder %s43, %s44
    %p58 = scmp.eq.s32.totalorder %s15, 7
    %p59 = por %p57, %p58
    %p61 = scmp.ne.s32.totalorder %s44, %s60
    %p62 = scmp.eq.s32.totalorder %s15, 0
    %p63 = por %p61, %p62
    %s64 = ssub.s32 %s16, %s35
    %s65 = ssub.s32 %s18, %s27
    %s66 = sor.u32 %s64, %s65
    %p67 = scmp.eq.s32.totalorder %s66, 0
    %s69 = sadd.s32 %s68, 1
    %s70 = scalar_select %p67, %s68, %s69
    %p73 = pneg %p67
    %p74 = scmp.eq.s32.totalorder %s9, 7
    %p75 = por %p73, %p74
    %p76 = scmp.ne.s32.totalorder %s68, %s71
    %p77 = scmp.eq.s32.totalorder %s9, 0
    %p78 = por %p76, %p77
    %p79 = scmp.ne.s32.totalorder %s68, %s71
    %p80 = scmp.eq.s32.totalorder %s14, 7
    %p81 = por %p79, %p80
    %p82 = scmp.ne.s32.totalorder %s71, %s72
    %p83 = scmp.eq.s32.totalorder %s14, 0
    %p84 = por %p82, %p83
    %p85 = scmp.ne.s32.totalorder %s71, %s72
    %p86 = scmp.eq.s32.totalorder %s15, 7
    %p87 = por %p85, %p86
    %p89 = scmp.ne.s32.totalorder %s72, %s88
    %p90 = scmp.eq.s32.totalorder %s15, 0
    %p91 = por %p89, %p90
    %s92 = ssub.s32 %s16, %s35
    %s93 = ssub.s32 %s18, %s27
    %s94 = sor.u32 %s92, %s93
    %p95 = scmp.eq.s32.totalorder %s94, 0
    %s97 = sadd.s32 %s96, 1
    %s98 = scalar_select %p95, %s96, %s97
    %p101 = pneg %p95
    %p102 = scmp.eq.s32.totalorder %s9, 7
    %p103 = por %p101, %p102
    %p104 = scmp.ne.s32.totalorder %s96, %s99
    %p105 = scmp.eq.s32.totalorder %s9, 0
    %p106 = por %p104, %p105
    %p107 = scmp.ne.s32.totalorder %s96, %s99
    %p108 = scmp.eq.s32.totalorder %s14, 7
    %p109 = por %p107, %p108
    %p110 = scmp.ne.s32.totalorder %s99, %s100
    %p111 = scmp.eq.s32.totalorder %s14, 0
    %p112 = por %p110, %p111
    %p113 = scmp.ne.s32.totalorder %s99, %s100
    %p114 = scmp.eq.s32.totalorder %s15, 7
    %p115 = por %p113, %p114
    %p117 = scmp.ne.s32.totalorder %s100, %s116
    %p118 = scmp.eq.s32.totalorder %s15, 0
    %p119 = por %p117, %p118
    %s120 = ssub.s32 %s16, %s35
    %s121 = ssub.s32 %s17, %s31
    %s122 = sor.u32 %s120, %s121
    %p123 = scmp.eq.s32.totalorder %s122, 0
    %s125 = sadd.s32 %s124, 1
    %s126 = scalar_select %p123, %s124, %s125
    %p129 = pneg %p123
    %p130 = scmp.eq.s32.totalorder %s9, 7
    %p131 = por %p129, %p130
    %p132 = scmp.ne.s32.totalorder %s124, %s127
    %p133 = scmp.eq.s32.totalorder %s9, 0
    %p134 = por %p132, %p133
    %p135 = scmp.ne.s32.totalorder %s124, %s127
    %p136 = scmp.eq.s32.totalorder %s14, 7
    %p137 = por %p135, %p136
    %p138 = scmp.ne.s32.totalorder %s127, %s128
    %p139 = scmp.eq.s32.totalorder %s14, 0
    %p140 = por %p138, %p139
    %p141 = scmp.ne.s32.totalorder %s127, %s128
    %p142 = scmp.eq.s32.totalorder %s15, 7
    %p143 = por %p141, %p142
    %p145 = scmp.ne.s32.totalorder %s128, %s144
    %p146 = scmp.eq.s32.totalorder %s15, 0
    %p147 = por %p145, %p146
    %p148 = scmp.le.s32.totalorder 1, %s9
    %p149 = scmp.lt.s32.totalorder %s9, 9
    %p150 = pnand %p148, %p149
    %p151 = pneg %p150
    // Predicated region
    $region9: #{roformer_encoder.7} parent=5 // pred_check
      _
    $region10: #{roformer_encoder.7} parent=5 // pred_check_branch
      %153 = sbr.rel (%p150) target = $region12
    $region11: #{roformer_encoder.7} parent=5 // pred_region
      %s154 = ssub.s32 %s9, 1
    $region12: #{roformer_encoder.7} parent=5 // pred_fallthru
      _
    %p155 = scmp.lt.s32.totalorder %s9, 8
    // Predicated region
    $region13: #{roformer_encoder.7} parent=5 // pred_check
      %p156 = pneg %p155
    $region14: #{roformer_encoder.7} parent=5 // pred_check_branch
      %158 = sbr.rel (%p156) target = $region16
    $region15: #{roformer_encoder.7} parent=5 // pred_region
      // Predicated region
      $region17: #{roformer_encoder.7} parent=15 // pred_check
        %p159 = pneg %p50
      $region18: #{roformer_encoder.7} parent=15 // pred_check_branch
        %161 = sbr.rel (%p159) target = $region20
      $region19: #{roformer_encoder.7} parent=15 // pred_region
        %p162 = scmp.lt.s32.totalorder %s16, 7
        %s163 = scalar_select %p162, %s16, 7
        %p164 = scmp.lt.s32.totalorder %s17, 0
        %s165 = scalar_select %p164, %s17, 0
        %s166 = sadd.s32 %s165, %s163
        %s167 = smul.addr %s166, 8
        %s168 = scalar_lea.vmem %s0, %s167
      $region20: #{roformer_encoder.7} parent=15 // pred_fallthru
        _
      // Predicated region
      $region21: #{roformer_encoder.7} parent=15 // pred_check
        %p169 = pneg %p78
      $region22: #{roformer_encoder.7} parent=15 // pred_check_branch
        %171 = sbr.rel (%p169) target = $region24
      $region23: #{roformer_encoder.7} parent=15 // pred_region
        %p172 = scmp.lt.s32.totalorder %s16, 7
        %s173 = scalar_select %p172, %s16, 7
        %p174 = scmp.lt.s32.totalorder %s18, 0
        %s175 = scalar_select %p174, %s18, 0
        %s176 = sadd.s32 %s175, %s173
        %s177 = smul.addr %s176, 8
        %s178 = scalar_lea.vmem %s1, %s177
      $region24: #{roformer_encoder.7} parent=15 // pred_fallthru
        _
      // Predicated region
      $region25: #{roformer_encoder.7} parent=15 // pred_check
        %p179 = pneg %p106
      $region26: #{roformer_encoder.7} parent=15 // pred_check_branch
        %181 = sbr.rel (%p179) target = $region28
      $region27: #{roformer_encoder.7} parent=15 // pred_region
        %p182 = scmp.lt.s32.totalorder %s16, 7
        %s183 = scalar_select %p182, %s16, 7
        %p184 = scmp.lt.s32.totalorder %s18, 0
        %s185 = scalar_select %p184, %s18, 0
        %s186 = sadd.s32 %s185, %s183
        %s187 = smul.addr %s186, 8
        %s188 = scalar_lea.vmem %s2, %s187
      $region28: #{roformer_encoder.7} parent=15 // pred_fallthru
        _
    $region16: #{roformer_encoder.7} parent=5 // pred_fallthru
      _
    %p189 = scmp.le.s32.totalorder 1, %s9
    %p190 = scmp.lt.s32.totalorder %s9, 9
    %p191 = pnand %p189, %p190
    %p192 = pneg %p191
    // Predicated region
    $region29: #{roformer_encoder.7} parent=5 // pred_check
      _
    $region30: #{roformer_encoder.7} parent=5 // pred_check_branch
      %194 = sbr.rel (%p191) target = $region32
    $region31: #{roformer_encoder.7} parent=5 // pred_region
      %s195 = ssub.s32 %s9, 1
      %p196 = scmp.lt.s32.totalorder %s19, 7
      %s197 = scalar_select %p196, %s19, 7
      %p198 = scmp.lt.s32.totalorder %s20, 0
      %s199 = scalar_select %p198, %s20, 0
      %s200 = sadd.s32 %s199, %s197
      %s201 = smul.addr %s200, 8
      %s202 = scalar_lea.vmem %s0, %s201
      %p203 = pneg %p56
      %p204 = pneg %p53
      %p205 = scmp.lt.s32.totalorder %s19, 7
      %s206 = scalar_select %p205, %s19, 7
      %p207 = scmp.lt.s32.totalorder %s21, 0
      %s208 = scalar_select %p207, %s21, 0
      %s209 = sadd.s32 %s208, %s206
      %s210 = smul.addr %s209, 8
      %s211 = scalar_lea.vmem %s1, %s210
      %p212 = pneg %p84
      %p213 = pneg %p81
      %p214 = scmp.lt.s32.totalorder %s19, 7
      %s215 = scalar_select %p214, %s19, 7
      %p216 = scmp.lt.s32.totalorder %s21, 0
      %s217 = scalar_select %p216, %s21, 0
      %s218 = sadd.s32 %s217, %s215
      %s219 = smul.addr %s218, 8
      %s220 = scalar_lea.vmem %s2, %s219
      %p221 = pneg %p112
      %p222 = pneg %p109
      %p223 = pneg %p140
      %p224 = pneg %p137
      %p225 = scmp.lt.s32.totalorder %s19, 7
      %s226 = scalar_select %p225, %s19, 7
      %p227 = scmp.lt.s32.totalorder %s20, 0
      %s228 = scalar_select %p227, %s20, 0
      %s229 = sadd.s32 %s228, %s226
      %s230 = smul.addr %s229, 8
      %s231 = scalar_lea.vmem %s3, %s230
      %p232 = scmp.lt.s32.totalorder %s19, 7
      %s233 = scalar_select %p232, %s19, 7
      %p234 = scmp.lt.s32.totalorder %s20, 0
      %s235 = scalar_select %p234, %s20, 0
      %s236 = sadd.s32 %s235, %s233
      %s237 = smul.addr %s236, 8
      %s238 = scalar_lea.vmem %s0, %s237
      %p239 = scmp.lt.s32.totalorder %s19, 7
      %s240 = scalar_select %p239, %s19, 7
      %p241 = scmp.lt.s32.totalorder %s21, 0
      %s242 = scalar_select %p241, %s21, 0
      %s243 = sadd.s32 %s242, %s240
      %s244 = smul.addr %s243, 8
      %s245 = scalar_lea.vmem %s1, %s244
      %p246 = scmp.lt.s32.totalorder %s19, 7
      %s247 = scalar_select %p246, %s19, 7
      %p248 = scmp.lt.s32.totalorder %s21, 0
      %s249 = scalar_select %p248, %s21, 0
      %s250 = sadd.s32 %s249, %s247
      %s251 = smul.addr %s250, 8
      %s252 = scalar_lea.vmem %s2, %s251
      %p253 = scmp.lt.s32.totalorder %s19, 7
      %s254 = scalar_select %p253, %s19, 7
      %p255 = scmp.lt.s32.totalorder %s20, 0
      %s256 = scalar_select %p255, %s20, 0
      %s257 = sadd.s32 %s256, %s254
      %s258 = smul.addr %s257, 8
      %s259 = scalar_lea.vmem %s3, %s258
      %p260 = scmp.eq.s32.totalorder %s21, 0
      // Predicated region
      $region33: #{roformer_encoder.7} parent=31 // pred_check
        %p261 = pneg %p260
      $region34: #{roformer_encoder.7} parent=31 // pred_check_branch
        %263 = sbr.rel (%p261) target = $region36
      $region35: #{roformer_encoder.7} parent=31 // pred_region
        %vm264 = vcmask 7168
        %265 = vst.msk [vmem:[#allocation2] sm:$0xff] %vm264, -inf
        %266 = vst.msk [vmem:[#allocation3] sm:$0xff] %vm264, 0.0
        %vm267 = vcmask 64512
        %268 = vst.msk [vmem:[#allocation4] sm:$0xff] %vm267, 0.0
      $region36: #{roformer_encoder.7} parent=31 // pred_fallthru
        _
      %v269 = vld [vmem:[%s238] sm:$0xff]
      %v270 = vld [vmem:[%s245] sm:$0xff]
      %v271 = vld [vmem:[%s252] sm:$0xff]
      %vm272 = vcmask 64512
      %v274 = vsel %vm272, %v269, 0
      %v277 = vsel %vm272, %v270, 0
      %279 = vmatprep.subr.mxu0 0.0
      %280 = vmatpush1.xpose.msra.mxu0 %v277
      %281 = vmatprep.subr.mxu0 0.0
      %282 = vmatpush1.xpose.msra.mxu0 0.0
      %283 = vmatprep.subr.mxu0 0.0
      %284 = vmatpush1.xpose.msra.mxu0 0.0
      %285 = vmatprep.subr.mxu0 0.0
      %286 = vmatpush1.xpose.msra.mxu0 0.0
      %287 = vmatprep.subr.mxu0 0.0
      %288 = vmatpush1.xpose.msra.mxu0 0.0
      %289 = vmatprep.subr.mxu0 0.0
      %290 = vmatpush1.xpose.msra.mxu0 0.0
      %291 = vmatprep.subr.mxu0 0.0
      %292 = vmatpush1.xpose.msra.mxu0 0.0
      %293 = vmatprep.subr.mxu0 0.0
      %294 = vmatpush1.xpose.msra.mxu0 0.0
      %295 = vmatprep.subr.mxu0 0.0
      %296 = vmatpush1.xpose.msra.mxu0 0.0
      %297 = vmatprep.subr.mxu0 0.0
      %298 = vmatpush1.xpose.msra.mxu0 0.0
      %299 = vmatprep.subr.mxu0 0.0
      %300 = vmatpush1.xpose.msra.mxu0 0.0
      %301 = vmatprep.subr.mxu0 0.0
      %302 = vmatpush1.xpose.msra.mxu0 0.0
      %303 = vmatprep.subr.mxu0 0.0
      %304 = vmatpush1.xpose.msra.mxu0 0.0
      %305 = vmatprep.subr.mxu0 0.0
      %306 = vmatpush1.xpose.msra.mxu0 0.0
      %307 = vmatprep.subr.mxu0 0.0
      %308 = vmatpush1.xpose.msra.mxu0 0.0
      %309 = vmatprep.subr.mxu0 0.0
      %310 = vmatpush1.xpose.msra.mxu0 0.0
      %311 = vmatprep.subr.mxu0 0.0
      %312 = vmatpush1.xpose.msra.mxu0 0.0
      %313 = vmatprep.subr.mxu0 0.0
      %314 = vmatpush1.xpose.msra.mxu0 0.0
      %315 = vmatprep.subr.mxu0 0.0
      %316 = vmatpush1.xpose.msra.mxu0 0.0
      %317 = vmatprep.subr.mxu0 0.0
      %318 = vmatpush1.xpose.msra.mxu0 0.0
      %319 = vmatprep.subr.mxu0 0.0
      %320 = vmatpush1.xpose.msra.mxu0 0.0
      %321 = vmatprep.subr.mxu0 0.0
      %322 = vmatpush1.xpose.msra.mxu0 0.0
      %323 = vmatprep.subr.mxu0 0.0
      %324 = vmatpush1.xpose.msra.mxu0 0.0
      %325 = vmatprep.subr.mxu0 0.0
      %326 = vmatpush1.xpose.msra.mxu0 0.0
      %327 = vmatprep.subr.mxu0 0.0
      %328 = vmatpush1.xpose.msra.mxu0 0.0
      %329 = vmatprep.subr.mxu0 0.0
      %330 = vmatpush1.xpose.msra.mxu0 0.0
      %331 = vmatprep.subr.mxu0 0.0
      %332 = vmatpush1.xpose.msra.mxu0 0.0
      %333 = vmatprep.subr.mxu0 0.0
      %334 = vmatpush1.xpose.msra.mxu0 0.0
      %335 = vmatprep.subr.mxu0 0.0
      %336 = vmatpush1.xpose.msra.mxu0 0.0
      %337 = vmatprep.subr.mxu0 0.0
      %338 = vmatpush1.xpose.msra.mxu0 0.0
      %339 = vmatprep.subr.mxu0 0.0
      %340 = vmatpush1.xpose.msra.mxu0 0.0
      %341 = vmatprep.subr.mxu0 0.0
      %342 = vmatpush1.xpose.msra.mxu0 0.0
      %343 = vmatprep.mubr.f32.mxu0 0.0
      %344 = vmatmul.mubr.f32.gmra.mrb[0].mxu0 %v274
      %v345 = vpop.f32.mrb[0].mxu0
      %v346 = vadd.f32 0.0, %v345
      %v347 = vpop.f32.mrb[0].mxu0
      %348 = vdwg.mxu0
      %v349 = vld [vmem:[#allocation2] sm:$0xff]
      %v350 = vsel %vm272, %v346, -inf
      %351 = vmax.xlane.f32.xlu0 %v350
      %v352 = vpop.xlane.xlu0 %351
      %v353 = vmax.f32 %v349, %v352
      %v354 = vsub.f32 %v349, %v353
      %v355 = vmul.f32 %v354, 1.442695
      %v356 = vpow.pop %v355
      %358 = vset.pattern.permute.xlu0 0
      %359 = vperm.xlu0 %358, %v353
      %v360 = vpop.permute.xlu0 %359
      %v362 = vsub.f32 %v346, %v360
      %v363 = vmul.f32 %v362, 1.442695
      %v364 = vpow.pop %v363
      %v365 = vld [vmem:[#allocation3] sm:$0xff]
      %v366 = vmul.f32 %v356, %v365
      %v367 = vsel %vm272, %v364, 0.0
      %368 = vadd.xlane.f32.xlu0 %v367
      %v369 = vpop.xlane.xlu0 %368
      %v370 = vadd.f32 %v366, %v369
      %vm371 = vcmask 7168
      %372 = vst.msk [vmem:[#allocation3] sm:$0xff] %vm371, %v370
      %v373 = vld [vmem:[#allocation4] sm:$0xff]
      %375 = vset.pattern.permute.xlu0 0
      %376 = vperm.xlu0 %375, %v356
      %v377 = vpop.permute.xlu0 %376
      %v379 = vmul.f32 %v377, %v373
      %v381 = vsel %vm272, %v364, 0
      %383 = vmatprep.subr.mxu0 0.0
      %384 = vmatpush1.msra.mxu0 %v271
      %385 = vmatprep.subr.mxu0 0.0
      %386 = vmatpush1.msra.mxu0 0.0
      %387 = vmatprep.subr.mxu0 0.0
      %388 = vmatpush1.msra.mxu0 0.0
      %389 = vmatprep.subr.mxu0 0.0
      %390 = vmatpush1.msra.mxu0 0.0
      %391 = vmatprep.subr.mxu0 0.0
      %392 = vmatpush1.msra.mxu0 0.0
      %393 = vmatprep.subr.mxu0 0.0
      %394 = vmatpush1.msra.mxu0 0.0
      %395 = vmatprep.subr.mxu0 0.0
      %396 = vmatpush1.msra.mxu0 0.0
      %397 = vmatprep.subr.mxu0 0.0
      %398 = vmatpush1.msra.mxu0 0.0
      %399 = vmatprep.subr.mxu0 0.0
      %400 = vmatpush1.msra.mxu0 0.0
      %401 = vmatprep.subr.mxu0 0.0
      %402 = vmatpush1.msra.mxu0 0.0
      %403 = vmatprep.subr.mxu0 0.0
      %404 = vmatpush1.msra.mxu0 0.0
      %405 = vmatprep.subr.mxu0 0.0
      %406 = vmatpush1.msra.mxu0 0.0
      %407 = vmatprep.subr.mxu0 0.0
      %408 = vmatpush1.msra.mxu0 0.0
      %409 = vmatprep.subr.mxu0 0.0
      %410 = vmatpush1.msra.mxu0 0.0
      %411 = vmatprep.subr.mxu0 0.0
      %412 = vmatpush1.msra.mxu0 0.0
      %413 = vmatprep.subr.mxu0 0.0
      %414 = vmatpush1.msra.mxu0 0.0
      %415 = vmatprep.subr.mxu0 0.0
      %416 = vmatpush1.msra.mxu0 0.0
      %417 = vmatprep.subr.mxu0 0.0
      %418 = vmatpush1.msra.mxu0 0.0
      %419 = vmatprep.subr.mxu0 0.0
      %420 = vmatpush1.msra.mxu0 0.0
      %421 = vmatprep.subr.mxu0 0.0
      %422 = vmatpush1.msra.mxu0 0.0
      %423 = vmatprep.subr.mxu0 0.0
      %424 = vmatpush1.msra.mxu0 0.0
      %425 = vmatprep.subr.mxu0 0.0
      %426 = vmatpush1.msra.mxu0 0.0
      %427 = vmatprep.subr.mxu0 0.0
      %428 = vmatpush1.msra.mxu0 0.0
      %429 = vmatprep.subr.mxu0 0.0
      %430 = vmatpush1.msra.mxu0 0.0
      %431 = vmatprep.subr.mxu0 0.0
      %432 = vmatpush1.msra.mxu0 0.0
      %433 = vmatprep.subr.mxu0 0.0
      %434 = vmatpush1.msra.mxu0 0.0
      %435 = vmatprep.subr.mxu0 0.0
      %436 = vmatpush1.msra.mxu0 0.0
      %437 = vmatprep.subr.mxu0 0.0
      %438 = vmatpush1.msra.mxu0 0.0
      %439 = vmatprep.subr.mxu0 0.0
      %440 = vmatpush1.msra.mxu0 0.0
      %441 = vmatprep.subr.mxu0 0.0
      %442 = vmatpush1.msra.mxu0 0.0
      %443 = vmatprep.subr.mxu0 0.0
      %444 = vmatpush1.msra.mxu0 0.0
      %445 = vmatprep.subr.mxu0 0.0
      %446 = vmatpush1.msra.mxu0 0.0
      %447 = vmatprep.mubr.f32.mxu0 0.0
      %448 = vmatmul.mubr.f32.gmra.mrb[0].mxu0 %v381
      %v449 = vpop.f32.mrb[0].mxu0
      %v450 = vadd.f32 0.0, %v449
      %v451 = vpop.f32.mrb[0].mxu0
      %452 = vdwg.mxu0
      %v453 = vadd.f32 %v379, %v450
      %454 = vst.msk [vmem:[#allocation4] sm:$0xff] %vm272, %v453
      %455 = vst.msk [vmem:[#allocation2] sm:$0xff] %vm371, %v353
      // Predicated region
      $region37: #{roformer_encoder.7} parent=31 // pred_check
        %p456 = pneg %p260
      $region38: #{roformer_encoder.7} parent=31 // pred_check_branch
        %458 = sbr.rel (%p456) target = $region40
      $region39: #{roformer_encoder.7} parent=31 // pred_region
        %v459 = vld [vmem:[#allocation3] sm:$0xff]
        %v460 = vrcp.pop %v459
        %v461 = vld [vmem:[#allocation4] sm:$0xff]
        %463 = vset.pattern.permute.xlu0 0
        %464 = vperm.xlu0 %463, %v460
        %v465 = vpop.permute.xlu0 %464
        %v467 = vmul.f32 %v461, %v465
        %468 = vst.msk [vmem:[%s259] sm:$0xff] %vm272, %v467
      $region40: #{roformer_encoder.7} parent=31 // pred_fallthru
        _
      %p469 = scmp.lt.s32.totalorder %s19, 7
      %s470 = scalar_select %p469, %s19, 7
      %p471 = scmp.lt.s32.totalorder %s20, 0
      %s472 = scalar_select %p471, %s20, 0
      %s473 = sadd.s32 %s472, %s470
      %s474 = smul.addr %s473, 8
      %s475 = scalar_lea.vmem %s3, %s474
      // Predicated region
      $region41: #{roformer_encoder.7} parent=31 // pred_check
        %p476 = pneg %p137
      $region42: #{roformer_encoder.7} parent=31 // pred_check_branch
        %478 = sbr.rel (%p476) target = $region44
      $region43: #{roformer_encoder.7} parent=31 // pred_region
        _
      $region44: #{roformer_encoder.7} parent=31 // pred_fallthru
        _
    $region32: #{roformer_encoder.7} parent=5 // pred_fallthru
      _
    %p479 = scmp.le.s32.totalorder 2, %s9
    // Predicated region
    $region45: #{roformer_encoder.7} parent=5 // pred_check
      %p480 = pneg %p479
    $region46: #{roformer_encoder.7} parent=5 // pred_check_branch
      %482 = sbr.rel (%p480) target = $region48
    $region47: #{roformer_encoder.7} parent=5 // pred_region
      %s483 = ssub.s32 %s9, 2
      // Predicated region
      $region49: #{roformer_encoder.7} parent=47 // pred_check
        %p484 = pneg %p143
      $region50: #{roformer_encoder.7} parent=47 // pred_check_branch
        %486 = sbr.rel (%p484) target = $region52
      $region51: #{roformer_encoder.7} parent=47 // pred_region
        %p487 = scmp.lt.s32.totalorder %s22, 7
        %s488 = scalar_select %p487, %s22, 7
        %p489 = scmp.lt.s32.totalorder %s23, 0
        %s490 = scalar_select %p489, %s23, 0
        %s491 = sadd.s32 %s490, %s488
        %s492 = smul.addr %s491, 8
        %s493 = scalar_lea.vmem %s3, %s492
      $region52: #{roformer_encoder.7} parent=47 // pred_fallthru
        _
    $region48: #{roformer_encoder.7} parent=5 // pred_fallthru
      _
  $region6: #{roformer_encoder.7} parent=0 // loop_footer
    %s13 = sadd.s32 1, %s9
  $region7: #{roformer_encoder.7} parent=0 // loop_footer_branch
    %8 = sbr.rel target = $region3
  $region8: #{roformer_encoder.7} parent=0 // loop_exit
    _

// kernel: roformer_encoder.8
$region0: #{roformer_encoder.8}
  #allocation0 [shape = 'u32[]', space=smem, size = 0x4, offset = 0x4, fixed_abs, tag = 'smem constant byte address 0x4 - core index']
  #allocation1 [shape = 'u32[144,128]{1,0:T(1,128)}', space=vmem, size = 0x12000, scoped, tag = 'internal scratch']
  %s0 = inlined_call_operand.vmem [shape: f32[2,8,32], index: 0, kind: input, shape index: {}]
  %s1 = inlined_call_operand.vmem [shape: f32[2,8,32], index: 1, kind: input, shape index: {}]
  %s2 = inlined_call_operand.vmem [shape: f32[32,32], index: 2, kind: input, shape index: {}]
  %s3 = inlined_call_operand.vmem [shape: f32[32,64], index: 3, kind: input, shape index: {}]
  %s4 = inlined_call_operand.vmem [shape: f32[64,32], index: 4, kind: input, shape index: {}]
  %s5 = inlined_call_operand.vmem [shape: f32[1,64], index: 5, kind: input, shape index: {}]
  %s6 = inlined_call_operand.vmem [shape: f32[8,32], index: 6, kind: input, shape index: {}]
  %s7 = inlined_call_operand.vmem [shape: f32[2,8,32], index: 7, kind: output, shape index: {}]
  %s8 = sld [smem:[#allocation0]]
  $region61: #{roformer_encoder.8} parent=0
    _
  %s10 = ssub.s32 1, %s8
  %s11 = scalar_select 0, %s10, %s8
  loop: start=0, step=1, limit=4
  $region2: #{roformer_encoder.8} parent=0 // loop_pre_header
    _
  $region3: #{roformer_encoder.8} parent=0 // loop_header
    %s13 = sphi 0, %s17
    %p14 = scmp.ge.s32.totalorder %s13, 4
    %s20 = sphi 0, %s32
    %s21 = sphi 0, %s28
    %s22 = sphi 0, %s20
    %s23 = sphi 0, %s21
    %s24 = sphi 0, %s22
    %s25 = sphi 0, %s23
    %s37 = sphi 0, %s39
    %s40 = sphi 0, %s37
    %s41 = sphi 0, %s40
    %s57 = sphi 0, %s41
    %s65 = sphi 0, %s67
    %s68 = sphi 0, %s65
    %s69 = sphi 0, %s68
    %s85 = sphi 0, %s69
    %s89 = sphi 0, %s89
    %s91 = sphi 0, %s89
    %s92 = sphi 0, %s91
    %s106 = sphi 0, %s92
    %s110 = sphi 0, %s110
    %s112 = sphi 0, %s110
    %s113 = sphi 0, %s112
    %s127 = sphi 0, %s113
    %s131 = sphi 0, %s131
    %s133 = sphi 0, %s131
    %s134 = sphi 0, %s133
    %s148 = sphi 0, %s134
    %s152 = sphi 0, %s152
    %s154 = sphi 0, %s152
    %s155 = sphi 0, %s154
    %s169 = sphi 0, %s155
    %s173 = sphi 0, %s173
    %s175 = sphi 0, %s173
    %s176 = sphi 0, %s175
    %s190 = sphi 0, %s176
    %s198 = sphi 0, %s200
    %s201 = sphi 0, %s198
    %s202 = sphi 0, %s201
    %s218 = sphi 0, %s202
  $region4: #{roformer_encoder.8} parent=0 // loop_header_branch
    %16 = sbr.rel (%p14) target = $region8
  $region5: #{roformer_encoder.8} parent=0 // loop_body
    %s18 = ssub.s32 %s13, 1
    %s19 = ssub.s32 %s13, 2
    %s26 = sadd.s32 1, %s21
    %p27 = scmp.ge.s32.totalorder %s26, 1
    %s28 = scalar_select %p27, 0, %s26
    %s29 = sadd.s32 1, %s20
    %s30 = scalar_select %p27, %s29, %s20
    %p31 = scmp.ge.s32.totalorder %s30, 2
    %s32 = scalar_select %p31, 0, %s30
    %s33 = ssub.s32 %s20, %s32
    %s34 = ssub.s32 %s21, %s28
    %s35 = sor.u32 %s33, %s34
    %p36 = scmp.eq.s32.totalorder %s35, 0
    %s38 = sadd.s32 %s37, 1
    %s39 = scalar_select %p36, %s37, %s38
    %p42 = pneg %p36
    %p43 = scmp.eq.s32.totalorder %s13, 1
    %p44 = por %p42, %p43
    %p45 = scmp.ne.s32.totalorder %s37, %s40
    %p46 = scmp.eq.s32.totalorder %s13, 0
    %p47 = por %p45, %p46
    %p48 = scmp.ne.s32.totalorder %s37, %s40
    %p49 = scmp.eq.s32.totalorder %s18, 1
    %p50 = por %p48, %p49
    %p51 = scmp.ne.s32.totalorder %s40, %s41
    %p52 = scmp.eq.s32.totalorder %s18, 0
    %p53 = por %p51, %p52
    %p54 = scmp.ne.s32.totalorder %s40, %s41
    %p55 = scmp.eq.s32.totalorder %s19, 1
    %p56 = por %p54, %p55
    %p58 = scmp.ne.s32.totalorder %s41, %s57
    %p59 = scmp.eq.s32.totalorder %s19, 0
    %p60 = por %p58, %p59
    %s61 = ssub.s32 %s20, %s32
    %s62 = ssub.s32 %s21, %s28
    %s63 = sor.u32 %s61, %s62
    %p64 = scmp.eq.s32.totalorder %s63, 0
    %s66 = sadd.s32 %s65, 1
    %s67 = scalar_select %p64, %s65, %s66
    %p70 = pneg %p64
    %p71 = scmp.eq.s32.totalorder %s13, 1
    %p72 = por %p70, %p71
    %p73 = scmp.ne.s32.totalorder %s65, %s68
    %p74 = scmp.eq.s32.totalorder %s13, 0
    %p75 = por %p73, %p74
    %p76 = scmp.ne.s32.totalorder %s65, %s68
    %p77 = scmp.eq.s32.totalorder %s18, 1
    %p78 = por %p76, %p77
    %p79 = scmp.ne.s32.totalorder %s68, %s69
    %p80 = scmp.eq.s32.totalorder %s18, 0
    %p81 = por %p79, %p80
    %p82 = scmp.ne.s32.totalorder %s68, %s69
    %p83 = scmp.eq.s32.totalorder %s19, 1
    %p84 = por %p82, %p83
    %p86 = scmp.ne.s32.totalorder %s69, %s85
    %p87 = scmp.eq.s32.totalorder %s19, 0
    %p88 = por %p86, %p87
    %s90 = sadd.s32 %s89, 1
    %p93 = scmp.eq.s32.totalorder %s13, 1
    %p94 = scmp.ne.s32.totalorder %s89, %s91
    %p95 = scmp.eq.s32.totalorder %s13, 0
    %p96 = por %p94, %p95
    %p97 = scmp.ne.s32.totalorder %s89, %s91
    %p98 = scmp.eq.s32.totalorder %s18, 1
    %p99 = por %p97, %p98
    %p100 = scmp.ne.s32.totalorder %s91, %s92
    %p101 = scmp.eq.s32.totalorder %s18, 0
    %p102 = por %p100, %p101
    %p103 = scmp.ne.s32.totalorder %s91, %s92
    %p104 = scmp.eq.s32.totalorder %s19, 1
    %p105 = por %p103, %p104
    %p107 = scmp.ne.s32.totalorder %s92, %s106
    %p108 = scmp.eq.s32.totalorder %s19, 0
    %p109 = por %p107, %p108
    %s111 = sadd.s32 %s110, 1
    %p114 = scmp.eq.s32.totalorder %s13, 1
    %p115 = scmp.ne.s32.totalorder %s110, %s112
    %p116 = scmp.eq.s32.totalorder %s13, 0
    %p117 = por %p115, %p116
    %p118 = scmp.ne.s32.totalorder %s110, %s112
    %p119 = scmp.eq.s32.totalorder %s18, 1
    %p120 = por %p118, %p119
    %p121 = scmp.ne.s32.totalorder %s112, %s113
    %p122 = scmp.eq.s32.totalorder %s18, 0
    %p123 = por %p121, %p122
    %p124 = scmp.ne.s32.totalorder %s112, %s113
    %p125 = scmp.eq.s32.totalorder %s19, 1
    %p126 = por %p124, %p125
    %p128 = scmp.ne.s32.totalorder %s113, %s127
    %p129 = scmp.eq.s32.totalorder %s19, 0
    %p130 = por %p128, %p129
    %s132 = sadd.s32 %s131, 1
    %p135 = scmp.eq.s32.totalorder %s13, 1
    %p136 = scmp.ne.s32.totalorder %s131, %s133
    %p137 = scmp.eq.s32.totalorder %s13, 0
    %p138 = por %p136, %p137
    %p139 = scmp.ne.s32.totalorder %s131, %s133
    %p140 = scmp.eq.s32.totalorder %s18, 1
    %p141 = por %p139, %p140
    %p142 = scmp.ne.s32.totalorder %s133, %s134
    %p143 = scmp.eq.s32.totalorder %s18, 0
    %p144 = por %p142, %p143
    %p145 = scmp.ne.s32.totalorder %s133, %s134
    %p146 = scmp.eq.s32.totalorder %s19, 1
    %p147 = por %p145, %p146
    %p149 = scmp.ne.s32.totalorder %s134, %s148
    %p150 = scmp.eq.s32.totalorder %s19, 0
    %p151 = por %p149, %p150
    %s153 = sadd.s32 %s152, 1
    %p156 = scmp.eq.s32.totalorder %s13, 1
    %p157 = scmp.ne.s32.totalorder %s152, %s154
    %p158 = scmp.eq.s32.totalorder %s13, 0
    %p159 = por %p157, %p158
    %p160 = scmp.ne.s32.totalorder %s152, %s154
    %p161 = scmp.eq.s32.totalorder %s18, 1
    %p162 = por %p160, %p161
    %p163 = scmp.ne.s32.totalorder %s154, %s155
    %p164 = scmp.eq.s32.totalorder %s18, 0
    %p165 = por %p163, %p164
    %p166 = scmp.ne.s32.totalorder %s154, %s155
    %p167 = scmp.eq.s32.totalorder %s19, 1
    %p168 = por %p166, %p167
    %p170 = scmp.ne.s32.totalorder %s155, %s169
    %p171 = scmp.eq.s32.totalorder %s19, 0
    %p172 = por %p170, %p171
    %s174 = sadd.s32 %s173, 1
    %p177 = scmp.eq.s32.totalorder %s13, 1
    %p178 = scmp.ne.s32.totalorder %s173, %s175
    %p179 = scmp.eq.s32.totalorder %s13, 0
    %p180 = por %p178, %p179
    %p181 = scmp.ne.s32.totalorder %s173, %s175
    %p182 = scmp.eq.s32.totalorder %s18, 1
    %p183 = por %p181, %p182
    %p184 = scmp.ne.s32.totalorder %s175, %s176
    %p185 = scmp.eq.s32.totalorder %s18, 0
    %p186 = por %p184, %p185
    %p187 = scmp.ne.s32.totalorder %s175, %s176
    %p188 = scmp.eq.s32.totalorder %s19, 1
    %p189 = por %p187, %p188
    %p191 = scmp.ne.s32.totalorder %s176, %s190
    %p192 = scmp.eq.s32.totalorder %s19, 0
    %p193 = por %p191, %p192
    %s194 = ssub.s32 %s20, %s32
    %s195 = ssub.s32 %s21, %s28
    %s196 = sor.u32 %s194, %s195
    %p197 = scmp.eq.s32.totalorder %s196, 0
    %s199 = sadd.s32 %s198, 1
    %s200 = scalar_select %p197, %s198, %s199
    %p203 = pneg %p197
    %p204 = scmp.eq.s32.totalorder %s13, 1
    %p205 = por %p203, %p204
    %p206 = scmp.ne.s32.totalorder %s198, %s201
    %p207 = scmp.eq.s32.totalorder %s13, 0
    %p208 = por %p206, %p207
    %p209 = scmp.ne.s32.totalorder %s198, %s201
    %p210 = scmp.eq.s32.totalorder %s18, 1
    %p211 = por %p209, %p210
    %p212 = scmp.ne.s32.totalorder %s201, %s202
    %p213 = scmp.eq.s32.totalorder %s18, 0
    %p214 = por %p212, %p213
    %p215 = scmp.ne.s32.totalorder %s201, %s202
    %p216 = scmp.eq.s32.totalorder %s19, 1
    %p217 = por %p215, %p216
    %p219 = scmp.ne.s32.totalorder %s202, %s218
    %p220 = scmp.eq.s32.totalorder %s19, 0
    %p221 = por %p219, %p220
    %p222 = scmp.le.s32.totalorder 1, %s13
    %p223 = scmp.lt.s32.totalorder %s13, 3
    %p224 = pnand %p222, %p223
    %p225 = pneg %p224
    // Predicated region
    $region9: #{roformer_encoder.8} parent=5 // pred_check
      _
    $region10: #{roformer_encoder.8} parent=5 // pred_check_branch
      %227 = sbr.rel (%p224) target = $region12
    $region11: #{roformer_encoder.8} parent=5 // pred_region
      %s228 = ssub.s32 %s13, 1
      // Predicated region
      $region13: #{roformer_encoder.8} parent=11 // pred_check
        %p229 = pneg %p102
      $region14: #{roformer_encoder.8} parent=11 // pred_check_branch
        %231 = sbr.rel (%p229) target = $region16
      $region15: #{roformer_encoder.8} parent=11 // pred_region
        _
      $region16: #{roformer_encoder.8} parent=11 // pred_fallthru
        _
      // Predicated region
      $region17: #{roformer_encoder.8} parent=11 // pred_check
        %p232 = pneg %p123
      $region18: #{roformer_encoder.8} parent=11 // pred_check_branch
        %234 = sbr.rel (%p232) target = $region20
      $region19: #{roformer_encoder.8} parent=11 // pred_region
        _
      $region20: #{roformer_encoder.8} parent=11 // pred_fallthru
        _
      // Predicated region
      $region21: #{roformer_encoder.8} parent=11 // pred_check
        %p235 = pneg %p144
      $region22: #{roformer_encoder.8} parent=11 // pred_check_branch
        %237 = sbr.rel (%p235) target = $region24
      $region23: #{roformer_encoder.8} parent=11 // pred_region
        _
      $region24: #{roformer_encoder.8} parent=11 // pred_fallthru
        _
      // Predicated region
      $region25: #{roformer_encoder.8} parent=11 // pred_check
        %p238 = pneg %p165
      $region26: #{roformer_encoder.8} parent=11 // pred_check_branch
        %240 = sbr.rel (%p238) target = $region28
      $region27: #{roformer_encoder.8} parent=11 // pred_region
        _
      $region28: #{roformer_encoder.8} parent=11 // pred_fallthru
        _
      // Predicated region
      $region29: #{roformer_encoder.8} parent=11 // pred_check
        %p241 = pneg %p186
      $region30: #{roformer_encoder.8} parent=11 // pred_check_branch
        %243 = sbr.rel (%p241) target = $region32
      $region31: #{roformer_encoder.8} parent=11 // pred_region
        _
      $region32: #{roformer_encoder.8} parent=11 // pred_fallthru
        _
    $region12: #{roformer_encoder.8} parent=5 // pred_fallthru
      _
    %p244 = scmp.lt.s32.totalorder %s13, 2
    // Predicated region
    $region33: #{roformer_encoder.8} parent=5 // pred_check
      %p245 = pneg %p244
    $region34: #{roformer_encoder.8} parent=5 // pred_check_branch
      %247 = sbr.rel (%p245) target = $region36
    $region35: #{roformer_encoder.8} parent=5 // pred_region
      // Predicated region
      $region37: #{roformer_encoder.8} parent=35 // pred_check
        %p248 = pneg %p47
      $region38: #{roformer_encoder.8} parent=35 // pred_check_branch
        %250 = sbr.rel (%p248) target = $region40
      $region39: #{roformer_encoder.8} parent=35 // pred_region
        %p251 = scmp.lt.s32.totalorder %s20, 1
        %s252 = scalar_select %p251, %s20, 1
        %p253 = scmp.lt.s32.totalorder %s21, 0
        %s254 = scalar_select %p253, %s21, 0
        %s255 = sadd.s32 %s254, %s252
        %s256 = smul.addr %s255, 8
        %s257 = scalar_lea.vmem %s0, %s256
      $region40: #{roformer_encoder.8} parent=35 // pred_fallthru
        _
      // Predicated region
      $region41: #{roformer_encoder.8} parent=35 // pred_check
        %p258 = pneg %p75
      $region42: #{roformer_encoder.8} parent=35 // pred_check_branch
        %260 = sbr.rel (%p258) target = $region44
      $region43: #{roformer_encoder.8} parent=35 // pred_region
        %p261 = scmp.lt.s32.totalorder %s20, 1
        %s262 = scalar_select %p261, %s20, 1
        %p263 = scmp.lt.s32.totalorder %s21, 0
        %s264 = scalar_select %p263, %s21, 0
        %s265 = sadd.s32 %s264, %s262
        %s266 = smul.addr %s265, 8
        %s267 = scalar_lea.vmem %s1, %s266
      $region44: #{roformer_encoder.8} parent=35 // pred_fallthru
        _
    $region36: #{roformer_encoder.8} parent=5 // pred_fallthru
      _
    %p268 = scmp.le.s32.totalorder 1, %s13
    %p269 = scmp.lt.s32.totalorder %s13, 3
    %p270 = pnand %p268, %p269
    %p271 = pneg %p270
    // Predicated region
    $region45: #{roformer_encoder.8} parent=5 // pred_check
      _
    $region46: #{roformer_encoder.8} parent=5 // pred_check_branch
      %273 = sbr.rel (%p270) target = $region48
    $region47: #{roformer_encoder.8} parent=5 // pred_region
      %s274 = ssub.s32 %s13, 1
      %p275 = scmp.lt.s32.totalorder %s22, 1
      %s276 = scalar_select %p275, %s22, 1
      %p277 = scmp.lt.s32.totalorder %s23, 0
      %s278 = scalar_select %p277, %s23, 0
      %s279 = sadd.s32 %s278, %s276
      %s280 = smul.addr %s279, 8
      %s281 = scalar_lea.vmem %s0, %s280
      %p282 = pneg %p53
      %p283 = pneg %p50
      %p284 = scmp.lt.s32.totalorder %s22, 1
      %s285 = scalar_select %p284, %s22, 1
      %p286 = scmp.lt.s32.totalorder %s23, 0
      %s287 = scalar_select %p286, %s23, 0
      %s288 = sadd.s32 %s287, %s285
      %s289 = smul.addr %s288, 8
      %s290 = scalar_lea.vmem %s1, %s289
      %p291 = pneg %p81
      %p292 = pneg %p78
      %p293 = pneg %p102
      %p294 = pneg %p99
      %p295 = pneg %p123
      %p296 = pneg %p120
      %p297 = pneg %p144
      %p298 = pneg %p141
      %p299 = pneg %p165
      %p300 = pneg %p162
      %p301 = pneg %p186
      %p302 = pneg %p183
      %p303 = pneg %p214
      %p304 = pneg %p211
      %p305 = scmp.lt.s32.totalorder %s22, 1
      %s306 = scalar_select %p305, %s22, 1
      %p307 = scmp.lt.s32.totalorder %s23, 0
      %s308 = scalar_select %p307, %s23, 0
      %s309 = sadd.s32 %s308, %s306
      %s310 = smul.addr %s309, 8
      %s311 = scalar_lea.vmem %s7, %s310
      %p312 = scmp.lt.s32.totalorder %s22, 1
      %s313 = scalar_select %p312, %s22, 1
      %p314 = scmp.lt.s32.totalorder %s23, 0
      %s315 = scalar_select %p314, %s23, 0
      %s316 = sadd.s32 %s315, %s313
      %s317 = smul.addr %s316, 8
      %s318 = scalar_lea.vmem %s0, %s317
      %p319 = scmp.lt.s32.totalorder %s22, 1
      %s320 = scalar_select %p319, %s22, 1
      %p321 = scmp.lt.s32.totalorder %s23, 0
      %s322 = scalar_select %p321, %s23, 0
      %s323 = sadd.s32 %s322, %s320
      %s324 = smul.addr %s323, 8
      %s325 = scalar_lea.vmem %s1, %s324
      %p326 = scmp.lt.s32.totalorder %s22, 1
      %s327 = scalar_select %p326, %s22, 1
      %p328 = scmp.lt.s32.totalorder %s23, 0
      %s329 = scalar_select %p328, %s23, 0
      %s330 = sadd.s32 %s329, %s327
      %s331 = smul.addr %s330, 8
      %s332 = scalar_lea.vmem %s7, %s331
      %v333 = vld [vmem:[%s318] sm:$0xff]
      %v334 = vld [vmem:[%s325] sm:$0xff]
      %v335 = vld [vmem:[%s6] sm:$0xff]
      %v336 = vld [vmem:[%s2] sm:$0xff]
      %v337 = vld [vmem:[%s2 + $0x8] sm:$0xff]
      %v338 = vld [vmem:[%s2 + $0x10] sm:$0xff]
      %v339 = vld [vmem:[%s2 + $0x18] sm:$0xff]
      %v340 = vlaneseq
      %v341 = vshrl.u32 %v340, 7
      %v342 = vsub.s32 0, %v341
      %v343 = vrot.slane %v335, %v342
      %vm344 = vcmask 261120
      %v346 = vsel %vm344, %v334, 0
      %348 = vmatprep.subr.mxu0 0.0
      %349 = vmatpush1.msra.mxu0 %v336
      %350 = vmatprep.subr.mxu0 0.0
      %351 = vmatpush1.msra.mxu0 %v337
      %352 = vmatprep.subr.mxu0 0.0
      %353 = vmatpush1.msra.mxu0 %v338
      %354 = vmatprep.subr.mxu0 0.0
      %355 = vmatpush1.msra.mxu0 %v339
      %356 = vmatprep.subr.mxu0 0.0
      %357 = vmatpush1.msra.mxu0 0.0
      %358 = vmatprep.subr.mxu0 0.0
      %359 = vmatpush1.msra.mxu0 0.0
      %360 = vmatprep.subr.mxu0 0.0
      %361 = vmatpush1.msra.mxu0 0.0
      %362 = vmatprep.subr.mxu0 0.0
      %363 = vmatpush1.msra.mxu0 0.0
      %364 = vmatprep.subr.mxu0 0.0
      %365 = vmatpush1.msra.mxu0 0.0
      %366 = vmatprep.subr.mxu0 0.0
      %367 = vmatpush1.msra.mxu0 0.0
      %368 = vmatprep.subr.mxu0 0.0
      %369 = vmatpush1.msra.mxu0 0.0
      %370 = vmatprep.subr.mxu0 0.0
      %371 = vmatpush1.msra.mxu0 0.0
      %372 = vmatprep.subr.mxu0 0.0
      %373 = vmatpush1.msra.mxu0 0.0
      %374 = vmatprep.subr.mxu0 0.0
      %375 = vmatpush1.msra.mxu0 0.0
      %376 = vmatprep.subr.mxu0 0.0
      %377 = vmatpush1.msra.mxu0 0.0
      %378 = vmatprep.subr.mxu0 0.0
      %379 = vmatpush1.msra.mxu0 0.0
      %380 = vmatprep.subr.mxu0 0.0
      %381 = vmatpush1.msra.mxu0 0.0
      %382 = vmatprep.subr.mxu0 0.0
      %383 = vmatpush1.msra.mxu0 0.0
      %384 = vmatprep.subr.mxu0 0.0
      %385 = vmatpush1.msra.mxu0 0.0
      %386 = vmatprep.subr.mxu0 0.0
      %387 = vmatpush1.msra.mxu0 0.0
      %388 = vmatprep.subr.mxu0 0.0
      %389 = vmatpush1.msra.mxu0 0.0
      %390 = vmatprep.subr.mxu0 0.0
      %391 = vmatpush1.msra.mxu0 0.0
      %392 = vmatprep.subr.mxu0 0.0
      %393 = vmatpush1.msra.mxu0 0.0
      %394 = vmatprep.subr.mxu0 0.0
      %395 = vmatpush1.msra.mxu0 0.0
      %396 = vmatprep.subr.mxu0 0.0
      %397 = vmatpush1.msra.mxu0 0.0
      %398 = vmatprep.subr.mxu0 0.0
      %399 = vmatpush1.msra.mxu0 0.0
      %400 = vmatprep.subr.mxu0 0.0
      %401 = vmatpush1.msra.mxu0 0.0
      %402 = vmatprep.subr.mxu0 0.0
      %403 = vmatpush1.msra.mxu0 0.0
      %404 = vmatprep.subr.mxu0 0.0
      %405 = vmatpush1.msra.mxu0 0.0
      %406 = vmatprep.subr.mxu0 0.0
      %407 = vmatpush1.msra.mxu0 0.0
      %408 = vmatprep.subr.mxu0 0.0
      %409 = vmatpush1.msra.mxu0 0.0
      %410 = vmatprep.subr.mxu0 0.0
      %411 = vmatpush1.msra.mxu0 0.0
      %412 = vmatprep.mubr.f32.mxu0 0.0
      %413 = vmatmul.mubr.f32.gmra.mrb[0].mxu0 %v346
      %v414 = vpop.f32.mrb[0].mxu0
      %v415 = vadd.f32 %v343, %v414
      %v416 = vpop.f32.mrb[0].mxu0
      %417 = vdwg.mxu0
      %v418 = vadd.f32 %v333, %v415
      %v419 = vsel %vm344, %v418, 0.0
      %420 = vadd.xlane.f32.xlu0 %v419
      %v421 = vpop.xlane.xlu0 %420
      %v422 = vrcp.pop 32.0
      %v423 = vmul.f32 %v421, %v422
      %v424 = vsub.f32 %v418, %v423
      %v425 = vmul.f32 %v424, %v424
      %v426 = vsel %vm344, %v425, 0.0
      %427 = vadd.xlane.f32.xlu0 %v426
      %v428 = vpop.xlane.xlu0 %427
      %v429 = vmul.f32 %v428, %v422
      %v430 = vadd.f32 %v429, 1e-05
      %v431 = vrsqrt.pop %v430
      %v432 = vmul.f32 %v424, %v431
      %v433 = vlaneseq
      %v434 = vshrl.u32 %v433, 7
      %v435 = vsub.s32 2, %v434
      %v436 = vrot.slane %v335, %v435
      %v437 = vmul.f32 %v432, %v436
      %v438 = vlaneseq
      %v439 = vshrl.u32 %v438, 7
      %v440 = vsub.s32 3, %v439
      %v441 = vrot.slane %v335, %v440
      %v442 = vadd.f32 %v437, %v441
      %v443 = vld [vmem:[%s3] sm:$0xff]
      %v444 = vld [vmem:[%s3 + $0x8] sm:$0xff]
      %v445 = vld [vmem:[%s3 + $0x10] sm:$0xff]
      %v446 = vld [vmem:[%s3 + $0x18] sm:$0xff]
      %v447 = vld [vmem:[%s5] sm:$0x1]
      %v449 = vlaneseq
      %v450 = vshrl.u32 %v449, 7
      %v451 = vsub.s32 0, %v450
      %v452 = vrot.slane %v447, %v451
      %v455 = vsel %vm344, %v442, 0
      %457 = vmatprep.subr.mxu0 0.0
      %458 = vmatpush1.msra.mxu0 %v443
      %459 = vmatprep.subr.mxu0 0.0
      %460 = vmatpush1.msra.mxu0 %v444
      %461 = vmatprep.subr.mxu0 0.0
      %462 = vmatpush1.msra.mxu0 %v445
      %463 = vmatprep.subr.mxu0 0.0
      %464 = vmatpush1.msra.mxu0 %v446
      %465 = vmatprep.subr.mxu0 0.0
      %466 = vmatpush1.msra.mxu0 0.0
      %467 = vmatprep.subr.mxu0 0.0
      %468 = vmatpush1.msra.mxu0 0.0
      %469 = vmatprep.subr.mxu0 0.0
      %470 = vmatpush1.msra.mxu0 0.0
      %471 = vmatprep.subr.mxu0 0.0
      %472 = vmatpush1.msra.mxu0 0.0
      %473 = vmatprep.subr.mxu0 0.0
      %474 = vmatpush1.msra.mxu0 0.0
      %475 = vmatprep.subr.mxu0 0.0
      %476 = vmatpush1.msra.mxu0 0.0
      %477 = vmatprep.subr.mxu0 0.0
      %478 = vmatpush1.msra.mxu0 0.0
      %479 = vmatprep.subr.mxu0 0.0
      %480 = vmatpush1.msra.mxu0 0.0
      %481 = vmatprep.subr.mxu0 0.0
      %482 = vmatpush1.msra.mxu0 0.0
      %483 = vmatprep.subr.mxu0 0.0
      %484 = vmatpush1.msra.mxu0 0.0
      %485 = vmatprep.subr.mxu0 0.0
      %486 = vmatpush1.msra.mxu0 0.0
      %487 = vmatprep.subr.mxu0 0.0
      %488 = vmatpush1.msra.mxu0 0.0
      %489 = vmatprep.subr.mxu0 0.0
      %490 = vmatpush1.msra.mxu0 0.0
      %491 = vmatprep.subr.mxu0 0.0
      %492 = vmatpush1.msra.mxu0 0.0
      %493 = vmatprep.subr.mxu0 0.0
      %494 = vmatpush1.msra.mxu0 0.0
      %495 = vmatprep.subr.mxu0 0.0
      %496 = vmatpush1.msra.mxu0 0.0
      %497 = vmatprep.subr.mxu0 0.0
      %498 = vmatpush1.msra.mxu0 0.0
      %499 = vmatprep.subr.mxu0 0.0
      %500 = vmatpush1.msra.mxu0 0.0
      %501 = vmatprep.subr.mxu0 0.0
      %502 = vmatpush1.msra.mxu0 0.0
      %503 = vmatprep.subr.mxu0 0.0
      %504 = vmatpush1.msra.mxu0 0.0
      %505 = vmatprep.subr.mxu0 0.0
      %506 = vmatpush1.msra.mxu0 0.0
      %507 = vmatprep.subr.mxu0 0.0
      %508 = vmatpush1.msra.mxu0 0.0
      %509 = vmatprep.subr.mxu0 0.0
      %510 = vmatpush1.msra.mxu0 0.0
      %511 = vmatprep.subr.mxu0 0.0
      %512 = vmatpush1.msra.mxu0 0.0
      %513 = vmatprep.subr.mxu0 0.0
      %514 = vmatpush1.msra.mxu0 0.0
      %515 = vmatprep.subr.mxu0 0.0
      %516 = vmatpush1.msra.mxu0 0.0
      %517 = vmatprep.subr.mxu0 0.0
      %518 = vmatpush1.msra.mxu0 0.0
      %519 = vmatprep.subr.mxu0 0.0
      %520 = vmatpush1.msra.mxu0 0.0
      %521 = vmatprep.mubr.f32.mxu0 0.0
      %522 = vmatmul.mubr.f32.gmra.mrb[0].mxu0 %v455
      %v523 = vpop.f32.mrb[0].mxu0
      %v524 = vadd.f32 %v452, %v523
      %v525 = vpop.f32.mrb[0].mxu0
      %526 = vdwg.mxu0
      %v527 = vmax.f32 %v524, 0.0
      %v528 = vld [vmem:[%s4] sm:$0xff]
      %v529 = vld [vmem:[%s4 + $0x8] sm:$0xff]
      %v530 = vld [vmem:[%s4 + $0x10] sm:$0xff]
      %v531 = vld [vmem:[%s4 + $0x18] sm:$0xff]
      %v532 = vld [vmem:[%s4 + $0x20] sm:$0xff]
      %v533 = vld [vmem:[%s4 + $0x28] sm:$0xff]
      %v534 = vld [vmem:[%s4 + $0x30] sm:$0xff]
      %v535 = vld [vmem:[%s4 + $0x38] sm:$0xff]
      %v536 = vlaneseq
      %v537 = vshrl.u32 %v536, 7
      %v538 = vsub.s32 1, %v537
      %v539 = vrot.slane %v335, %v538
      %vm540 = vcmask 523264
      %v542 = vsel %vm540, %v527, 0
      %544 = vmatprep.subr.mxu0 0.0
      %545 = vmatpush1.msra.mxu0 %v528
      %546 = vmatprep.subr.mxu0 0.0
      %547 = vmatpush1.msra.mxu0 %v529
      %548 = vmatprep.subr.mxu0 0.0
      %549 = vmatpush1.msra.mxu0 %v530
      %550 = vmatprep.subr.mxu0 0.0
      %551 = vmatpush1.msra.mxu0 %v531
      %552 = vmatprep.subr.mxu0 0.0
      %553 = vmatpush1.msra.mxu0 %v532
      %554 = vmatprep.subr.mxu0 0.0
      %555 = vmatpush1.msra.mxu0 %v533
      %556 = vmatprep.subr.mxu0 0.0
      %557 = vmatpush1.msra.mxu0 %v534
      %558 = vmatprep.subr.mxu0 0.0
      %559 = vmatpush1.msra.mxu0 %v535
      %560 = vmatprep.subr.mxu0 0.0
      %561 = vmatpush1.msra.mxu0 0.0
      %562 = vmatprep.subr.mxu0 0.0
      %563 = vmatpush1.msra.mxu0 0.0
      %564 = vmatprep.subr.mxu0 0.0
      %565 = vmatpush1.msra.mxu0 0.0
      %566 = vmatprep.subr.mxu0 0.0
      %567 = vmatpush1.msra.mxu0 0.0
      %568 = vmatprep.subr.mxu0 0.0
      %569 = vmatpush1.msra.mxu0 0.0
      %570 = vmatprep.subr.mxu0 0.0
      %571 = vmatpush1.msra.mxu0 0.0
      %572 = vmatprep.subr.mxu0 0.0
      %573 = vmatpush1.msra.mxu0 0.0
      %574 = vmatprep.subr.mxu0 0.0
      %575 = vmatpush1.msra.mxu0 0.0
      %576 = vmatprep.subr.mxu0 0.0
      %577 = vmatpush1.msra.mxu0 0.0
      %578 = vmatprep.subr.mxu0 0.0
      %579 = vmatpush1.msra.mxu0 0.0
      %580 = vmatprep.subr.mxu0 0.0
      %581 = vmatpush1.msra.mxu0 0.0
      %582 = vmatprep.subr.mxu0 0.0
      %583 = vmatpush1.msra.mxu0 0.0
      %584 = vmatprep.subr.mxu0 0.0
      %585 = vmatpush1.msra.mxu0 0.0
      %586 = vmatprep.subr.mxu0 0.0
      %587 = vmatpush1.msra.mxu0 0.0
      %588 = vmatprep.subr.mxu0 0.0
      %589 = vmatpush1.msra.mxu0 0.0
      %590 = vmatprep.subr.mxu0 0.0
      %591 = vmatpush1.msra.mxu0 0.0
      %592 = vmatprep.subr.mxu0 0.0
      %593 = vmatpush1.msra.mxu0 0.0
      %594 = vmatprep.subr.mxu0 0.0
      %595 = vmatpush1.msra.mxu0 0.0
      %596 = vmatprep.subr.mxu0 0.0
      %597 = vmatpush1.msra.mxu0 0.0
      %598 = vmatprep.subr.mxu0 0.0
      %599 = vmatpush1.msra.mxu0 0.0
      %600 = vmatprep.subr.mxu0 0.0
      %601 = vmatpush1.msra.mxu0 0.0
      %602 = vmatprep.subr.mxu0 0.0
      %603 = vmatpush1.msra.mxu0 0.0
      %604 = vmatprep.subr.mxu0 0.0
      %605 = vmatpush1.msra.mxu0 0.0
      %606 = vmatprep.subr.mxu0 0.0
      %607 = vmatpush1.msra.mxu0 0.0
      %608 = vmatprep.mubr.f32.mxu0 0.0
      %609 = vmatmul.mubr.f32.gmra.mrb[0].mxu0 %v542
      %v610 = vpop.f32.mrb[0].mxu0
      %v611 = vadd.f32 %v539, %v610
      %v612 = vpop.f32.mrb[0].mxu0
      %613 = vdwg.mxu0
      %v614 = vadd.f32 %v442, %v611
      %v615 = vsel %vm344, %v614, 0.0
      %616 = vadd.xlane.f32.xlu0 %v615
      %v617 = vpop.xlane.xlu0 %616
      %v618 = vmul.f32 %v617, %v422
      %v619 = vsub.f32 %v614, %v618
      %v620 = vmul.f32 %v619, %v619
      %v621 = vsel %vm344, %v620, 0.0
      %622 = vadd.xlane.f32.xlu0 %v621
      %v623 = vpop.xlane.xlu0 %622
      %v624 = vmul.f32 %v623, %v422
      %v625 = vadd.f32 %v624, 1e-05
      %v626 = vrsqrt.pop %v625
      %v627 = vmul.f32 %v619, %v626
      %v628 = vlaneseq
      %v629 = vshrl.u32 %v628, 7
      %v630 = vsub.s32 4, %v629
      %v631 = vrot.slane %v335, %v630
      %v632 = vmul.f32 %v627, %v631
      %v633 = vlaneseq
      %v634 = vshrl.u32 %v633, 7
      %v635 = vsub.s32 5, %v634
      %v636 = vrot.slane %v335, %v635
      %v637 = vadd.f32 %v632, %v636
      %638 = vst.msk [vmem:[%s332] sm:$0xff] %vm344, %v637
      %p639 = scmp.lt.s32.totalorder %s22, 1
      %s640 = scalar_select %p639, %s22, 1
      %p641 = scmp.lt.s32.totalorder %s23, 0
      %s642 = scalar_select %p641, %s23, 0
      %s643 = sadd.s32 %s642, %s640
      %s644 = smul.addr %s643, 8
      %s645 = scalar_lea.vmem %s7, %s644
      // Predicated region
      $region49: #{roformer_encoder.8} parent=47 // pred_check
        %p646 = pneg %p211
      $region50: #{roformer_encoder.8} parent=47 // pred_check_branch
        %648 = sbr.rel (%p646) target = $region52
      $region51: #{roformer_encoder.8} parent=47 // pred_region
        _
      $region52: #{roformer_encoder.8} parent=47 // pred_fallthru
        _
    $region48: #{roformer_encoder.8} parent=5 // pred_fallthru
      _
    %p649 = scmp.le.s32.totalorder 2, %s13
    // Predicated region
    $region53: #{roformer_encoder.8} parent=5 // pred_check
      %p650 = pneg %p649
    $region54: #{roformer_encoder.8} parent=5 // pred_check_branch
      %652 = sbr.rel (%p650) target = $region56
    $region55: #{roformer_encoder.8} parent=5 // pred_region
      %s653 = ssub.s32 %s13, 2
      // Predicated region
      $region57: #{roformer_encoder.8} parent=55 // pred_check
        %p654 = pneg %p217
      $region58: #{roformer_encoder.8} parent=55 // pred_check_branch
        %656 = sbr.rel (%p654) target = $region60
      $region59: #{roformer_encoder.8} parent=55 // pred_region
        %p657 = scmp.lt.s32.totalorder %s24, 1
        %s658 = scalar_select %p657, %s24, 1
        %p659 = scmp.lt.s32.totalorder %s25, 0
        %s660 = scalar_select %p659, %s25, 0
        %s661 = sadd.s32 %s660, %s658
        %s662 = smul.addr %s661, 8
        %s663 = scalar_lea.vmem %s7, %s662
      $region60: #{roformer_encoder.8} parent=55 // pred_fallthru
        _
    $region56: #{roformer_encoder.8} parent=5 // pred_fallthru
      _
  $region6: #{roformer_encoder.8} parent=0 // loop_footer
    %s17 = sadd.s32 1, %s13
  $region7: #{roformer_encoder.8} parent=0 // loop_footer_branch
    %12 = sbr.rel target = $region3
  $region8: #{roformer_encoder.8} parent=0 // loop_exit
    _

// kernel: roformer_encoder.11
$region0: #{roformer_encoder.11}
  #allocation0 [shape = 'u32[]', space=smem, size = 0x4, offset = 0x4, fixed_abs, tag = 'smem constant byte address 0x4 - core index']
  #allocation1 [shape = 'u32[144,128]{1,0:T(1,128)}', space=vmem, size = 0x12000, scoped, tag = 'internal scratch']
  %s0 = inlined_call_operand.vmem [shape: f32[2,8,32], index: 0, kind: input, shape index: {}]
  %s1 = inlined_call_operand.vmem [shape: f32[2,8,32], index: 1, kind: input, shape index: {}]
  %s2 = inlined_call_operand.vmem [shape: f32[32,32], index: 2, kind: input, shape index: {}]
  %s3 = inlined_call_operand.vmem [shape: f32[32,64], index: 3, kind: input, shape index: {}]
  %s4 = inlined_call_operand.vmem [shape: f32[64,32], index: 4, kind: input, shape index: {}]
  %s5 = inlined_call_operand.vmem [shape: f32[1,64], index: 5, kind: input, shape index: {}]
  %s6 = inlined_call_operand.vmem [shape: f32[8,32], index: 6, kind: input, shape index: {}]
  %s7 = inlined_call_operand.vmem [shape: f32[2,8,32], index: 7, kind: output, shape index: {}]
  %s8 = sld [smem:[#allocation0]]
  $region61: #{roformer_encoder.11} parent=0
    _
  %s10 = ssub.s32 1, %s8
  %s11 = scalar_select 0, %s10, %s8
  loop: start=0, step=1, limit=4
  $region2: #{roformer_encoder.11} parent=0 // loop_pre_header
    _
  $region3: #{roformer_encoder.11} parent=0 // loop_header
    %s13 = sphi 0, %s17
    %p14 = scmp.ge.s32.totalorder %s13, 4
    %s20 = sphi 0, %s32
    %s21 = sphi 0, %s28
    %s22 = sphi 0, %s20
    %s23 = sphi 0, %s21
    %s24 = sphi 0, %s22
    %s25 = sphi 0, %s23
    %s37 = sphi 0, %s39
    %s40 = sphi 0, %s37
    %s41 = sphi 0, %s40
    %s57 = sphi 0, %s41
    %s65 = sphi 0, %s67
    %s68 = sphi 0, %s65
    %s69 = sphi 0, %s68
    %s85 = sphi 0, %s69
    %s89 = sphi 0, %s89
    %s91 = sphi 0, %s89
    %s92 = sphi 0, %s91
    %s106 = sphi 0, %s92
    %s110 = sphi 0, %s110
    %s112 = sphi 0, %s110
    %s113 = sphi 0, %s112
    %s127 = sphi 0, %s113
    %s131 = sphi 0, %s131
    %s133 = sphi 0, %s131
    %s134 = sphi 0, %s133
    %s148 = sphi 0, %s134
    %s152 = sphi 0, %s152
    %s154 = sphi 0, %s152
    %s155 = sphi 0, %s154
    %s169 = sphi 0, %s155
    %s173 = sphi 0, %s173
    %s175 = sphi 0, %s173
    %s176 = sphi 0, %s175
    %s190 = sphi 0, %s176
    %s198 = sphi 0, %s200
    %s201 = sphi 0, %s198
    %s202 = sphi 0, %s201
    %s218 = sphi 0, %s202
  $region4: #{roformer_encoder.11} parent=0 // loop_header_branch
    %16 = sbr.rel (%p14) target = $region8
  $region5: #{roformer_encoder.11} parent=0 // loop_body
    %s18 = ssub.s32 %s13, 1
    %s19 = ssub.s32 %s13, 2
    %s26 = sadd.s32 1, %s21
    %p27 = scmp.ge.s32.totalorder %s26, 1
    %s28 = scalar_select %p27, 0, %s26
    %s29 = sadd.s32 1, %s20
    %s30 = scalar_select %p27, %s29, %s20
    %p31 = scmp.ge.s32.totalorder %s30, 2
    %s32 = scalar_select %p31, 0, %s30
    %s33 = ssub.s32 %s20, %s32
    %s34 = ssub.s32 %s21, %s28
    %s35 = sor.u32 %s33, %s34
    %p36 = scmp.eq.s32.totalorder %s35, 0
    %s38 = sadd.s32 %s37, 1
    %s39 = scalar_select %p36, %s37, %s38
    %p42 = pneg %p36
    %p43 = scmp.eq.s32.totalorder %s13, 1
    %p44 = por %p42, %p43
    %p45 = scmp.ne.s32.totalorder %s37, %s40
    %p46 = scmp.eq.s32.totalorder %s13, 0
    %p47 = por %p45, %p46
    %p48 = scmp.ne.s32.totalorder %s37, %s40
    %p49 = scmp.eq.s32.totalorder %s18, 1
    %p50 = por %p48, %p49
    %p51 = scmp.ne.s32.totalorder %s40, %s41
    %p52 = scmp.eq.s32.totalorder %s18, 0
    %p53 = por %p51, %p52
    %p54 = scmp.ne.s32.totalorder %s40, %s41
    %p55 = scmp.eq.s32.totalorder %s19, 1
    %p56 = por %p54, %p55
    %p58 = scmp.ne.s32.totalorder %s41, %s57
    %p59 = scmp.eq.s32.totalorder %s19, 0
    %p60 = por %p58, %p59
    %s61 = ssub.s32 %s20, %s32
    %s62 = ssub.s32 %s21, %s28
    %s63 = sor.u32 %s61, %s62
    %p64 = scmp.eq.s32.totalorder %s63, 0
    %s66 = sadd.s32 %s65, 1
    %s67 = scalar_select %p64, %s65, %s66
    %p70 = pneg %p64
    %p71 = scmp.eq.s32.totalorder %s13, 1
    %p72 = por %p70, %p71
    %p73 = scmp.ne.s32.totalorder %s65, %s68
    %p74 = scmp.eq.s32.totalorder %s13, 0
    %p75 = por %p73, %p74
    %p76 = scmp.ne.s32.totalorder %s65, %s68
    %p77 = scmp.eq.s32.totalorder %s18, 1
    %p78 = por %p76, %p77
    %p79 = scmp.ne.s32.totalorder %s68, %s69
    %p80 = scmp.eq.s32.totalorder %s18, 0
    %p81 = por %p79, %p80
    %p82 = scmp.ne.s32.totalorder %s68, %s69
    %p83 = scmp.eq.s32.totalorder %s19, 1
    %p84 = por %p82, %p83
    %p86 = scmp.ne.s32.totalorder %s69, %s85
    %p87 = scmp.eq.s32.totalorder %s19, 0
    %p88 = por %p86, %p87
    %s90 = sadd.s32 %s89, 1
    %p93 = scmp.eq.s32.totalorder %s13, 1
    %p94 = scmp.ne.s32.totalorder %s89, %s91
    %p95 = scmp.eq.s32.totalorder %s13, 0
    %p96 = por %p94, %p95
    %p97 = scmp.ne.s32.totalorder %s89, %s91
    %p98 = scmp.eq.s32.totalorder %s18, 1
    %p99 = por %p97, %p98
    %p100 = scmp.ne.s32.totalorder %s91, %s92
    %p101 = scmp.eq.s32.totalorder %s18, 0
    %p102 = por %p100, %p101
    %p103 = scmp.ne.s32.totalorder %s91, %s92
    %p104 = scmp.eq.s32.totalorder %s19, 1
    %p105 = por %p103, %p104
    %p107 = scmp.ne.s32.totalorder %s92, %s106
    %p108 = scmp.eq.s32.totalorder %s19, 0
    %p109 = por %p107, %p108
    %s111 = sadd.s32 %s110, 1
    %p114 = scmp.eq.s32.totalorder %s13, 1
    %p115 = scmp.ne.s32.totalorder %s110, %s112
    %p116 = scmp.eq.s32.totalorder %s13, 0
    %p117 = por %p115, %p116
    %p118 = scmp.ne.s32.totalorder %s110, %s112
    %p119 = scmp.eq.s32.totalorder %s18, 1
    %p120 = por %p118, %p119
    %p121 = scmp.ne.s32.totalorder %s112, %s113
    %p122 = scmp.eq.s32.totalorder %s18, 0
    %p123 = por %p121, %p122
    %p124 = scmp.ne.s32.totalorder %s112, %s113
    %p125 = scmp.eq.s32.totalorder %s19, 1
    %p126 = por %p124, %p125
    %p128 = scmp.ne.s32.totalorder %s113, %s127
    %p129 = scmp.eq.s32.totalorder %s19, 0
    %p130 = por %p128, %p129
    %s132 = sadd.s32 %s131, 1
    %p135 = scmp.eq.s32.totalorder %s13, 1
    %p136 = scmp.ne.s32.totalorder %s131, %s133
    %p137 = scmp.eq.s32.totalorder %s13, 0
    %p138 = por %p136, %p137
    %p139 = scmp.ne.s32.totalorder %s131, %s133
    %p140 = scmp.eq.s32.totalorder %s18, 1
    %p141 = por %p139, %p140
    %p142 = scmp.ne.s32.totalorder %s133, %s134
    %p143 = scmp.eq.s32.totalorder %s18, 0
    %p144 = por %p142, %p143
    %p145 = scmp.ne.s32.totalorder %s133, %s134
    %p146 = scmp.eq.s32.totalorder %s19, 1
    %p147 = por %p145, %p146
    %p149 = scmp.ne.s32.totalorder %s134, %s148
    %p150 = scmp.eq.s32.totalorder %s19, 0
    %p151 = por %p149, %p150
    %s153 = sadd.s32 %s152, 1
    %p156 = scmp.eq.s32.totalorder %s13, 1
    %p157 = scmp.ne.s32.totalorder %s152, %s154
    %p158 = scmp.eq.s32.totalorder %s13, 0
    %p159 = por %p157, %p158
    %p160 = scmp.ne.s32.totalorder %s152, %s154
    %p161 = scmp.eq.s32.totalorder %s18, 1
    %p162 = por %p160, %p161
    %p163 = scmp.ne.s32.totalorder %s154, %s155
    %p164 = scmp.eq.s32.totalorder %s18, 0
    %p165 = por %p163, %p164
    %p166 = scmp.ne.s32.totalorder %s154, %s155
    %p167 = scmp.eq.s32.totalorder %s19, 1
    %p168 = por %p166, %p167
    %p170 = scmp.ne.s32.totalorder %s155, %s169
    %p171 = scmp.eq.s32.totalorder %s19, 0
    %p172 = por %p170, %p171
    %s174 = sadd.s32 %s173, 1
    %p177 = scmp.eq.s32.totalorder %s13, 1
    %p178 = scmp.ne.s32.totalorder %s173, %s175
    %p179 = scmp.eq.s32.totalorder %s13, 0
    %p180 = por %p178, %p179
    %p181 = scmp.ne.s32.totalorder %s173, %s175
    %p182 = scmp.eq.s32.totalorder %s18, 1
    %p183 = por %p181, %p182
    %p184 = scmp.ne.s32.totalorder %s175, %s176
    %p185 = scmp.eq.s32.totalorder %s18, 0
    %p186 = por %p184, %p185
    %p187 = scmp.ne.s32.totalorder %s175, %s176
    %p188 = scmp.eq.s32.totalorder %s19, 1
    %p189 = por %p187, %p188
    %p191 = scmp.ne.s32.totalorder %s176, %s190
    %p192 = scmp.eq.s32.totalorder %s19, 0
    %p193 = por %p191, %p192
    %s194 = ssub.s32 %s20, %s32
    %s195 = ssub.s32 %s21, %s28
    %s196 = sor.u32 %s194, %s195
    %p197 = scmp.eq.s32.totalorder %s196, 0
    %s199 = sadd.s32 %s198, 1
    %s200 = scalar_select %p197, %s198, %s199
    %p203 = pneg %p197
    %p204 = scmp.eq.s32.totalorder %s13, 1
    %p205 = por %p203, %p204
    %p206 = scmp.ne.s32.totalorder %s198, %s201
    %p207 = scmp.eq.s32.totalorder %s13, 0
    %p208 = por %p206, %p207
    %p209 = scmp.ne.s32.totalorder %s198, %s201
    %p210 = scmp.eq.s32.totalorder %s18, 1
    %p211 = por %p209, %p210
    %p212 = scmp.ne.s32.totalorder %s201, %s202
    %p213 = scmp.eq.s32.totalorder %s18, 0
    %p214 = por %p212, %p213
    %p215 = scmp.ne.s32.totalorder %s201, %s202
    %p216 = scmp.eq.s32.totalorder %s19, 1
    %p217 = por %p215, %p216
    %p219 = scmp.ne.s32.totalorder %s202, %s218
    %p220 = scmp.eq.s32.totalorder %s19, 0
    %p221 = por %p219, %p220
    %p222 = scmp.le.s32.totalorder 1, %s13
    %p223 = scmp.lt.s32.totalorder %s13, 3
    %p224 = pnand %p222, %p223
    %p225 = pneg %p224
    // Predicated region
    $region9: #{roformer_encoder.11} parent=5 // pred_check
      _
    $region10: #{roformer_encoder.11} parent=5 // pred_check_branch
      %227 = sbr.rel (%p224) target = $region12
    $region11: #{roformer_encoder.11} parent=5 // pred_region
      %s228 = ssub.s32 %s13, 1
      // Predicated region
      $region13: #{roformer_encoder.11} parent=11 // pred_check
        %p229 = pneg %p102
      $region14: #{roformer_encoder.11} parent=11 // pred_check_branch
        %231 = sbr.rel (%p229) target = $region16
      $region15: #{roformer_encoder.11} parent=11 // pred_region
        _
      $region16: #{roformer_encoder.11} parent=11 // pred_fallthru
        _
      // Predicated region
      $region17: #{roformer_encoder.11} parent=11 // pred_check
        %p232 = pneg %p123
      $region18: #{roformer_encoder.11} parent=11 // pred_check_branch
        %234 = sbr.rel (%p232) target = $region20
      $region19: #{roformer_encoder.11} parent=11 // pred_region
        _
      $region20: #{roformer_encoder.11} parent=11 // pred_fallthru
        _
      // Predicated region
      $region21: #{roformer_encoder.11} parent=11 // pred_check
        %p235 = pneg %p144
      $region22: #{roformer_encoder.11} parent=11 // pred_check_branch
        %237 = sbr.rel (%p235) target = $region24
      $region23: #{roformer_encoder.11} parent=11 // pred_region
        _
      $region24: #{roformer_encoder.11} parent=11 // pred_fallthru
        _
      // Predicated region
      $region25: #{roformer_encoder.11} parent=11 // pred_check
        %p238 = pneg %p165
      $region26: #{roformer_encoder.11} parent=11 // pred_check_branch
        %240 = sbr.rel (%p238) target = $region28
      $region27: #{roformer_encoder.11} parent=11 // pred_region
        _
      $region28: #{roformer_encoder.11} parent=11 // pred_fallthru
        _
      // Predicated region
      $region29: #{roformer_encoder.11} parent=11 // pred_check
        %p241 = pneg %p186
      $region30: #{roformer_encoder.11} parent=11 // pred_check_branch
        %243 = sbr.rel (%p241) target = $region32
      $region31: #{roformer_encoder.11} parent=11 // pred_region
        _
      $region32: #{roformer_encoder.11} parent=11 // pred_fallthru
        _
    $region12: #{roformer_encoder.11} parent=5 // pred_fallthru
      _
    %p244 = scmp.lt.s32.totalorder %s13, 2
    // Predicated region
    $region33: #{roformer_encoder.11} parent=5 // pred_check
      %p245 = pneg %p244
    $region34: #{roformer_encoder.11} parent=5 // pred_check_branch
      %247 = sbr.rel (%p245) target = $region36
    $region35: #{roformer_encoder.11} parent=5 // pred_region
      // Predicated region
      $region37: #{roformer_encoder.11} parent=35 // pred_check
        %p248 = pneg %p47
      $region38: #{roformer_encoder.11} parent=35 // pred_check_branch
        %250 = sbr.rel (%p248) target = $region40
      $region39: #{roformer_encoder.11} parent=35 // pred_region
        %p251 = scmp.lt.s32.totalorder %s20, 1
        %s252 = scalar_select %p251, %s20, 1
        %p253 = scmp.lt.s32.totalorder %s21, 0
        %s254 = scalar_select %p253, %s21, 0
        %s255 = sadd.s32 %s254, %s252
        %s256 = smul.addr %s255, 8
        %s257 = scalar_lea.vmem %s0, %s256
      $region40: #{roformer_encoder.11} parent=35 // pred_fallthru
        _
      // Predicated region
      $region41: #{roformer_encoder.11} parent=35 // pred_check
        %p258 = pneg %p75
      $region42: #{roformer_encoder.11} parent=35 // pred_check_branch
        %260 = sbr.rel (%p258) target = $region44
      $region43: #{roformer_encoder.11} parent=35 // pred_region
        %p261 = scmp.lt.s32.totalorder %s20, 1
        %s262 = scalar_select %p261, %s20, 1
        %p263 = scmp.lt.s32.totalorder %s21, 0
        %s264 = scalar_select %p263, %s21, 0
        %s265 = sadd.s32 %s264, %s262
        %s266 = smul.addr %s265, 8
        %s267 = scalar_lea.vmem %s1, %s266
      $region44: #{roformer_encoder.11} parent=35 // pred_fallthru
        _
    $region36: #{roformer_encoder.11} parent=5 // pred_fallthru
      _
    %p268 = scmp.le.s32.totalorder 1, %s13
    %p269 = scmp.lt.s32.totalorder %s13, 3
    %p270 = pnand %p268, %p269
    %p271 = pneg %p270
    // Predicated region
    $region45: #{roformer_encoder.11} parent=5 // pred_check
      _
    $region46: #{roformer_encoder.11} parent=5 // pred_check_branch
      %273 = sbr.rel (%p270) target = $region48
    $region47: #{roformer_encoder.11} parent=5 // pred_region
      %s274 = ssub.s32 %s13, 1
      %p275 = scmp.lt.s32.totalorder %s22, 1
      %s276 = scalar_select %p275, %s22, 1
      %p277 = scmp.lt.s32.totalorder %s23, 0
      %s278 = scalar_select %p277, %s23, 0
      %s279 = sadd.s32 %s278, %s276
      %s280 = smul.addr %s279, 8
      %s281 = scalar_lea.vmem %s0, %s280
      %p282 = pneg %p53
      %p283 = pneg %p50
      %p284 = scmp.lt.s32.totalorder %s22, 1
      %s285 = scalar_select %p284, %s22, 1
      %p286 = scmp.lt.s32.totalorder %s23, 0
      %s287 = scalar_select %p286, %s23, 0
      %s288 = sadd.s32 %s287, %s285
      %s289 = smul.addr %s288, 8
      %s290 = scalar_lea.vmem %s1, %s289
      %p291 = pneg %p81
      %p292 = pneg %p78
      %p293 = pneg %p102
      %p294 = pneg %p99
      %p295 = pneg %p123
      %p296 = pneg %p120
      %p297 = pneg %p144
      %p298 = pneg %p141
      %p299 = pneg %p165
      %p300 = pneg %p162
      %p301 = pneg %p186
      %p302 = pneg %p183
      %p303 = pneg %p214
      %p304 = pneg %p211
      %p305 = scmp.lt.s32.totalorder %s22, 1
      %s306 = scalar_select %p305, %s22, 1
      %p307 = scmp.lt.s32.totalorder %s23, 0
      %s308 = scalar_select %p307, %s23, 0
      %s309 = sadd.s32 %s308, %s306
      %s310 = smul.addr %s309, 8
      %s311 = scalar_lea.vmem %s7, %s310
      %p312 = scmp.lt.s32.totalorder %s22, 1
      %s313 = scalar_select %p312, %s22, 1
      %p314 = scmp.lt.s32.totalorder %s23, 0
      %s315 = scalar_select %p314, %s23, 0
      %s316 = sadd.s32 %s315, %s313
      %s317 = smul.addr %s316, 8
      %s318 = scalar_lea.vmem %s0, %s317
      %p319 = scmp.lt.s32.totalorder %s22, 1
      %s320 = scalar_select %p319, %s22, 1
      %p321 = scmp.lt.s32.totalorder %s23, 0
      %s322 = scalar_select %p321, %s23, 0
      %s323 = sadd.s32 %s322, %s320
      %s324 = smul.addr %s323, 8
      %s325 = scalar_lea.vmem %s1, %s324
      %p326 = scmp.lt.s32.totalorder %s22, 1
      %s327 = scalar_select %p326, %s22, 1
      %p328 = scmp.lt.s32.totalorder %s23, 0
      %s329 = scalar_select %p328, %s23, 0
      %s330 = sadd.s32 %s329, %s327
      %s331 = smul.addr %s330, 8
      %s332 = scalar_lea.vmem %s7, %s331
      %v333 = vld [vmem:[%s318] sm:$0xff]
      %v334 = vld [vmem:[%s325] sm:$0xff]
      %v335 = vld [vmem:[%s6] sm:$0xff]
      %v336 = vld [vmem:[%s2] sm:$0xff]
      %v337 = vld [vmem:[%s2 + $0x8] sm:$0xff]
      %v338 = vld [vmem:[%s2 + $0x10] sm:$0xff]
      %v339 = vld [vmem:[%s2 + $0x18] sm:$0xff]
      %v340 = vlaneseq
      %v341 = vshrl.u32 %v340, 7
      %v342 = vsub.s32 0, %v341
      %v343 = vrot.slane %v335, %v342
      %vm344 = vcmask 261120
      %v346 = vsel %vm344, %v334, 0
      %348 = vmatprep.subr.mxu0 0.0
      %349 = vmatpush1.msra.mxu0 %v336
      %350 = vmatprep.subr.mxu0 0.0
      %351 = vmatpush1.msra.mxu0 %v337
      %352 = vmatprep.subr.mxu0 0.0
      %353 = vmatpush1.msra.mxu0 %v338
      %354 = vmatprep.subr.mxu0 0.0
      %355 = vmatpush1.msra.mxu0 %v339
      %356 = vmatprep.subr.mxu0 0.0
      %357 = vmatpush1.msra.mxu0 0.0
      %358 = vmatprep.subr.mxu0 0.0
      %359 = vmatpush1.msra.mxu0 0.0
      %360 = vmatprep.subr.mxu0 0.0
      %361 = vmatpush1.msra.mxu0 0.0
      %362 = vmatprep.subr.mxu0 0.0
      %363 = vmatpush1.msra.mxu0 0.0
      %364 = vmatprep.subr.mxu0 0.0
      %365 = vmatpush1.msra.mxu0 0.0
      %366 = vmatprep.subr.mxu0 0.0
      %367 = vmatpush1.msra.mxu0 0.0
      %368 = vmatprep.subr.mxu0 0.0
      %369 = vmatpush1.msra.mxu0 0.0
      %370 = vmatprep.subr.mxu0 0.0
      %371 = vmatpush1.msra.mxu0 0.0
      %372 = vmatprep.subr.mxu0 0.0
      %373 = vmatpush1.msra.mxu0 0.0
      %374 = vmatprep.subr.mxu0 0.0
      %375 = vmatpush1.msra.mxu0 0.0
      %376 = vmatprep.subr.mxu0 0.0
      %377 = vmatpush1.msra.mxu0 0.0
      %378 = vmatprep.subr.mxu0 0.0
      %379 = vmatpush1.msra.mxu0 0.0
      %380 = vmatprep.subr.mxu0 0.0
      %381 = vmatpush1.msra.mxu0 0.0
      %382 = vmatprep.subr.mxu0 0.0
      %383 = vmatpush1.msra.mxu0 0.0
      %384 = vmatprep.subr.mxu0 0.0
      %385 = vmatpush1.msra.mxu0 0.0
      %386 = vmatprep.subr.mxu0 0.0
      %387 = vmatpush1.msra.mxu0 0.0
      %388 = vmatprep.subr.mxu0 0.0
      %389 = vmatpush1.msra.mxu0 0.0
      %390 = vmatprep.subr.mxu0 0.0
      %391 = vmatpush1.msra.mxu0 0.0
      %392 = vmatprep.subr.mxu0 0.0
      %393 = vmatpush1.msra.mxu0 0.0
      %394 = vmatprep.subr.mxu0 0.0
      %395 = vmatpush1.msra.mxu0 0.0
      %396 = vmatprep.subr.mxu0 0.0
      %397 = vmatpush1.msra.mxu0 0.0
      %398 = vmatprep.subr.mxu0 0.0
      %399 = vmatpush1.msra.mxu0 0.0
      %400 = vmatprep.subr.mxu0 0.0
      %401 = vmatpush1.msra.mxu0 0.0
      %402 = vmatprep.subr.mxu0 0.0
      %403 = vmatpush1.msra.mxu0 0.0
      %404 = vmatprep.subr.mxu0 0.0
      %405 = vmatpush1.msra.mxu0 0.0
      %406 = vmatprep.subr.mxu0 0.0
      %407 = vmatpush1.msra.mxu0 0.0
      %408 = vmatprep.subr.mxu0 0.0
      %409 = vmatpush1.msra.mxu0 0.0
      %410 = vmatprep.subr.mxu0 0.0
      %411 = vmatpush1.msra.mxu0 0.0
      %412 = vmatprep.mubr.f32.mxu0 0.0
      %413 = vmatmul.mubr.f32.gmra.mrb[0].mxu0 %v346
      %v414 = vpop.f32.mrb[0].mxu0
      %v415 = vadd.f32 %v343, %v414
      %v416 = vpop.f32.mrb[0].mxu0
      %417 = vdwg.mxu0
      %v418 = vadd.f32 %v333, %v415
      %v419 = vsel %vm344, %v418, 0.0
      %420 = vadd.xlane.f32.xlu0 %v419
      %v421 = vpop.xlane.xlu0 %420
      %v422 = vrcp.pop 32.0
      %v423 = vmul.f32 %v421, %v422
      %v424 = vsub.f32 %v418, %v423
      %v425 = vmul.f32 %v424, %v424
      %v426 = vsel %vm344, %v425, 0.0
      %427 = vadd.xlane.f32.xlu0 %v426
      %v428 = vpop.xlane.xlu0 %427
      %v429 = vmul.f32 %v428, %v422
      %v430 = vadd.f32 %v429, 1e-05
      %v431 = vrsqrt.pop %v430
      %v432 = vmul.f32 %v424, %v431
      %v433 = vlaneseq
      %v434 = vshrl.u32 %v433, 7
      %v435 = vsub.s32 2, %v434
      %v436 = vrot.slane %v335, %v435
      %v437 = vmul.f32 %v432, %v436
      %v438 = vlaneseq
      %v439 = vshrl.u32 %v438, 7
      %v440 = vsub.s32 3, %v439
      %v441 = vrot.slane %v335, %v440
      %v442 = vadd.f32 %v437, %v441
      %v443 = vld [vmem:[%s3] sm:$0xff]
      %v444 = vld [vmem:[%s3 + $0x8] sm:$0xff]
      %v445 = vld [vmem:[%s3 + $0x10] sm:$0xff]
      %v446 = vld [vmem:[%s3 + $0x18] sm:$0xff]
      %v447 = vld [vmem:[%s5] sm:$0x1]
      %v449 = vlaneseq
      %v450 = vshrl.u32 %v449, 7
      %v451 = vsub.s32 0, %v450
      %v452 = vrot.slane %v447, %v451
      %v455 = vsel %vm344, %v442, 0
      %457 = vmatprep.subr.mxu0 0.0
      %458 = vmatpush1.msra.mxu0 %v443
      %459 = vmatprep.subr.mxu0 0.0
      %460 = vmatpush1.msra.mxu0 %v444
      %461 = vmatprep.subr.mxu0 0.0
      %462 = vmatpush1.msra.mxu0 %v445
      %463 = vmatprep.subr.mxu0 0.0
      %464 = vmatpush1.msra.mxu0 %v446
      %465 = vmatprep.subr.mxu0 0.0
      %466 = vmatpush1.msra.mxu0 0.0
      %467 = vmatprep.subr.mxu0 0.0
      %468 = vmatpush1.msra.mxu0 0.0
      %469 = vmatprep.subr.mxu0 0.0
      %470 = vmatpush1.msra.mxu0 0.0
      %471 = vmatprep.subr.mxu0 0.0
      %472 = vmatpush1.msra.mxu0 0.0
      %473 = vmatprep.subr.mxu0 0.0
      %474 = vmatpush1.msra.mxu0 0.0
      %475 = vmatprep.subr.mxu0 0.0
      %476 = vmatpush1.msra.mxu0 0.0
      %477 = vmatprep.subr.mxu0 0.0
      %478 = vmatpush1.msra.mxu0 0.0
      %479 = vmatprep.subr.mxu0 0.0
      %480 = vmatpush1.msra.mxu0 0.0
      %481 = vmatprep.subr.mxu0 0.0
      %482 = vmatpush1.msra.mxu0 0.0
      %483 = vmatprep.subr.mxu0 0.0
      %484 = vmatpush1.msra.mxu0 0.0
      %485 = vmatprep.subr.mxu0 0.0
      %486 = vmatpush1.msra.mxu0 0.0
      %487 = vmatprep.subr.mxu0 0.0
      %488 = vmatpush1.msra.mxu0 0.0
      %489 = vmatprep.subr.mxu0 0.0
      %490 = vmatpush1.msra.mxu0 0.0
      %491 = vmatprep.subr.mxu0 0.0
      %492 = vmatpush1.msra.mxu0 0.0
      %493 = vmatprep.subr.mxu0 0.0
      %494 = vmatpush1.msra.mxu0 0.0
      %495 = vmatprep.subr.mxu0 0.0
      %496 = vmatpush1.msra.mxu0 0.0
      %497 = vmatprep.subr.mxu0 0.0
      %498 = vmatpush1.msra.mxu0 0.0
      %499 = vmatprep.subr.mxu0 0.0
      %500 = vmatpush1.msra.mxu0 0.0
      %501 = vmatprep.subr.mxu0 0.0
      %502 = vmatpush1.msra.mxu0 0.0
      %503 = vmatprep.subr.mxu0 0.0
      %504 = vmatpush1.msra.mxu0 0.0
      %505 = vmatprep.subr.mxu0 0.0
      %506 = vmatpush1.msra.mxu0 0.0
      %507 = vmatprep.subr.mxu0 0.0
      %508 = vmatpush1.msra.mxu0 0.0
      %509 = vmatprep.subr.mxu0 0.0
      %510 = vmatpush1.msra.mxu0 0.0
      %511 = vmatprep.subr.mxu0 0.0
      %512 = vmatpush1.msra.mxu0 0.0
      %513 = vmatprep.subr.mxu0 0.0
      %514 = vmatpush1.msra.mxu0 0.0
      %515 = vmatprep.subr.mxu0 0.0
      %516 = vmatpush1.msra.mxu0 0.0
      %517 = vmatprep.subr.mxu0 0.0
      %518 = vmatpush1.msra.mxu0 0.0
      %519 = vmatprep.subr.mxu0 0.0
      %520 = vmatpush1.msra.mxu0 0.0
      %521 = vmatprep.mubr.f32.mxu0 0.0
      %522 = vmatmul.mubr.f32.gmra.mrb[0].mxu0 %v455
      %v523 = vpop.f32.mrb[0].mxu0
      %v524 = vadd.f32 %v452, %v523
      %v525 = vpop.f32.mrb[0].mxu0
      %526 = vdwg.mxu0
      %v527 = vmax.f32 %v524, 0.0
      %v528 = vld [vmem:[%s4] sm:$0xff]
      %v529 = vld [vmem:[%s4 + $0x8] sm:$0xff]
      %v530 = vld [vmem:[%s4 + $0x10] sm:$0xff]
      %v531 = vld [vmem:[%s4 + $0x18] sm:$0xff]
      %v532 = vld [vmem:[%s4 + $0x20] sm:$0xff]
      %v533 = vld [vmem:[%s4 + $0x28] sm:$0xff]
      %v534 = vld [vmem:[%s4 + $0x30] sm:$0xff]
      %v535 = vld [vmem:[%s4 + $0x38] sm:$0xff]
      %v536 = vlaneseq
      %v537 = vshrl.u32 %v536, 7
      %v538 = vsub.s32 1, %v537
      %v539 = vrot.slane %v335, %v538
      %vm540 = vcmask 523264
      %v542 = vsel %vm540, %v527, 0
      %544 = vmatprep.subr.mxu0 0.0
      %545 = vmatpush1.msra.mxu0 %v528
      %546 = vmatprep.subr.mxu0 0.0
      %547 = vmatpush1.msra.mxu0 %v529
      %548 = vmatprep.subr.mxu0 0.0
      %549 = vmatpush1.msra.mxu0 %v530
      %550 = vmatprep.subr.mxu0 0.0
      %551 = vmatpush1.msra.mxu0 %v531
      %552 = vmatprep.subr.mxu0 0.0
      %553 = vmatpush1.msra.mxu0 %v532
      %554 = vmatprep.subr.mxu0 0.0
      %555 = vmatpush1.msra.mxu0 %v533
      %556 = vmatprep.subr.mxu0 0.0
      %557 = vmatpush1.msra.mxu0 %v534
      %558 = vmatprep.subr.mxu0 0.0
      %559 = vmatpush1.msra.mxu0 %v535
      %560 = vmatprep.subr.mxu0 0.0
      %561 = vmatpush1.msra.mxu0 0.0
      %562 = vmatprep.subr.mxu0 0.0
      %563 = vmatpush1.msra.mxu0 0.0
      %564 = vmatprep.subr.mxu0 0.0
      %565 = vmatpush1.msra.mxu0 0.0
      %566 = vmatprep.subr.mxu0 0.0
      %567 = vmatpush1.msra.mxu0 0.0
      %568 = vmatprep.subr.mxu0 0.0
      %569 = vmatpush1.msra.mxu0 0.0
      %570 = vmatprep.subr.mxu0 0.0
      %571 = vmatpush1.msra.mxu0 0.0
      %572 = vmatprep.subr.mxu0 0.0
      %573 = vmatpush1.msra.mxu0 0.0
      %574 = vmatprep.subr.mxu0 0.0
      %575 = vmatpush1.msra.mxu0 0.0
      %576 = vmatprep.subr.mxu0 0.0
      %577 = vmatpush1.msra.mxu0 0.0
      %578 = vmatprep.subr.mxu0 0.0
      %579 = vmatpush1.msra.mxu0 0.0
      %580 = vmatprep.subr.mxu0 0.0
      %581 = vmatpush1.msra.mxu0 0.0
      %582 = vmatprep.subr.mxu0 0.0
      %583 = vmatpush1.msra.mxu0 0.0
      %584 = vmatprep.subr.mxu0 0.0
      %585 = vmatpush1.msra.mxu0 0.0
      %586 = vmatprep.subr.mxu0 0.0
      %587 = vmatpush1.msra.mxu0 0.0
      %588 = vmatprep.subr.mxu0 0.0
      %589 = vmatpush1.msra.mxu0 0.0
      %590 = vmatprep.subr.mxu0 0.0
      %591 = vmatpush1.msra.mxu0 0.0
      %592 = vmatprep.subr.mxu0 0.0
      %593 = vmatpush1.msra.mxu0 0.0
      %594 = vmatprep.subr.mxu0 0.0
      %595 = vmatpush1.msra.mxu0 0.0
      %596 = vmatprep.subr.mxu0 0.0
      %597 = vmatpush1.msra.mxu0 0.0
      %598 = vmatprep.subr.mxu0 0.0
      %599 = vmatpush1.msra.mxu0 0.0
      %600 = vmatprep.subr.mxu0 0.0
      %601 = vmatpush1.msra.mxu0 0.0
      %602 = vmatprep.subr.mxu0 0.0
      %603 = vmatpush1.msra.mxu0 0.0
      %604 = vmatprep.subr.mxu0 0.0
      %605 = vmatpush1.msra.mxu0 0.0
      %606 = vmatprep.subr.mxu0 0.0
      %607 = vmatpush1.msra.mxu0 0.0
      %608 = vmatprep.mubr.f32.mxu0 0.0
      %609 = vmatmul.mubr.f32.gmra.mrb[0].mxu0 %v542
      %v610 = vpop.f32.mrb[0].mxu0
      %v611 = vadd.f32 %v539, %v610
      %v612 = vpop.f32.mrb[0].mxu0
      %613 = vdwg.mxu0
      %v614 = vadd.f32 %v442, %v611
      %v615 = vsel %vm344, %v614, 0.0
      %616 = vadd.xlane.f32.xlu0 %v615
      %v617 = vpop.xlane.xlu0 %616
      %v618 = vmul.f32 %v617, %v422
      %v619 = vsub.f32 %v614, %v618
      %v620 = vmul.f32 %v619, %v619
      %v621 = vsel %vm344, %v620, 0.0
      %622 = vadd.xlane.f32.xlu0 %v621
      %v623 = vpop.xlane.xlu0 %622
      %v624 = vmul.f32 %v623, %v422
      %v625 = vadd.f32 %v624, 1e-05
      %v626 = vrsqrt.pop %v625
      %v627 = vmul.f32 %v619, %v626
      %v628 = vlaneseq
      %v629 = vshrl.u32 %v628, 7
      %v630 = vsub.s32 4, %v629
      %v631 = vrot.slane %v335, %v630
      %v632 = vmul.f32 %v627, %v631
      %v633 = vlaneseq
      %v634 = vshrl.u32 %v633, 7
      %v635 = vsub.s32 5, %v634
      %v636 = vrot.slane %v335, %v635
      %v637 = vadd.f32 %v632, %v636
      %v638 = vsel %vm344, %v637, 0.0
      %639 = vadd.xlane.f32.xlu0 %v638
      %v640 = vpop.xlane.xlu0 %639
      %v641 = vmul.f32 %v640, %v422
      %v642 = vsub.f32 %v637, %v641
      %v643 = vmul.f32 %v642, %v642
      %v644 = vsel %vm344, %v643, 0.0
      %645 = vadd.xlane.f32.xlu0 %v644
      %v646 = vpop.xlane.xlu0 %645
      %v647 = vmul.f32 %v646, %v422
      %v648 = vadd.f32 %v647, 1e-05
      %v649 = vrsqrt.pop %v648
      %v650 = vmul.f32 %v642, %v649
      %v651 = vlaneseq
      %v652 = vshrl.u32 %v651, 7
      %v653 = vsub.s32 6, %v652
      %v654 = vrot.slane %v335, %v653
      %v655 = vmul.f32 %v650, %v654
      %v656 = vlaneseq
      %v657 = vshrl.u32 %v656, 7
      %v658 = vsub.s32 7, %v657
      %v659 = vrot.slane %v335, %v658
      %v660 = vadd.f32 %v655, %v659
      %661 = vst.msk [vmem:[%s332] sm:$0xff] %vm344, %v660
      %p662 = scmp.lt.s32.totalorder %s22, 1
      %s663 = scalar_select %p662, %s22, 1
      %p664 = scmp.lt.s32.totalorder %s23, 0
      %s665 = scalar_select %p664, %s23, 0
      %s666 = sadd.s32 %s665, %s663
      %s667 = smul.addr %s666, 8
      %s668 = scalar_lea.vmem %s7, %s667
      // Predicated region
      $region49: #{roformer_encoder.11} parent=47 // pred_check
        %p669 = pneg %p211
      $region50: #{roformer_encoder.11} parent=47 // pred_check_branch
        %671 = sbr.rel (%p669) target = $region52
      $region51: #{roformer_encoder.11} parent=47 // pred_region
        _
      $region52: #{roformer_encoder.11} parent=47 // pred_fallthru
        _
    $region48: #{roformer_encoder.11} parent=5 // pred_fallthru
      _
    %p672 = scmp.le.s32.totalorder 2, %s13
    // Predicated region
    $region53: #{roformer_encoder.11} parent=5 // pred_check
      %p673 = pneg %p672
    $region54: #{roformer_encoder.11} parent=5 // pred_check_branch
      %675 = sbr.rel (%p673) target = $region56
    $region55: #{roformer_encoder.11} parent=5 // pred_region
      %s676 = ssub.s32 %s13, 2
      // Predicated region
      $region57: #{roformer_encoder.11} parent=55 // pred_check
        %p677 = pneg %p217
      $region58: #{roformer_encoder.11} parent=55 // pred_check_branch
        %679 = sbr.rel (%p677) target = $region60
      $region59: #{roformer_encoder.11} parent=55 // pred_region
        %p680 = scmp.lt.s32.totalorder %s24, 1
        %s681 = scalar_select %p680, %s24, 1
        %p682 = scmp.lt.s32.totalorder %s25, 0
        %s683 = scalar_select %p682, %s25, 0
        %s684 = sadd.s32 %s683, %s681
        %s685 = smul.addr %s684, 8
        %s686 = scalar_lea.vmem %s7, %s685
      $region60: #{roformer_encoder.11} parent=55 // pred_fallthru
        _
    $region56: #{roformer_encoder.11} parent=5 // pred_fallthru
      _
  $region6: #{roformer_encoder.11} parent=0 // loop_footer
    %s17 = sadd.s32 1, %s13
  $region7: #{roformer_encoder.11} parent=0 // loop_footer_branch
    %12 = sbr.rel target = $region3
  $region8: #{roformer_encoder.11} parent=0 // loop_exit
    _

</llo_original>
